<compile_context>
chip_gen: v7x
topology: tpu7x:2x2x1
jax: 0.10.0
libtpu: 0.0.40
codegen_flags: <defaults>
</compile_context>

<pallas_src>
import math

import jax
import jax.numpy as jnp
from jax.experimental import pallas as pl
from jax.experimental.pallas import tpu as pltpu

CH = 8           # settings.channel
NEG_SLOPE = 0.2  # LeakyReLU negative slope


# --------------------------------------------------------------------------
# Layout helpers (wrapper-side glue)
# --------------------------------------------------------------------------
def to_padded_flat(x):
    """(N, C, H, W) f32 -> (N, C, (H+2)*(W+2)) bf16, zero border."""
    n, c, h, w = x.shape
    xp = jnp.pad(x, ((0, 0), (0, 0), (1, 1), (1, 1)))
    return xp.reshape(n, c, (h + 2) * (w + 2)).astype(jnp.bfloat16)


def from_padded_flat(xf, h, w):
    """(N, C, Lp) bf16 -> (N, C, H, W) f32."""
    n, c, _ = xf.shape
    return xf.reshape(n, c, h + 2, w + 2)[:, :, 1:h + 1, 1:w + 1].astype(jnp.float32)


def make_masks(h, w):
    """Interior masks for the padded-flat layout.

    mask_full: (1, Lp)  1.0 at interior positions, 0.0 at padding.
    mask_mid : (1, Li)  same, restricted to flat range [Wp+1, Lp-Wp-1).
    """
    hp, wp = h + 2, w + 2
    lp = hp * wp
    pf = wp + 1
    li = lp - 2 * pf
    idx = jnp.arange(lp)
    r = idx // wp
    c = idx % wp
    interior = (r >= 1) & (r <= h) & (c >= 1) & (c <= w)
    mask_full = interior.astype(jnp.float32).reshape(1, lp)
    mask_mid = mask_full[:, pf:pf + li]
    return mask_mid, mask_full


# --------------------------------------------------------------------------
# Pallas kernels
# --------------------------------------------------------------------------
def _make_resblock_kernel(c, wp, lp, has_enc):
    """One fused Residual_Block: (x [+ enc]) + conv3x3/LReLU/conv3x3 residual."""
    pf = wp + 1
    li = lp - 2 * pf
    offs = tuple((dy - 1) * wp + (dx - 1) for dy in range(3) for dx in range(3))

    def conv3x3_mid(src, w_ref):
        # src: (c, lp) bf16 value or VMEM ref; result: (c, li) f32 accumulator.
        acc = jnp.zeros((c, li), jnp.float32)
        for t, o in enumerate(offs):
            tap = src[:, pf + o: pf + o + li]          # static lane-shifted slice
            acc = acc + jnp.dot(w_ref[t], tap,
                                preferred_element_type=jnp.float32)
        return acc

    def body(x_ref, enc_ref, w1_ref, b1_ref, w2_ref, b2_ref, mask_ref, o_ref,
             y1_scr):
        mask = mask_ref[...]                            # (1, li) f32
        x_bf = x_ref[...]                               # (c, lp) bf16
        if enc_ref is not None:
            x32 = x_bf.astype(jnp.float32) + enc_ref[...].astype(jnp.float32)
            x_bf = x32.astype(jnp.bfloat16)
        else:
            x32 = x_bf.astype(jnp.float32)

        # conv1 + bias + LeakyReLU (interior only, border stays zero)
        y1 = conv3x3_mid(x_bf, w1_ref) + b1_ref[...]
        y1 = jnp.where(y1 > 0, y1, NEG_SLOPE * y1) * mask

        # stash y1 back into padded-flat form in VMEM scratch for conv2 taps
        y1_scr[...] = jnp.zeros((c, lp), jnp.bfloat16)
        y1_scr[:, pf:pf + li] = y1.astype(jnp.bfloat16)

        # conv2 + bias, masked, then residual add with the block input
        y2 = (conv3x3_mid(y1_scr, w2_ref) + b2_ref[...]) * mask
        out_mid = x32[:, pf:pf + li] + y2

        o_ref[...] = jnp.zeros((c, lp), jnp.bfloat16)
        o_ref[:, pf:pf + li] = out_mid.astype(jnp.bfloat16)

    if has_enc:
        def kernel(x_ref, enc_ref, w1_ref, b1_ref, w2_ref, b2_ref, mask_ref,
                   o_ref, y1_scr):
            body(x_ref, enc_ref, w1_ref, b1_ref, w2_ref, b2_ref, mask_ref,
                 o_ref, y1_scr)
    else:
        def kernel(x_ref, w1_ref, b1_ref, w2_ref, b2_ref, mask_ref,
                   o_ref, y1_scr):
            body(x_ref, None, w1_ref, b1_ref, w2_ref, b2_ref, mask_ref,
                 o_ref, y1_scr)
    return kernel


def residual_block(x, enc, unit_p, mask_mid, wp):
    """x, enc: (N, C, Lp) bf16 padded-flat.  Returns (N, C, Lp) bf16."""
    n, c, lp = x.shape
    li = mask_mid.shape[1]
    kernel = _make_resblock_kernel(c, wp, lp, enc is not None)

    act_spec = pl.BlockSpec((None, c, lp), lambda b: (b, 0, 0))
    w_spec = pl.BlockSpec((9, c, c), lambda b: (0, 0, 0))
    b_spec = pl.BlockSpec((c, 1), lambda b: (0, 0))
    m_spec = pl.BlockSpec((1, li), lambda b: (0, 0))

    inputs = [x]
    specs = [act_spec]
    if enc is not None:
        inputs.append(enc)
        specs.append(act_spec)
    inputs += [unit_p["w1"].astype(jnp.bfloat16), unit_p["b1"].reshape(c, 1),
               unit_p["w2"].astype(jnp.bfloat16), unit_p["b2"].reshape(c, 1),
               mask_mid]
    specs += [w_spec, b_spec, w_spec, b_spec, m_spec]

    return pl.pallas_call(
        kernel,
        out_shape=jax.ShapeDtypeStruct((n, c, lp), jnp.bfloat16),
        grid=(n,),
        in_specs=specs,
        out_specs=act_spec,
        scratch_shapes=[pltpu.VMEM((c, lp), jnp.bfloat16)],
        compiler_params=pltpu.CompilerParams(
            dimension_semantics=("parallel",)),
    )(*inputs)


def _make_dense_fuse_kernel(c, lp, nfeat):
    """LeakyReLU(conv1x1(concat(features))) without materializing the concat."""
    def kernel(*refs):
        feat_refs = refs[:nfeat]
        w_ref, b_ref, mask_ref, o_ref = refs[nfeat:]
        acc = jnp.zeros((c, lp), jnp.float32)
        for j in range(nfeat):
            acc = acc + jnp.dot(w_ref[j], feat_refs[j][...],
                                preferred_element_type=jnp.float32)
        y = acc + b_ref[...]
        y = jnp.where(y > 0, y, NEG_SLOPE * y) * mask_ref[...]
        o_ref[...] = y.astype(jnp.bfloat16)
    return kernel


def dense_fuse(feats, w, b, mask_full):
    """feats: list of (N, C, Lp) bf16; w: (nfeat, C, C); returns (N, C, Lp)."""
    n, c, lp = feats[0].shape
    nfeat = len(feats)
    act_spec = pl.BlockSpec((None, c, lp), lambda bb: (bb, 0, 0))
    specs = [act_spec] * nfeat + [
        pl.BlockSpec((nfeat, c, c), lambda bb: (0, 0, 0)),
        pl.BlockSpec((c, 1), lambda bb: (0, 0)),
        pl.BlockSpec((1, lp), lambda bb: (0, 0)),
    ]
    return pl.pallas_call(
        _make_dense_fuse_kernel(c, lp, nfeat),
        out_shape=jax.ShapeDtypeStruct((n, c, lp), jnp.bfloat16),
        grid=(n,),
        in_specs=specs,
        out_specs=act_spec,
        compiler_params=pltpu.CompilerParams(
            dimension_semantics=("parallel",)),
    )(*feats, w.astype(jnp.bfloat16), b.reshape(c, 1), mask_full)


# --------------------------------------------------------------------------
# DenseConnectionAdd forward (matches the PyTorch module semantics)
# --------------------------------------------------------------------------
def dense_connection_add(params, x_nchw, encoder=None):
    n, c, h, w = x_nchw.shape
    wp = w + 2
    mask_mid, mask_full = make_masks(h, w)

    xf = to_padded_flat(x_nchw)
    enc_f = [to_padded_flat(e) for e in encoder] if encoder is not None else None

    unit_num = len(params["units"])
    cat = [xf]
    out = xf
    feature = []
    for i in range(unit_num):
        enc_i = enc_f[unit_num - i - 1] if enc_f is not None else None
        tmp = residual_block(out, enc_i, params["units"][i], mask_mid, wp)
        feature.append(tmp)
        cat.append(tmp)
        out = dense_fuse(cat, params["conv1x1"][i]["w"],
                         params["conv1x1"][i]["b"], mask_full)

    out_nchw = from_padded_flat(out, h, w)
    feature_nchw = [from_padded_flat(f, h, w) for f in feature]
    return out_nchw, feature_nchw


# --------------------------------------------------------------------------
# Parameters (deterministic in-script init; kernel-friendly layouts)
# --------------------------------------------------------------------------
def make_params(key, unit_num, c=CH):
    params = {"units": [], "conv1x1": []}
    cnt = [0]

    def nxt():
        cnt[0] += 1
        return jax.random.fold_in(key, cnt[0])

    for i in range(unit_num):
        s3 = 1.0 / math.sqrt(9 * c)
        params["units"].append({
            # (9, Cout, Cin), tap index t = dy*3 + dx
            "w1": jax.random.normal(nxt(), (9, c, c), jnp.float32) * s3,
            "b1": jax.random.normal(nxt(), (c,), jnp.float32) * 0.1,
            "w2": jax.random.normal(nxt(), (9, c, c), jnp.float32) * s3,
            "b2": jax.random.normal(nxt(), (c,), jnp.float32) * 0.1,
        })
        k = (i + 2) * c
        s1 = 1.0 / math.sqrt(k)
        params["conv1x1"].append({
            # (nfeat, Cout, Cin): slice j multiplies the j-th concatenated feature
            "w": jax.random.normal(nxt(), (i + 2, c, c), jnp.float32) * s1,
            "b": jax.random.normal(nxt(), (c,), jnp.float32) * 0.1,
        })
    return params


# --------------------------------------------------------------------------
# Pure-JAX reference (f32) for correctness checking
# --------------------------------------------------------------------------
def _lrelu(x):
    return jnp.where(x > 0, x, NEG_SLOPE * x)


def _ref_conv3x3(x, w9, b):
    cout, cin = w9.shape[1], w9.shape[2]
    w = jnp.transpose(w9.reshape(3, 3, cout, cin), (2, 3, 0, 1))  # OIHW
    y = jax.lax.conv_general_dilated(
        x, w, (1, 1), ((1, 1), (1, 1)),
        dimension_numbers=("NCHW", "OIHW", "NCHW"))
    return y + b[None, :, None, None]


def _ref_resblock(x, p):
    y = _lrelu(_ref_conv3x3(x, p["w1"], p["b1"]))
    y = _ref_conv3x3(y, p["w2"], p["b2"])
    return x + y


def _ref_conv1x1(feats, w, b):
    acc = sum(jnp.einsum("oc,nchw->nohw", w[j], feats[j])
              for j in range(len(feats)))
    return acc + b[None, :, None, None]


def dense_connection_add_ref(params, x, encoder=None):
    unit_num = len(params["units"])
    cat = [x]
    out = x
    feature = []
    for i in range(unit_num):
        xin = out + encoder[unit_num - i - 1] if encoder is not None else out
        tmp = _ref_resblock(xin, params["units"][i])
        feature.append(tmp)
        cat.append(tmp)
        out = _lrelu(_ref_conv1x1(cat, params["conv1x1"][i]["w"],
                                  params["conv1x1"][i]["b"]))
    return out, feature


# --------------------------------------------------------------------------
if __name__ == "__main__":
    key = jax.random.PRNGKey(0)
    UNIT_NUM = 4
    N, H, W = 2, 16, 16

    params = make_params(jax.random.fold_in(key, 1), UNIT_NUM, CH)
    x = jax.random.normal(jax.random.fold_in(key, 2), (N, CH, H, W), jnp.float32)
    encoder = [jax.random.normal(jax.random.fold_in(key, 10 + i),
                                 (N, CH, H, W), jnp.float32) * 0.5
               for i in range(UNIT_NUM)]

    fwd = jax.jit(lambda xx: dense_connection_add(params, xx))
    out, feats = fwd(x)
    jax.block_until_ready(out)

    fwd_enc = jax.jit(lambda xx, ee: dense_connection_add(params, xx, ee))
    out_e, feats_e = fwd_enc(x, encoder)
    jax.block_until_ready(out_e)

    assert out.shape == (N, CH, H, W) and len(feats) == UNIT_NUM
    assert out_e.shape == (N, CH, H, W) and len(feats_e) == UNIT_NUM
    assert bool(jnp.all(jnp.isfinite(out))) and bool(jnp.all(jnp.isfinite(out_e)))

    # correctness vs. pure-JAX f32 reference (tolerance accounts for bf16 HBM
    # storage / bf16 MXU operands along the chain)
    ref_out, _ = dense_connection_add_ref(params, x)
    ref_out_e, _ = dense_connection_add_ref(params, x, encoder)
    err = float(jnp.max(jnp.abs(out - ref_out)))
    err_e = float(jnp.max(jnp.abs(out_e - ref_out_e)))
    tol = 0.08 * float(jnp.max(jnp.abs(ref_out))) + 0.08
    tol_e = 0.08 * float(jnp.max(jnp.abs(ref_out_e))) + 0.08
    assert err < tol, ("mismatch (no encoder)", err, tol)
    assert err_e < tol_e, ("mismatch (with encoder)", err_e, tol_e)

    print("KERNEL_OK")
</pallas_src>

<mosaic_0001>
module attributes {stable_mosaic.version = 11 : i64} {
  func.func @kernel(%arg0: i32, %arg1: memref<1x8x324xbf16, #tpu.memory_space<vmem>>, %arg2: memref<1x8x324xbf16, #tpu.memory_space<vmem>>, %arg3: memref<2x8x8xbf16, #tpu.memory_space<vmem>>, %arg4: memref<8x1xf32, #tpu.memory_space<vmem>>, %arg5: memref<1x324xf32, #tpu.memory_space<vmem>>, %arg6: memref<1x8x324xbf16, #tpu.memory_space<vmem>>) attributes {dimension_semantics = [#tpu.dimension_semantics<parallel>], iteration_bounds = array<i64: 2>, scalar_prefetch = 0 : i64, scratch_operands = 0 : i64, tpu.core_type = #tpu.core_type<tc>, window_params = [{transform_indices = @transform_0, window_bounds = array<i64: 1, 8, 324>}, {transform_indices = @transform_1, window_bounds = array<i64: 1, 8, 324>}, {pipeline_mode = #tpu.pipeline_mode<synchronous>, transform_indices = @transform_2, window_bounds = array<i64: 2, 8, 8>}, {pipeline_mode = #tpu.pipeline_mode<synchronous>, transform_indices = @transform_3, window_bounds = array<i64: 8, 1>}, {pipeline_mode = #tpu.pipeline_mode<synchronous>, transform_indices = @transform_4, window_bounds = array<i64: 1, 324>}, {transform_indices = @transform_5, window_bounds = array<i64: 1, 8, 324>}]} {
    %cst = arith.constant 0.000000e+00 : f32
    %0 = vector.broadcast %cst : f32 to vector<8x324xf32>
    %c0 = arith.constant 0 : index
    %c0_0 = arith.constant 0 : index
    %c0_1 = arith.constant 0 : index
    %1 = vector.load %arg3[%c0, %c0_0, %c0_1] : memref<2x8x8xbf16, #tpu.memory_space<vmem>>, vector<1x8x8xbf16>
    %2 = vector.shape_cast %1 : vector<1x8x8xbf16> to vector<8x8xbf16>
    %c0_2 = arith.constant 0 : index
    %c0_3 = arith.constant 0 : index
    %c0_4 = arith.constant 0 : index
    %3 = vector.load %arg1[%c0_2, %c0_3, %c0_4] : memref<1x8x324xbf16, #tpu.memory_space<vmem>>, vector<1x8x324xbf16>
    %4 = vector.shape_cast %3 : vector<1x8x324xbf16> to vector<8x324xbf16>
    %cst_5 = arith.constant dense<0.000000e+00> : vector<8x324xf32>
    %5 = tpu.matmul %2, %4, %cst_5 {dimension_numbers = #tpu.dot_dimension_numbers<[1], [0], [0], [1], [0, 0, 1, 1], [], []>} : vector<8x8xbf16>, vector<8x324xbf16>, vector<8x324xf32> -> vector<8x324xf32>
    %6 = arith.addf %0, %5 : vector<8x324xf32>
    %c1 = arith.constant 1 : index
    %c0_6 = arith.constant 0 : index
    %c0_7 = arith.constant 0 : index
    %7 = vector.load %arg3[%c1, %c0_6, %c0_7] : memref<2x8x8xbf16, #tpu.memory_space<vmem>>, vector<1x8x8xbf16>
    %8 = vector.shape_cast %7 : vector<1x8x8xbf16> to vector<8x8xbf16>
    %c0_8 = arith.constant 0 : index
    %c0_9 = arith.constant 0 : index
    %c0_10 = arith.constant 0 : index
    %9 = vector.load %arg2[%c0_8, %c0_9, %c0_10] : memref<1x8x324xbf16, #tpu.memory_space<vmem>>, vector<1x8x324xbf16>
    %10 = vector.shape_cast %9 : vector<1x8x324xbf16> to vector<8x324xbf16>
    %cst_11 = arith.constant dense<0.000000e+00> : vector<8x324xf32>
    %11 = tpu.matmul %8, %10, %cst_11 {dimension_numbers = #tpu.dot_dimension_numbers<[1], [0], [0], [1], [0, 0, 1, 1], [], []>} : vector<8x8xbf16>, vector<8x324xbf16>, vector<8x324xf32> -> vector<8x324xf32>
    %12 = arith.addf %6, %11 : vector<8x324xf32>
    %c0_12 = arith.constant 0 : index
    %c0_13 = arith.constant 0 : index
    %13 = vector.load %arg4[%c0_12, %c0_13] : memref<8x1xf32, #tpu.memory_space<vmem>>, vector<8x1xf32>
    %14 = vector.broadcast %13 : vector<8x1xf32> to vector<8x324xf32>
    %15 = arith.addf %12, %14 : vector<8x324xf32>
    %cst_14 = arith.constant 0.000000e+00 : f32
    %16 = vector.broadcast %cst_14 : f32 to vector<8x324xf32>
    %17 = arith.cmpf ogt, %15, %16 : vector<8x324xf32>
    %cst_15 = arith.constant 2.000000e-01 : f32
    %18 = vector.broadcast %cst_15 : f32 to vector<8x324xf32>
    %19 = arith.mulf %18, %15 : vector<8x324xf32>
    %20 = arith.select %17, %15, %19 : vector<8x324xi1>, vector<8x324xf32>
    %c0_16 = arith.constant 0 : index
    %c0_17 = arith.constant 0 : index
    %21 = vector.load %arg5[%c0_16, %c0_17] : memref<1x324xf32, #tpu.memory_space<vmem>>, vector<1x324xf32>
    %22 = vector.broadcast %21 : vector<1x324xf32> to vector<8x324xf32>
    %23 = arith.mulf %20, %22 : vector<8x324xf32>
    %24 = arith.truncf %23 : vector<8x324xf32> to vector<8x324xbf16>
    %c0_18 = arith.constant 0 : index
    %c0_19 = arith.constant 0 : index
    %c0_20 = arith.constant 0 : index
    %25 = vector.load %arg6[%c0_18, %c0_19, %c0_20] : memref<1x8x324xbf16, #tpu.memory_space<vmem>>, vector<1x8x324xbf16>
    %26 = vector.shape_cast %25 : vector<1x8x324xbf16> to vector<8x324xbf16>
    %27 = vector.shape_cast %24 : vector<8x324xbf16> to vector<1x8x324xbf16>
    tpu.vector_store %arg6[%c0_18, %c0_19, %c0_20], %27 {strides = array<i32>} : memref<1x8x324xbf16, #tpu.memory_space<vmem>>, vector<1x8x324xbf16>,
    return
  }
  func.func @transform_0(%arg0: i32) -> (i32, i32, i32) {
    %c0_i32 = arith.constant 0 : i32
    %c0_i32_0 = arith.constant 0 : i32
    %c0_i32_1 = arith.constant 0 : i32
    return %arg0, %c0_i32, %c0_i32_0 : i32, i32, i32
  }
  func.func @transform_1(%arg0: i32) -> (i32, i32, i32) {
    %c0_i32 = arith.constant 0 : i32
    %c0_i32_0 = arith.constant 0 : i32
    %c0_i32_1 = arith.constant 0 : i32
    return %arg0, %c0_i32, %c0_i32_0 : i32, i32, i32
  }
  func.func @transform_2(%arg0: i32) -> (i32, i32, i32) {
    %c0_i32 = arith.constant 0 : i32
    %c0_i32_0 = arith.constant 0 : i32
    %c0_i32_1 = arith.constant 0 : i32
    %c0_i32_2 = arith.constant 0 : i32
    return %c0_i32, %c0_i32_0, %c0_i32_1 : i32, i32, i32
  }
  func.func @transform_3(%arg0: i32) -> (i32, i32) {
    %c0_i32 = arith.constant 0 : i32
    %c0_i32_0 = arith.constant 0 : i32
    %c0_i32_1 = arith.constant 0 : i32
    return %c0_i32, %c0_i32_0 : i32, i32
  }
  func.func @transform_4(%arg0: i32) -> (i32, i32) {
    %c0_i32 = arith.constant 0 : i32
    %c0_i32_0 = arith.constant 0 : i32
    %c0_i32_1 = arith.constant 0 : i32
    return %c0_i32, %c0_i32_0 : i32, i32
  }
  func.func @transform_5(%arg0: i32) -> (i32, i32, i32) {
    %c0_i32 = arith.constant 0 : i32
    %c0_i32_0 = arith.constant 0 : i32
    %c0_i32_1 = arith.constant 0 : i32
    return %arg0, %c0_i32, %c0_i32_0 : i32, i32, i32
  }
}

module attributes {stable_mosaic.version = 11 : i64} {
  func.func @kernel(%arg0: i32, %arg1: memref<1x8x324xbf16, #tpu.memory_space<vmem>>, %arg2: memref<1x8x324xbf16, #tpu.memory_space<vmem>>, %arg3: memref<1x8x324xbf16, #tpu.memory_space<vmem>>, %arg4: memref<3x8x8xbf16, #tpu.memory_space<vmem>>, %arg5: memref<8x1xf32, #tpu.memory_space<vmem>>, %arg6: memref<1x324xf32, #tpu.memory_space<vmem>>, %arg7: memref<1x8x324xbf16, #tpu.memory_space<vmem>>) attributes {dimension_semantics = [#tpu.dimension_semantics<parallel>], iteration_bounds = array<i64: 2>, scalar_prefetch = 0 : i64, scratch_operands = 0 : i64, tpu.core_type = #tpu.core_type<tc>, window_params = [{transform_indices = @transform_0, window_bounds = array<i64: 1, 8, 324>}, {transform_indices = @transform_1, window_bounds = array<i64: 1, 8, 324>}, {transform_indices = @transform_2, window_bounds = array<i64: 1, 8, 324>}, {pipeline_mode = #tpu.pipeline_mode<synchronous>, transform_indices = @transform_3, window_bounds = array<i64: 3, 8, 8>}, {pipeline_mode = #tpu.pipeline_mode<synchronous>, transform_indices = @transform_4, window_bounds = array<i64: 8, 1>}, {pipeline_mode = #tpu.pipeline_mode<synchronous>, transform_indices = @transform_5, window_bounds = array<i64: 1, 324>}, {transform_indices = @transform_6, window_bounds = array<i64: 1, 8, 324>}]} {
    %cst = arith.constant 0.000000e+00 : f32
    %0 = vector.broadcast %cst : f32 to vector<8x324xf32>
    %c0 = arith.constant 0 : index
    %c0_0 = arith.constant 0 : index
    %c0_1 = arith.constant 0 : index
    %1 = vector.load %arg4[%c0, %c0_0, %c0_1] : memref<3x8x8xbf16, #tpu.memory_space<vmem>>, vector<1x8x8xbf16>
    %2 = vector.shape_cast %1 : vector<1x8x8xbf16> to vector<8x8xbf16>
    %c0_2 = arith.constant 0 : index
    %c0_3 = arith.constant 0 : index
    %c0_4 = arith.constant 0 : index
    %3 = vector.load %arg1[%c0_2, %c0_3, %c0_4] : memref<1x8x324xbf16, #tpu.memory_space<vmem>>, vector<1x8x324xbf16>
    %4 = vector.shape_cast %3 : vector<1x8x324xbf16> to vector<8x324xbf16>
    %cst_5 = arith.constant dense<0.000000e+00> : vector<8x324xf32>
    %5 = tpu.matmul %2, %4, %cst_5 {dimension_numbers = #tpu.dot_dimension_numbers<[1], [0], [0], [1], [0, 0, 1, 1], [], []>} : vector<8x8xbf16>, vector<8x324xbf16>, vector<8x324xf32> -> vector<8x324xf32>
    %6 = arith.addf %0, %5 : vector<8x324xf32>
    %c1 = arith.constant 1 : index
    %c0_6 = arith.constant 0 : index
    %c0_7 = arith.constant 0 : index
    %7 = vector.load %arg4[%c1, %c0_6, %c0_7] : memref<3x8x8xbf16, #tpu.memory_space<vmem>>, vector<1x8x8xbf16>
    %8 = vector.shape_cast %7 : vector<1x8x8xbf16> to vector<8x8xbf16>
    %c0_8 = arith.constant 0 : index
    %c0_9 = arith.constant 0 : index
    %c0_10 = arith.constant 0 : index
    %9 = vector.load %arg2[%c0_8, %c0_9, %c0_10] : memref<1x8x324xbf16, #tpu.memory_space<vmem>>, vector<1x8x324xbf16>
    %10 = vector.shape_cast %9 : vector<1x8x324xbf16> to vector<8x324xbf16>
    %cst_11 = arith.constant dense<0.000000e+00> : vector<8x324xf32>
    %11 = tpu.matmul %8, %10, %cst_11 {dimension_numbers = #tpu.dot_dimension_numbers<[1], [0], [0], [1], [0, 0, 1, 1], [], []>} : vector<8x8xbf16>, vector<8x324xbf16>, vector<8x324xf32> -> vector<8x324xf32>
    %12 = arith.addf %6, %11 : vector<8x324xf32>
    %c2 = arith.constant 2 : index
    %c0_12 = arith.constant 0 : index
    %c0_13 = arith.constant 0 : index
    %13 = vector.load %arg4[%c2, %c0_12, %c0_13] : memref<3x8x8xbf16, #tpu.memory_space<vmem>>, vector<1x8x8xbf16>
    %14 = vector.shape_cast %13 : vector<1x8x8xbf16> to vector<8x8xbf16>
    %c0_14 = arith.constant 0 : index
    %c0_15 = arith.constant 0 : index
    %c0_16 = arith.constant 0 : index
    %15 = vector.load %arg3[%c0_14, %c0_15, %c0_16] : memref<1x8x324xbf16, #tpu.memory_space<vmem>>, vector<1x8x324xbf16>
    %16 = vector.shape_cast %15 : vector<1x8x324xbf16> to vector<8x324xbf16>
    %cst_17 = arith.constant dense<0.000000e+00> : vector<8x324xf32>
    %17 = tpu.matmul %14, %16, %cst_17 {dimension_numbers = #tpu.dot_dimension_numbers<[1], [0], [0], [1], [0, 0, 1, 1], [], []>} : vector<8x8xbf16>, vector<8x324xbf16>, vector<8x324xf32> -> vector<8x324xf32>
    %18 = arith.addf %12, %17 : vector<8x324xf32>
    %c0_18 = arith.constant 0 : index
    %c0_19 = arith.constant 0 : index
    %19 = vector.load %arg5[%c0_18, %c0_19] : memref<8x1xf32, #tpu.memory_space<vmem>>, vector<8x1xf32>
    %20 = vector.broadcast %19 : vector<8x1xf32> to vector<8x324xf32>
    %21 = arith.addf %18, %20 : vector<8x324xf32>
    %cst_20 = arith.constant 0.000000e+00 : f32
    %22 = vector.broadcast %cst_20 : f32 to vector<8x324xf32>
    %23 = arith.cmpf ogt, %21, %22 : vector<8x324xf32>
    %cst_21 = arith.constant 2.000000e-01 : f32
    %24 = vector.broadcast %cst_21 : f32 to vector<8x324xf32>
    %25 = arith.mulf %24, %21 : vector<8x324xf32>
    %26 = arith.select %23, %21, %25 : vector<8x324xi1>, vector<8x324xf32>
    %c0_22 = arith.constant 0 : index
    %c0_23 = arith.constant 0 : index
    %27 = vector.load %arg6[%c0_22, %c0_23] : memref<1x324xf32, #tpu.memory_space<vmem>>, vector<1x324xf32>
    %28 = vector.broadcast %27 : vector<1x324xf32> to vector<8x324xf32>
    %29 = arith.mulf %26, %28 : vector<8x324xf32>
    %30 = arith.truncf %29 : vector<8x324xf32> to vector<8x324xbf16>
    %c0_24 = arith.constant 0 : index
    %c0_25 = arith.constant 0 : index
    %c0_26 = arith.constant 0 : index
    %31 = vector.load %arg7[%c0_24, %c0_25, %c0_26] : memref<1x8x324xbf16, #tpu.memory_space<vmem>>, vector<1x8x324xbf16>
    %32 = vector.shape_cast %31 : vector<1x8x324xbf16> to vector<8x324xbf16>
    %33 = vector.shape_cast %30 : vector<8x324xbf16> to vector<1x8x324xbf16>
    tpu.vector_store %arg7[%c0_24, %c0_25, %c0_26], %33 {strides = array<i32>} : memref<1x8x324xbf16, #tpu.memory_space<vmem>>, vector<1x8x324xbf16>,
    return
  }
  func.func @transform_0(%arg0: i32) -> (i32, i32, i32) {
    %c0_i32 = arith.constant 0 : i32
    %c0_i32_0 = arith.constant 0 : i32
    %c0_i32_1 = arith.constant 0 : i32
    return %arg0, %c0_i32, %c0_i32_0 : i32, i32, i32
  }
  func.func @transform_1(%arg0: i32) -> (i32, i32, i32) {
    %c0_i32 = arith.constant 0 : i32
    %c0_i32_0 = arith.constant 0 : i32
    %c0_i32_1 = arith.constant 0 : i32
    return %arg0, %c0_i32, %c0_i32_0 : i32, i32, i32
  }
  func.func @transform_2(%arg0: i32) -> (i32, i32, i32) {
    %c0_i32 = arith.constant 0 : i32
    %c0_i32_0 = arith.constant 0 : i32
    %c0_i32_1 = arith.constant 0 : i32
    return %arg0, %c0_i32, %c0_i32_0 : i32, i32, i32
  }
  func.func @transform_3(%arg0: i32) -> (i32, i32, i32) {
    %c0_i32 = arith.constant 0 : i32
    %c0_i32_0 = arith.constant 0 : i32
    %c0_i32_1 = arith.constant 0 : i32
    %c0_i32_2 = arith.constant 0 : i32
    return %c0_i32, %c0_i32_0, %c0_i32_1 : i32, i32, i32
  }
  func.func @transform_4(%arg0: i32) -> (i32, i32) {
    %c0_i32 = arith.constant 0 : i32
    %c0_i32_0 = arith.constant 0 : i32
    %c0_i32_1 = arith.constant 0 : i32
    return %c0_i32, %c0_i32_0 : i32, i32
  }
  func.func @transform_5(%arg0: i32) -> (i32, i32) {
    %c0_i32 = arith.constant 0 : i32
    %c0_i32_0 = arith.constant 0 : i32
    %c0_i32_1 = arith.constant 0 : i32
    return %c0_i32, %c0_i32_0 : i32, i32
  }
  func.func @transform_6(%arg0: i32) -> (i32, i32, i32) {
    %c0_i32 = arith.constant 0 : i32
    %c0_i32_0 = arith.constant 0 : i32
    %c0_i32_1 = arith.constant 0 : i32
    return %arg0, %c0_i32, %c0_i32_0 : i32, i32, i32
  }
}

module attributes {stable_mosaic.version = 11 : i64} {
  func.func @kernel(%arg0: i32, %arg1: memref<1x8x324xbf16, #tpu.memory_space<vmem>>, %arg2: memref<9x8x8xbf16, #tpu.memory_space<vmem>>, %arg3: memref<8x1xf32, #tpu.memory_space<vmem>>, %arg4: memref<9x8x8xbf16, #tpu.memory_space<vmem>>, %arg5: memref<8x1xf32, #tpu.memory_space<vmem>>, %arg6: memref<1x286xf32, #tpu.memory_space<vmem>>, %arg7: memref<1x8x324xbf16, #tpu.memory_space<vmem>>, %arg8: memref<8x324xbf16, #tpu.memory_space<vmem>>) attributes {dimension_semantics = [#tpu.dimension_semantics<parallel>], iteration_bounds = array<i64: 2>, scalar_prefetch = 0 : i64, scratch_operands = 1 : i64, tpu.core_type = #tpu.core_type<tc>, window_params = [{transform_indices = @transform_0, window_bounds = array<i64: 1, 8, 324>}, {pipeline_mode = #tpu.pipeline_mode<synchronous>, transform_indices = @transform_1, window_bounds = array<i64: 9, 8, 8>}, {pipeline_mode = #tpu.pipeline_mode<synchronous>, transform_indices = @transform_2, window_bounds = array<i64: 8, 1>}, {pipeline_mode = #tpu.pipeline_mode<synchronous>, transform_indices = @transform_3, window_bounds = array<i64: 9, 8, 8>}, {pipeline_mode = #tpu.pipeline_mode<synchronous>, transform_indices = @transform_4, window_bounds = array<i64: 8, 1>}, {pipeline_mode = #tpu.pipeline_mode<synchronous>, transform_indices = @transform_5, window_bounds = array<i64: 1, 286>}, {transform_indices = @transform_6, window_bounds = array<i64: 1, 8, 324>}]} {
    %c0 = arith.constant 0 : index
    %c0_0 = arith.constant 0 : index
    %0 = vector.load %arg6[%c0, %c0_0] : memref<1x286xf32, #tpu.memory_space<vmem>>, vector<1x286xf32>
    %c0_1 = arith.constant 0 : index
    %c0_2 = arith.constant 0 : index
    %c0_3 = arith.constant 0 : index
    %1 = vector.load %arg1[%c0_1, %c0_2, %c0_3] : memref<1x8x324xbf16, #tpu.memory_space<vmem>>, vector<1x8x324xbf16>
    %2 = vector.shape_cast %1 : vector<1x8x324xbf16> to vector<8x324xbf16>
    %3 = arith.extf %2 : vector<8x324xbf16> to vector<8x324xf32>
    %cst = arith.constant 0.000000e+00 : f32
    %4 = vector.broadcast %cst : f32 to vector<8x286xf32>
    %5 = vector.extract_strided_slice %2 {offsets = [0, 0], sizes = [8, 286], strides = [1, 1]} : vector<8x324xbf16> to vector<8x286xbf16>
    %c0_4 = arith.constant 0 : index
    %c0_5 = arith.constant 0 : index
    %c0_6 = arith.constant 0 : index
    %6 = vector.load %arg2[%c0_4, %c0_5, %c0_6] : memref<9x8x8xbf16, #tpu.memory_space<vmem>>, vector<1x8x8xbf16>
    %7 = vector.shape_cast %6 : vector<1x8x8xbf16> to vector<8x8xbf16>
    %cst_7 = arith.constant dense<0.000000e+00> : vector<8x286xf32>
    %8 = tpu.matmul %7, %5, %cst_7 {dimension_numbers = #tpu.dot_dimension_numbers<[1], [0], [0], [1], [0, 0, 1, 1], [], []>} : vector<8x8xbf16>, vector<8x286xbf16>, vector<8x286xf32> -> vector<8x286xf32>
    %9 = arith.addf %4, %8 : vector<8x286xf32>
    %10 = vector.extract_strided_slice %2 {offsets = [0, 1], sizes = [8, 286], strides = [1, 1]} : vector<8x324xbf16> to vector<8x286xbf16>
    %c1 = arith.constant 1 : index
    %c0_8 = arith.constant 0 : index
    %c0_9 = arith.constant 0 : index
    %11 = vector.load %arg2[%c1, %c0_8, %c0_9] : memref<9x8x8xbf16, #tpu.memory_space<vmem>>, vector<1x8x8xbf16>
    %12 = vector.shape_cast %11 : vector<1x8x8xbf16> to vector<8x8xbf16>
    %cst_10 = arith.constant dense<0.000000e+00> : vector<8x286xf32>
    %13 = tpu.matmul %12, %10, %cst_10 {dimension_numbers = #tpu.dot_dimension_numbers<[1], [0], [0], [1], [0, 0, 1, 1], [], []>} : vector<8x8xbf16>, vector<8x286xbf16>, vector<8x286xf32> -> vector<8x286xf32>
    %14 = arith.addf %9, %13 : vector<8x286xf32>
    %15 = vector.extract_strided_slice %2 {offsets = [0, 2], sizes = [8, 286], strides = [1, 1]} : vector<8x324xbf16> to vector<8x286xbf16>
    %c2 = arith.constant 2 : index
    %c0_11 = arith.constant 0 : index
    %c0_12 = arith.constant 0 : index
    %16 = vector.load %arg2[%c2, %c0_11, %c0_12] : memref<9x8x8xbf16, #tpu.memory_space<vmem>>, vector<1x8x8xbf16>
    %17 = vector.shape_cast %16 : vector<1x8x8xbf16> to vector<8x8xbf16>
    %cst_13 = arith.constant dense<0.000000e+00> : vector<8x286xf32>
    %18 = tpu.matmul %17, %15, %cst_13 {dimension_numbers = #tpu.dot_dimension_numbers<[1], [0], [0], [1], [0, 0, 1, 1], [], []>} : vector<8x8xbf16>, vector<8x286xbf16>, vector<8x286xf32> -> vector<8x286xf32>
    %19 = arith.addf %14, %18 : vector<8x286xf32>
    %20 = vector.extract_strided_slice %2 {offsets = [0, 18], sizes = [8, 286], strides = [1, 1]} : vector<8x324xbf16> to vector<8x286xbf16>
    %c3 = arith.constant 3 : index
    %c0_14 = arith.constant 0 : index
    %c0_15 = arith.constant 0 : index
    %21 = vector.load %arg2[%c3, %c0_14, %c0_15] : memref<9x8x8xbf16, #tpu.memory_space<vmem>>, vector<1x8x8xbf16>
    %22 = vector.shape_cast %21 : vector<1x8x8xbf16> to vector<8x8xbf16>
    %cst_16 = arith.constant dense<0.000000e+00> : vector<8x286xf32>
    %23 = tpu.matmul %22, %20, %cst_16 {dimension_numbers = #tpu.dot_dimension_numbers<[1], [0], [0], [1], [0, 0, 1, 1], [], []>} : vector<8x8xbf16>, vector<8x286xbf16>, vector<8x286xf32> -> vector<8x286xf32>
    %24 = arith.addf %19, %23 : vector<8x286xf32>
    %25 = vector.extract_strided_slice %2 {offsets = [0, 19], sizes = [8, 286], strides = [1, 1]} : vector<8x324xbf16> to vector<8x286xbf16>
    %c4 = arith.constant 4 : index
    %c0_17 = arith.constant 0 : index
    %c0_18 = arith.constant 0 : index
    %26 = vector.load %arg2[%c4, %c0_17, %c0_18] : memref<9x8x8xbf16, #tpu.memory_space<vmem>>, vector<1x8x8xbf16>
    %27 = vector.shape_cast %26 : vector<1x8x8xbf16> to vector<8x8xbf16>
    %cst_19 = arith.constant dense<0.000000e+00> : vector<8x286xf32>
    %28 = tpu.matmul %27, %25, %cst_19 {dimension_numbers = #tpu.dot_dimension_numbers<[1], [0], [0], [1], [0, 0, 1, 1], [], []>} : vector<8x8xbf16>, vector<8x286xbf16>, vector<8x286xf32> -> vector<8x286xf32>
    %29 = arith.addf %24, %28 : vector<8x286xf32>
    %30 = vector.extract_strided_slice %2 {offsets = [0, 20], sizes = [8, 286], strides = [1, 1]} : vector<8x324xbf16> to vector<8x286xbf16>
    %c5 = arith.constant 5 : index
    %c0_20 = arith.constant 0 : index
    %c0_21 = arith.constant 0 : index
    %31 = vector.load %arg2[%c5, %c0_20, %c0_21] : memref<9x8x8xbf16, #tpu.memory_space<vmem>>, vector<1x8x8xbf16>
    %32 = vector.shape_cast %31 : vector<1x8x8xbf16> to vector<8x8xbf16>
    %cst_22 = arith.constant dense<0.000000e+00> : vector<8x286xf32>
    %33 = tpu.matmul %32, %30, %cst_22 {dimension_numbers = #tpu.dot_dimension_numbers<[1], [0], [0], [1], [0, 0, 1, 1], [], []>} : vector<8x8xbf16>, vector<8x286xbf16>, vector<8x286xf32> -> vector<8x286xf32>
    %34 = arith.addf %29, %33 : vector<8x286xf32>
    %35 = vector.extract_strided_slice %2 {offsets = [0, 36], sizes = [8, 286], strides = [1, 1]} : vector<8x324xbf16> to vector<8x286xbf16>
    %c6 = arith.constant 6 : index
    %c0_23 = arith.constant 0 : index
    %c0_24 = arith.constant 0 : index
    %36 = vector.load %arg2[%c6, %c0_23, %c0_24] : memref<9x8x8xbf16, #tpu.memory_space<vmem>>, vector<1x8x8xbf16>
    %37 = vector.shape_cast %36 : vector<1x8x8xbf16> to vector<8x8xbf16>
    %cst_25 = arith.constant dense<0.000000e+00> : vector<8x286xf32>
    %38 = tpu.matmul %37, %35, %cst_25 {dimension_numbers = #tpu.dot_dimension_numbers<[1], [0], [0], [1], [0, 0, 1, 1], [], []>} : vector<8x8xbf16>, vector<8x286xbf16>, vector<8x286xf32> -> vector<8x286xf32>
    %39 = arith.addf %34, %38 : vector<8x286xf32>
    %40 = vector.extract_strided_slice %2 {offsets = [0, 37], sizes = [8, 286], strides = [1, 1]} : vector<8x324xbf16> to vector<8x286xbf16>
    %c7 = arith.constant 7 : index
    %c0_26 = arith.constant 0 : index
    %c0_27 = arith.constant 0 : index
    %41 = vector.load %arg2[%c7, %c0_26, %c0_27] : memref<9x8x8xbf16, #tpu.memory_space<vmem>>, vector<1x8x8xbf16>
    %42 = vector.shape_cast %41 : vector<1x8x8xbf16> to vector<8x8xbf16>
    %cst_28 = arith.constant dense<0.000000e+00> : vector<8x286xf32>
    %43 = tpu.matmul %42, %40, %cst_28 {dimension_numbers = #tpu.dot_dimension_numbers<[1], [0], [0], [1], [0, 0, 1, 1], [], []>} : vector<8x8xbf16>, vector<8x286xbf16>, vector<8x286xf32> -> vector<8x286xf32>
    %44 = arith.addf %39, %43 : vector<8x286xf32>
    %45 = vector.extract_strided_slice %2 {offsets = [0, 38], sizes = [8, 286], strides = [1, 1]} : vector<8x324xbf16> to vector<8x286xbf16>
    %c8 = arith.constant 8 : index
    %c0_29 = arith.constant 0 : index
    %c0_30 = arith.constant 0 : index
    %46 = vector.load %arg2[%c8, %c0_29, %c0_30] : memref<9x8x8xbf16, #tpu.memory_space<vmem>>, vector<1x8x8xbf16>
    %47 = vector.shape_cast %46 : vector<1x8x8xbf16> to vector<8x8xbf16>
    %cst_31 = arith.constant dense<0.000000e+00> : vector<8x286xf32>
    %48 = tpu.matmul %47, %45, %cst_31 {dimension_numbers = #tpu.dot_dimension_numbers<[1], [0], [0], [1], [0, 0, 1, 1], [], []>} : vector<8x8xbf16>, vector<8x286xbf16>, vector<8x286xf32> -> vector<8x286xf32>
    %49 = arith.addf %44, %48 : vector<8x286xf32>
    %c0_32 = arith.constant 0 : index
    %c0_33 = arith.constant 0 : index
    %50 = vector.load %arg3[%c0_32, %c0_33] : memref<8x1xf32, #tpu.memory_space<vmem>>, vector<8x1xf32>
    %51 = vector.broadcast %50 : vector<8x1xf32> to vector<8x286xf32>
    %52 = arith.addf %49, %51 : vector<8x286xf32>
    %cst_34 = arith.constant 0.000000e+00 : f32
    %53 = vector.broadcast %cst_34 : f32 to vector<8x286xf32>
    %54 = arith.cmpf ogt, %52, %53 : vector<8x286xf32>
    %cst_35 = arith.constant 2.000000e-01 : f32
    %55 = vector.broadcast %cst_35 : f32 to vector<8x286xf32>
    %56 = arith.mulf %55, %52 : vector<8x286xf32>
    %57 = arith.select %54, %52, %56 : vector<8x286xi1>, vector<8x286xf32>
    %58 = vector.broadcast %0 : vector<1x286xf32> to vector<8x286xf32>
    %59 = arith.mulf %57, %58 : vector<8x286xf32>
    %cst_36 = arith.constant 0.000000e+00 : bf16
    %60 = vector.broadcast %cst_36 : bf16 to vector<8x324xbf16>
    %c0_37 = arith.constant 0 : index
    %c0_38 = arith.constant 0 : index
    %61 = vector.load %arg8[%c0_37, %c0_38] : memref<8x324xbf16, #tpu.memory_space<vmem>>, vector<8x324xbf16>
    tpu.vector_store %arg8[%c0_37, %c0_38], %60 {strides = array<i32>} : memref<8x324xbf16, #tpu.memory_space<vmem>>, vector<8x324xbf16>,
    %62 = arith.truncf %59 : vector<8x286xf32> to vector<8x286xbf16>
    %c0_39 = arith.constant 0 : index
    %c19 = arith.constant 19 : index
    %63 = vector.load %arg8[%c0_39, %c19] : memref<8x324xbf16, #tpu.memory_space<vmem>>, vector<8x286xbf16>
    tpu.vector_store %arg8[%c0_39, %c19], %62 {strides = array<i32>} : memref<8x324xbf16, #tpu.memory_space<vmem>>, vector<8x286xbf16>,
    %cst_40 = arith.constant 0.000000e+00 : f32
    %64 = vector.broadcast %cst_40 : f32 to vector<8x286xf32>
    %c0_41 = arith.constant 0 : index
    %c0_42 = arith.constant 0 : index
    %65 = vector.load %arg8[%c0_41, %c0_42] : memref<8x324xbf16, #tpu.memory_space<vmem>>, vector<8x286xbf16>
    %c0_43 = arith.constant 0 : index
    %c0_44 = arith.constant 0 : index
    %c0_45 = arith.constant 0 : index
    %66 = vector.load %arg4[%c0_43, %c0_44, %c0_45] : memref<9x8x8xbf16, #tpu.memory_space<vmem>>, vector<1x8x8xbf16>
    %67 = vector.shape_cast %66 : vector<1x8x8xbf16> to vector<8x8xbf16>
    %cst_46 = arith.constant dense<0.000000e+00> : vector<8x286xf32>
    %68 = tpu.matmul %67, %65, %cst_46 {dimension_numbers = #tpu.dot_dimension_numbers<[1], [0], [0], [1], [0, 0, 1, 1], [], []>} : vector<8x8xbf16>, vector<8x286xbf16>, vector<8x286xf32> -> vector<8x286xf32>
    %69 = arith.addf %64, %68 : vector<8x286xf32>
    %c0_47 = arith.constant 0 : index
    %c1_48 = arith.constant 1 : index
    %70 = vector.load %arg8[%c0_47, %c1_48] : memref<8x324xbf16, #tpu.memory_space<vmem>>, vector<8x286xbf16>
    %c1_49 = arith.constant 1 : index
    %c0_50 = arith.constant 0 : index
    %c0_51 = arith.constant 0 : index
    %71 = vector.load %arg4[%c1_49, %c0_50, %c0_51] : memref<9x8x8xbf16, #tpu.memory_space<vmem>>, vector<1x8x8xbf16>
    %72 = vector.shape_cast %71 : vector<1x8x8xbf16> to vector<8x8xbf16>
    %cst_52 = arith.constant dense<0.000000e+00> : vector<8x286xf32>
    %73 = tpu.matmul %72, %70, %cst_52 {dimension_numbers = #tpu.dot_dimension_numbers<[1], [0], [0], [1], [0, 0, 1, 1], [], []>} : vector<8x8xbf16>, vector<8x286xbf16>, vector<8x286xf32> -> vector<8x286xf32>
    %74 = arith.addf %69, %73 : vector<8x286xf32>
    %c0_53 = arith.constant 0 : index
    %c2_54 = arith.constant 2 : index
    %75 = vector.load %arg8[%c0_53, %c2_54] : memref<8x324xbf16, #tpu.memory_space<vmem>>, vector<8x286xbf16>
    %c2_55 = arith.constant 2 : index
    %c0_56 = arith.constant 0 : index
    %c0_57 = arith.constant 0 : index
    %76 = vector.load %arg4[%c2_55, %c0_56, %c0_57] : memref<9x8x8xbf16, #tpu.memory_space<vmem>>, vector<1x8x8xbf16>
    %77 = vector.shape_cast %76 : vector<1x8x8xbf16> to vector<8x8xbf16>
    %cst_58 = arith.constant dense<0.000000e+00> : vector<8x286xf32>
    %78 = tpu.matmul %77, %75, %cst_58 {dimension_numbers = #tpu.dot_dimension_numbers<[1], [0], [0], [1], [0, 0, 1, 1], [], []>} : vector<8x8xbf16>, vector<8x286xbf16>, vector<8x286xf32> -> vector<8x286xf32>
    %79 = arith.addf %74, %78 : vector<8x286xf32>
    %c0_59 = arith.constant 0 : index
    %c18 = arith.constant 18 : index
    %80 = vector.load %arg8[%c0_59, %c18] : memref<8x324xbf16, #tpu.memory_space<vmem>>, vector<8x286xbf16>
    %c3_60 = arith.constant 3 : index
    %c0_61 = arith.constant 0 : index
    %c0_62 = arith.constant 0 : index
    %81 = vector.load %arg4[%c3_60, %c0_61, %c0_62] : memref<9x8x8xbf16, #tpu.memory_space<vmem>>, vector<1x8x8xbf16>
    %82 = vector.shape_cast %81 : vector<1x8x8xbf16> to vector<8x8xbf16>
    %cst_63 = arith.constant dense<0.000000e+00> : vector<8x286xf32>
    %83 = tpu.matmul %82, %80, %cst_63 {dimension_numbers = #tpu.dot_dimension_numbers<[1], [0], [0], [1], [0, 0, 1, 1], [], []>} : vector<8x8xbf16>, vector<8x286xbf16>, vector<8x286xf32> -> vector<8x286xf32>
    %84 = arith.addf %79, %83 : vector<8x286xf32>
    %c0_64 = arith.constant 0 : index
    %c19_65 = arith.constant 19 : index
    %85 = vector.load %arg8[%c0_64, %c19_65] : memref<8x324xbf16, #tpu.memory_space<vmem>>, vector<8x286xbf16>
    %c4_66 = arith.constant 4 : index
    %c0_67 = arith.constant 0 : index
    %c0_68 = arith.constant 0 : index
    %86 = vector.load %arg4[%c4_66, %c0_67, %c0_68] : memref<9x8x8xbf16, #tpu.memory_space<vmem>>, vector<1x8x8xbf16>
    %87 = vector.shape_cast %86 : vector<1x8x8xbf16> to vector<8x8xbf16>
    %cst_69 = arith.constant dense<0.000000e+00> : vector<8x286xf32>
    %88 = tpu.matmul %87, %85, %cst_69 {dimension_numbers = #tpu.dot_dimension_numbers<[1], [0], [0], [1], [0, 0, 1, 1], [], []>} : vector<8x8xbf16>, vector<8x286xbf16>, vector<8x286xf32> -> vector<8x286xf32>
    %89 = arith.addf %84, %88 : vector<8x286xf32>
    %c0_70 = arith.constant 0 : index
    %c20 = arith.constant 20 : index
    %90 = vector.load %arg8[%c0_70, %c20] : memref<8x324xbf16, #tpu.memory_space<vmem>>, vector<8x286xbf16>
    %c5_71 = arith.constant 5 : index
    %c0_72 = arith.constant 0 : index
    %c0_73 = arith.constant 0 : index
    %91 = vector.load %arg4[%c5_71, %c0_72, %c0_73] : memref<9x8x8xbf16, #tpu.memory_space<vmem>>, vector<1x8x8xbf16>
    %92 = vector.shape_cast %91 : vector<1x8x8xbf16> to vector<8x8xbf16>
    %cst_74 = arith.constant dense<0.000000e+00> : vector<8x286xf32>
    %93 = tpu.matmul %92, %90, %cst_74 {dimension_numbers = #tpu.dot_dimension_numbers<[1], [0], [0], [1], [0, 0, 1, 1], [], []>} : vector<8x8xbf16>, vector<8x286xbf16>, vector<8x286xf32> -> vector<8x286xf32>
    %94 = arith.addf %89, %93 : vector<8x286xf32>
    %c0_75 = arith.constant 0 : index
    %c36 = arith.constant 36 : index
    %95 = vector.load %arg8[%c0_75, %c36] : memref<8x324xbf16, #tpu.memory_space<vmem>>, vector<8x286xbf16>
    %c6_76 = arith.constant 6 : index
    %c0_77 = arith.constant 0 : index
    %c0_78 = arith.constant 0 : index
    %96 = vector.load %arg4[%c6_76, %c0_77, %c0_78] : memref<9x8x8xbf16, #tpu.memory_space<vmem>>, vector<1x8x8xbf16>
    %97 = vector.shape_cast %96 : vector<1x8x8xbf16> to vector<8x8xbf16>
    %cst_79 = arith.constant dense<0.000000e+00> : vector<8x286xf32>
    %98 = tpu.matmul %97, %95, %cst_79 {dimension_numbers = #tpu.dot_dimension_numbers<[1], [0], [0], [1], [0, 0, 1, 1], [], []>} : vector<8x8xbf16>, vector<8x286xbf16>, vector<8x286xf32> -> vector<8x286xf32>
    %99 = arith.addf %94, %98 : vector<8x286xf32>
    %c0_80 = arith.constant 0 : index
    %c37 = arith.constant 37 : index
    %100 = vector.load %arg8[%c0_80, %c37] : memref<8x324xbf16, #tpu.memory_space<vmem>>, vector<8x286xbf16>
    %c7_81 = arith.constant 7 : index
    %c0_82 = arith.constant 0 : index
    %c0_83 = arith.constant 0 : index
    %101 = vector.load %arg4[%c7_81, %c0_82, %c0_83] : memref<9x8x8xbf16, #tpu.memory_space<vmem>>, vector<1x8x8xbf16>
    %102 = vector.shape_cast %101 : vector<1x8x8xbf16> to vector<8x8xbf16>
    %cst_84 = arith.constant dense<0.000000e+00> : vector<8x286xf32>
    %103 = tpu.matmul %102, %100, %cst_84 {dimension_numbers = #tpu.dot_dimension_numbers<[1], [0], [0], [1], [0, 0, 1, 1], [], []>} : vector<8x8xbf16>, vector<8x286xbf16>, vector<8x286xf32> -> vector<8x286xf32>
    %104 = arith.addf %99, %103 : vector<8x286xf32>
    %c0_85 = arith.constant 0 : index
    %c38 = arith.constant 38 : index
    %105 = vector.load %arg8[%c0_85, %c38] : memref<8x324xbf16, #tpu.memory_space<vmem>>, vector<8x286xbf16>
    %c8_86 = arith.constant 8 : index
    %c0_87 = arith.constant 0 : index
    %c0_88 = arith.constant 0 : index
    %106 = vector.load %arg4[%c8_86, %c0_87, %c0_88] : memref<9x8x8xbf16, #tpu.memory_space<vmem>>, vector<1x8x8xbf16>
    %107 = vector.shape_cast %106 : vector<1x8x8xbf16> to vector<8x8xbf16>
    %cst_89 = arith.constant dense<0.000000e+00> : vector<8x286xf32>
    %108 = tpu.matmul %107, %105, %cst_89 {dimension_numbers = #tpu.dot_dimension_numbers<[1], [0], [0], [1], [0, 0, 1, 1], [], []>} : vector<8x8xbf16>, vector<8x286xbf16>, vector<8x286xf32> -> vector<8x286xf32>
    %109 = arith.addf %104, %108 : vector<8x286xf32>
    %c0_90 = arith.constant 0 : index
    %c0_91 = arith.constant 0 : index
    %110 = vector.load %arg5[%c0_90, %c0_91] : memref<8x1xf32, #tpu.memory_space<vmem>>, vector<8x1xf32>
    %111 = vector.broadcast %110 : vector<8x1xf32> to vector<8x286xf32>
    %112 = arith.addf %109, %111 : vector<8x286xf32>
    %113 = vector.broadcast %0 : vector<1x286xf32> to vector<8x286xf32>
    %114 = arith.mulf %112, %113 : vector<8x286xf32>
    %115 = vector.extract_strided_slice %3 {offsets = [0, 19], sizes = [8, 286], strides = [1, 1]} : vector<8x324xf32> to vector<8x286xf32>
    %116 = arith.addf %115, %114 : vector<8x286xf32>
    %cst_92 = arith.constant 0.000000e+00 : bf16
    %117 = vector.broadcast %cst_92 : bf16 to vector<8x324xbf16>
    %c0_93 = arith.constant 0 : index
    %c0_94 = arith.constant 0 : index
    %c0_95 = arith.constant 0 : index
    %118 = vector.load %arg7[%c0_93, %c0_94, %c0_95] : memref<1x8x324xbf16, #tpu.memory_space<vmem>>, vector<1x8x324xbf16>
    %119 = vector.shape_cast %118 : vector<1x8x324xbf16> to vector<8x324xbf16>
    %120 = vector.shape_cast %117 : vector<8x324xbf16> to vector<1x8x324xbf16>
    tpu.vector_store %arg7[%c0_93, %c0_94, %c0_95], %120 {strides = array<i32>} : memref<1x8x324xbf16, #tpu.memory_space<vmem>>, vector<1x8x324xbf16>,
    %121 = arith.truncf %116 : vector<8x286xf32> to vector<8x286xbf16>
    %c0_96 = arith.constant 0 : index
    %c0_97 = arith.constant 0 : index
    %c19_98 = arith.constant 19 : index
    %122 = vector.load %arg7[%c0_96, %c0_97, %c19_98] : memref<1x8x324xbf16, #tpu.memory_space<vmem>>, vector<1x8x286xbf16>
    %123 = vector.shape_cast %122 : vector<1x8x286xbf16> to vector<8x286xbf16>
    %124 = vector.shape_cast %121 : vector<8x286xbf16> to vector<1x8x286xbf16>
    tpu.vector_store %arg7[%c0_96, %c0_97, %c19_98], %124 {strides = array<i32>} : memref<1x8x324xbf16, #tpu.memory_space<vmem>>, vector<1x8x286xbf16>,
    return
  }
  func.func @transform_0(%arg0: i32) -> (i32, i32, i32) {
    %c0_i32 = arith.constant 0 : i32
    %c0_i32_0 = arith.constant 0 : i32
    %c0_i32_1 = arith.constant 0 : i32
    return %arg0, %c0_i32, %c0_i32_0 : i32, i32, i32
  }
  func.func @transform_1(%arg0: i32) -> (i32, i32, i32) {
    %c0_i32 = arith.constant 0 : i32
    %c0_i32_0 = arith.constant 0 : i32
    %c0_i32_1 = arith.constant 0 : i32
    %c0_i32_2 = arith.constant 0 : i32
    return %c0_i32, %c0_i32_0, %c0_i32_1 : i32, i32, i32
  }
  func.func @transform_2(%arg0: i32) -> (i32, i32) {
    %c0_i32 = arith.constant 0 : i32
    %c0_i32_0 = arith.constant 0 : i32
    %c0_i32_1 = arith.constant 0 : i32
    return %c0_i32, %c0_i32_0 : i32, i32
  }
  func.func @transform_3(%arg0: i32) -> (i32, i32, i32) {
    %c0_i32 = arith.constant 0 : i32
    %c0_i32_0 = arith.constant 0 : i32
    %c0_i32_1 = arith.constant 0 : i32
    %c0_i32_2 = arith.constant 0 : i32
    return %c0_i32, %c0_i32_0, %c0_i32_1 : i32, i32, i32
  }
  func.func @transform_4(%arg0: i32) -> (i32, i32) {
    %c0_i32 = arith.constant 0 : i32
    %c0_i32_0 = arith.constant 0 : i32
    %c0_i32_1 = arith.constant 0 : i32
    return %c0_i32, %c0_i32_0 : i32, i32
  }
  func.func @transform_5(%arg0: i32) -> (i32, i32) {
    %c0_i32 = arith.constant 0 : i32
    %c0_i32_0 = arith.constant 0 : i32
    %c0_i32_1 = arith.constant 0 : i32
    return %c0_i32, %c0_i32_0 : i32, i32
  }
  func.func @transform_6(%arg0: i32) -> (i32, i32, i32) {
    %c0_i32 = arith.constant 0 : i32
    %c0_i32_0 = arith.constant 0 : i32
    %c0_i32_1 = arith.constant 0 : i32
    return %arg0, %c0_i32, %c0_i32_0 : i32, i32, i32
  }
}

module attributes {stable_mosaic.version = 11 : i64} {
  func.func @kernel(%arg0: i32, %arg1: memref<1x8x324xbf16, #tpu.memory_space<vmem>>, %arg2: memref<1x8x324xbf16, #tpu.memory_space<vmem>>, %arg3: memref<1x8x324xbf16, #tpu.memory_space<vmem>>, %arg4: memref<1x8x324xbf16, #tpu.memory_space<vmem>>, %arg5: memref<4x8x8xbf16, #tpu.memory_space<vmem>>, %arg6: memref<8x1xf32, #tpu.memory_space<vmem>>, %arg7: memref<1x324xf32, #tpu.memory_space<vmem>>, %arg8: memref<1x8x324xbf16, #tpu.memory_space<vmem>>) attributes {dimension_semantics = [#tpu.dimension_semantics<parallel>], iteration_bounds = array<i64: 2>, scalar_prefetch = 0 : i64, scratch_operands = 0 : i64, tpu.core_type = #tpu.core_type<tc>, window_params = [{transform_indices = @transform_0, window_bounds = array<i64: 1, 8, 324>}, {transform_indices = @transform_1, window_bounds = array<i64: 1, 8, 324>}, {transform_indices = @transform_2, window_bounds = array<i64: 1, 8, 324>}, {transform_indices = @transform_3, window_bounds = array<i64: 1, 8, 324>}, {pipeline_mode = #tpu.pipeline_mode<synchronous>, transform_indices = @transform_4, window_bounds = array<i64: 4, 8, 8>}, {pipeline_mode = #tpu.pipeline_mode<synchronous>, transform_indices = @transform_5, window_bounds = array<i64: 8, 1>}, {pipeline_mode = #tpu.pipeline_mode<synchronous>, transform_indices = @transform_6, window_bounds = array<i64: 1, 324>}, {transform_indices = @transform_7, window_bounds = array<i64: 1, 8, 324>}]} {
    %cst = arith.constant 0.000000e+00 : f32
    %0 = vector.broadcast %cst : f32 to vector<8x324xf32>
    %c0 = arith.constant 0 : index
    %c0_0 = arith.constant 0 : index
    %c0_1 = arith.constant 0 : index
    %1 = vector.load %arg5[%c0, %c0_0, %c0_1] : memref<4x8x8xbf16, #tpu.memory_space<vmem>>, vector<1x8x8xbf16>
    %2 = vector.shape_cast %1 : vector<1x8x8xbf16> to vector<8x8xbf16>
    %c0_2 = arith.constant 0 : index
    %c0_3 = arith.constant 0 : index
    %c0_4 = arith.constant 0 : index
    %3 = vector.load %arg1[%c0_2, %c0_3, %c0_4] : memref<1x8x324xbf16, #tpu.memory_space<vmem>>, vector<1x8x324xbf16>
    %4 = vector.shape_cast %3 : vector<1x8x324xbf16> to vector<8x324xbf16>
    %cst_5 = arith.constant dense<0.000000e+00> : vector<8x324xf32>
    %5 = tpu.matmul %2, %4, %cst_5 {dimension_numbers = #tpu.dot_dimension_numbers<[1], [0], [0], [1], [0, 0, 1, 1], [], []>} : vector<8x8xbf16>, vector<8x324xbf16>, vector<8x324xf32> -> vector<8x324xf32>
    %6 = arith.addf %0, %5 : vector<8x324xf32>
    %c1 = arith.constant 1 : index
    %c0_6 = arith.constant 0 : index
    %c0_7 = arith.constant 0 : index
    %7 = vector.load %arg5[%c1, %c0_6, %c0_7] : memref<4x8x8xbf16, #tpu.memory_space<vmem>>, vector<1x8x8xbf16>
    %8 = vector.shape_cast %7 : vector<1x8x8xbf16> to vector<8x8xbf16>
    %c0_8 = arith.constant 0 : index
    %c0_9 = arith.constant 0 : index
    %c0_10 = arith.constant 0 : index
    %9 = vector.load %arg2[%c0_8, %c0_9, %c0_10] : memref<1x8x324xbf16, #tpu.memory_space<vmem>>, vector<1x8x324xbf16>
    %10 = vector.shape_cast %9 : vector<1x8x324xbf16> to vector<8x324xbf16>
    %cst_11 = arith.constant dense<0.000000e+00> : vector<8x324xf32>
    %11 = tpu.matmul %8, %10, %cst_11 {dimension_numbers = #tpu.dot_dimension_numbers<[1], [0], [0], [1], [0, 0, 1, 1], [], []>} : vector<8x8xbf16>, vector<8x324xbf16>, vector<8x324xf32> -> vector<8x324xf32>
    %12 = arith.addf %6, %11 : vector<8x324xf32>
    %c2 = arith.constant 2 : index
    %c0_12 = arith.constant 0 : index
    %c0_13 = arith.constant 0 : index
    %13 = vector.load %arg5[%c2, %c0_12, %c0_13] : memref<4x8x8xbf16, #tpu.memory_space<vmem>>, vector<1x8x8xbf16>
    %14 = vector.shape_cast %13 : vector<1x8x8xbf16> to vector<8x8xbf16>
    %c0_14 = arith.constant 0 : index
    %c0_15 = arith.constant 0 : index
    %c0_16 = arith.constant 0 : index
    %15 = vector.load %arg3[%c0_14, %c0_15, %c0_16] : memref<1x8x324xbf16, #tpu.memory_space<vmem>>, vector<1x8x324xbf16>
    %16 = vector.shape_cast %15 : vector<1x8x324xbf16> to vector<8x324xbf16>
    %cst_17 = arith.constant dense<0.000000e+00> : vector<8x324xf32>
    %17 = tpu.matmul %14, %16, %cst_17 {dimension_numbers = #tpu.dot_dimension_numbers<[1], [0], [0], [1], [0, 0, 1, 1], [], []>} : vector<8x8xbf16>, vector<8x324xbf16>, vector<8x324xf32> -> vector<8x324xf32>
    %18 = arith.addf %12, %17 : vector<8x324xf32>
    %c3 = arith.constant 3 : index
    %c0_18 = arith.constant 0 : index
    %c0_19 = arith.constant 0 : index
    %19 = vector.load %arg5[%c3, %c0_18, %c0_19] : memref<4x8x8xbf16, #tpu.memory_space<vmem>>, vector<1x8x8xbf16>
    %20 = vector.shape_cast %19 : vector<1x8x8xbf16> to vector<8x8xbf16>
    %c0_20 = arith.constant 0 : index
    %c0_21 = arith.constant 0 : index
    %c0_22 = arith.constant 0 : index
    %21 = vector.load %arg4[%c0_20, %c0_21, %c0_22] : memref<1x8x324xbf16, #tpu.memory_space<vmem>>, vector<1x8x324xbf16>
    %22 = vector.shape_cast %21 : vector<1x8x324xbf16> to vector<8x324xbf16>
    %cst_23 = arith.constant dense<0.000000e+00> : vector<8x324xf32>
    %23 = tpu.matmul %20, %22, %cst_23 {dimension_numbers = #tpu.dot_dimension_numbers<[1], [0], [0], [1], [0, 0, 1, 1], [], []>} : vector<8x8xbf16>, vector<8x324xbf16>, vector<8x324xf32> -> vector<8x324xf32>
    %24 = arith.addf %18, %23 : vector<8x324xf32>
    %c0_24 = arith.constant 0 : index
    %c0_25 = arith.constant 0 : index
    %25 = vector.load %arg6[%c0_24, %c0_25] : memref<8x1xf32, #tpu.memory_space<vmem>>, vector<8x1xf32>
    %26 = vector.broadcast %25 : vector<8x1xf32> to vector<8x324xf32>
    %27 = arith.addf %24, %26 : vector<8x324xf32>
    %cst_26 = arith.constant 0.000000e+00 : f32
    %28 = vector.broadcast %cst_26 : f32 to vector<8x324xf32>
    %29 = arith.cmpf ogt, %27, %28 : vector<8x324xf32>
    %cst_27 = arith.constant 2.000000e-01 : f32
    %30 = vector.broadcast %cst_27 : f32 to vector<8x324xf32>
    %31 = arith.mulf %30, %27 : vector<8x324xf32>
    %32 = arith.select %29, %27, %31 : vector<8x324xi1>, vector<8x324xf32>
    %c0_28 = arith.constant 0 : index
    %c0_29 = arith.constant 0 : index
    %33 = vector.load %arg7[%c0_28, %c0_29] : memref<1x324xf32, #tpu.memory_space<vmem>>, vector<1x324xf32>
    %34 = vector.broadcast %33 : vector<1x324xf32> to vector<8x324xf32>
    %35 = arith.mulf %32, %34 : vector<8x324xf32>
    %36 = arith.truncf %35 : vector<8x324xf32> to vector<8x324xbf16>
    %c0_30 = arith.constant 0 : index
    %c0_31 = arith.constant 0 : index
    %c0_32 = arith.constant 0 : index
    %37 = vector.load %arg8[%c0_30, %c0_31, %c0_32] : memref<1x8x324xbf16, #tpu.memory_space<vmem>>, vector<1x8x324xbf16>
    %38 = vector.shape_cast %37 : vector<1x8x324xbf16> to vector<8x324xbf16>
    %39 = vector.shape_cast %36 : vector<8x324xbf16> to vector<1x8x324xbf16>
    tpu.vector_store %arg8[%c0_30, %c0_31, %c0_32], %39 {strides = array<i32>} : memref<1x8x324xbf16, #tpu.memory_space<vmem>>, vector<1x8x324xbf16>,
    return
  }
  func.func @transform_0(%arg0: i32) -> (i32, i32, i32) {
    %c0_i32 = arith.constant 0 : i32
    %c0_i32_0 = arith.constant 0 : i32
    %c0_i32_1 = arith.constant 0 : i32
    return %arg0, %c0_i32, %c0_i32_0 : i32, i32, i32
  }
  func.func @transform_1(%arg0: i32) -> (i32, i32, i32) {
    %c0_i32 = arith.constant 0 : i32
    %c0_i32_0 = arith.constant 0 : i32
    %c0_i32_1 = arith.constant 0 : i32
    return %arg0, %c0_i32, %c0_i32_0 : i32, i32, i32
  }
  func.func @transform_2(%arg0: i32) -> (i32, i32, i32) {
    %c0_i32 = arith.constant 0 : i32
    %c0_i32_0 = arith.constant 0 : i32
    %c0_i32_1 = arith.constant 0 : i32
    return %arg0, %c0_i32, %c0_i32_0 : i32, i32, i32
  }
  func.func @transform_3(%arg0: i32) -> (i32, i32, i32) {
    %c0_i32 = arith.constant 0 : i32
    %c0_i32_0 = arith.constant 0 : i32
    %c0_i32_1 = arith.constant 0 : i32
    return %arg0, %c0_i32, %c0_i32_0 : i32, i32, i32
  }
  func.func @transform_4(%arg0: i32) -> (i32, i32, i32) {
    %c0_i32 = arith.constant 0 : i32
    %c0_i32_0 = arith.constant 0 : i32
    %c0_i32_1 = arith.constant 0 : i32
    %c0_i32_2 = arith.constant 0 : i32
    return %c0_i32, %c0_i32_0, %c0_i32_1 : i32, i32, i32
  }
  func.func @transform_5(%arg0: i32) -> (i32, i32) {
    %c0_i32 = arith.constant 0 : i32
    %c0_i32_0 = arith.constant 0 : i32
    %c0_i32_1 = arith.constant 0 : i32
    return %c0_i32, %c0_i32_0 : i32, i32
  }
  func.func @transform_6(%arg0: i32) -> (i32, i32) {
    %c0_i32 = arith.constant 0 : i32
    %c0_i32_0 = arith.constant 0 : i32
    %c0_i32_1 = arith.constant 0 : i32
    return %c0_i32, %c0_i32_0 : i32, i32
  }
  func.func @transform_7(%arg0: i32) -> (i32, i32, i32) {
    %c0_i32 = arith.constant 0 : i32
    %c0_i32_0 = arith.constant 0 : i32
    %c0_i32_1 = arith.constant 0 : i32
    return %arg0, %c0_i32, %c0_i32_0 : i32, i32, i32
  }
}

module attributes {stable_mosaic.version = 11 : i64} {
  func.func @kernel(%arg0: i32, %arg1: memref<1x8x324xbf16, #tpu.memory_space<vmem>>, %arg2: memref<1x8x324xbf16, #tpu.memory_space<vmem>>, %arg3: memref<1x8x324xbf16, #tpu.memory_space<vmem>>, %arg4: memref<1x8x324xbf16, #tpu.memory_space<vmem>>, %arg5: memref<1x8x324xbf16, #tpu.memory_space<vmem>>, %arg6: memref<5x8x8xbf16, #tpu.memory_space<vmem>>, %arg7: memref<8x1xf32, #tpu.memory_space<vmem>>, %arg8: memref<1x324xf32, #tpu.memory_space<vmem>>, %arg9: memref<1x8x324xbf16, #tpu.memory_space<vmem>>) attributes {dimension_semantics = [#tpu.dimension_semantics<parallel>], iteration_bounds = array<i64: 2>, scalar_prefetch = 0 : i64, scratch_operands = 0 : i64, tpu.core_type = #tpu.core_type<tc>, window_params = [{transform_indices = @transform_0, window_bounds = array<i64: 1, 8, 324>}, {transform_indices = @transform_1, window_bounds = array<i64: 1, 8, 324>}, {transform_indices = @transform_2, window_bounds = array<i64: 1, 8, 324>}, {transform_indices = @transform_3, window_bounds = array<i64: 1, 8, 324>}, {transform_indices = @transform_4, window_bounds = array<i64: 1, 8, 324>}, {pipeline_mode = #tpu.pipeline_mode<synchronous>, transform_indices = @transform_5, window_bounds = array<i64: 5, 8, 8>}, {pipeline_mode = #tpu.pipeline_mode<synchronous>, transform_indices = @transform_6, window_bounds = array<i64: 8, 1>}, {pipeline_mode = #tpu.pipeline_mode<synchronous>, transform_indices = @transform_7, window_bounds = array<i64: 1, 324>}, {transform_indices = @transform_8, window_bounds = array<i64: 1, 8, 324>}]} {
    %cst = arith.constant 0.000000e+00 : f32
    %0 = vector.broadcast %cst : f32 to vector<8x324xf32>
    %c0 = arith.constant 0 : index
    %c0_0 = arith.constant 0 : index
    %c0_1 = arith.constant 0 : index
    %1 = vector.load %arg6[%c0, %c0_0, %c0_1] : memref<5x8x8xbf16, #tpu.memory_space<vmem>>, vector<1x8x8xbf16>
    %2 = vector.shape_cast %1 : vector<1x8x8xbf16> to vector<8x8xbf16>
    %c0_2 = arith.constant 0 : index
    %c0_3 = arith.constant 0 : index
    %c0_4 = arith.constant 0 : index
    %3 = vector.load %arg1[%c0_2, %c0_3, %c0_4] : memref<1x8x324xbf16, #tpu.memory_space<vmem>>, vector<1x8x324xbf16>
    %4 = vector.shape_cast %3 : vector<1x8x324xbf16> to vector<8x324xbf16>
    %cst_5 = arith.constant dense<0.000000e+00> : vector<8x324xf32>
    %5 = tpu.matmul %2, %4, %cst_5 {dimension_numbers = #tpu.dot_dimension_numbers<[1], [0], [0], [1], [0, 0, 1, 1], [], []>} : vector<8x8xbf16>, vector<8x324xbf16>, vector<8x324xf32> -> vector<8x324xf32>
    %6 = arith.addf %0, %5 : vector<8x324xf32>
    %c1 = arith.constant 1 : index
    %c0_6 = arith.constant 0 : index
    %c0_7 = arith.constant 0 : index
    %7 = vector.load %arg6[%c1, %c0_6, %c0_7] : memref<5x8x8xbf16, #tpu.memory_space<vmem>>, vector<1x8x8xbf16>
    %8 = vector.shape_cast %7 : vector<1x8x8xbf16> to vector<8x8xbf16>
    %c0_8 = arith.constant 0 : index
    %c0_9 = arith.constant 0 : index
    %c0_10 = arith.constant 0 : index
    %9 = vector.load %arg2[%c0_8, %c0_9, %c0_10] : memref<1x8x324xbf16, #tpu.memory_space<vmem>>, vector<1x8x324xbf16>
    %10 = vector.shape_cast %9 : vector<1x8x324xbf16> to vector<8x324xbf16>
    %cst_11 = arith.constant dense<0.000000e+00> : vector<8x324xf32>
    %11 = tpu.matmul %8, %10, %cst_11 {dimension_numbers = #tpu.dot_dimension_numbers<[1], [0], [0], [1], [0, 0, 1, 1], [], []>} : vector<8x8xbf16>, vector<8x324xbf16>, vector<8x324xf32> -> vector<8x324xf32>
    %12 = arith.addf %6, %11 : vector<8x324xf32>
    %c2 = arith.constant 2 : index
    %c0_12 = arith.constant 0 : index
    %c0_13 = arith.constant 0 : index
    %13 = vector.load %arg6[%c2, %c0_12, %c0_13] : memref<5x8x8xbf16, #tpu.memory_space<vmem>>, vector<1x8x8xbf16>
    %14 = vector.shape_cast %13 : vector<1x8x8xbf16> to vector<8x8xbf16>
    %c0_14 = arith.constant 0 : index
    %c0_15 = arith.constant 0 : index
    %c0_16 = arith.constant 0 : index
    %15 = vector.load %arg3[%c0_14, %c0_15, %c0_16] : memref<1x8x324xbf16, #tpu.memory_space<vmem>>, vector<1x8x324xbf16>
    %16 = vector.shape_cast %15 : vector<1x8x324xbf16> to vector<8x324xbf16>
    %cst_17 = arith.constant dense<0.000000e+00> : vector<8x324xf32>
    %17 = tpu.matmul %14, %16, %cst_17 {dimension_numbers = #tpu.dot_dimension_numbers<[1], [0], [0], [1], [0, 0, 1, 1], [], []>} : vector<8x8xbf16>, vector<8x324xbf16>, vector<8x324xf32> -> vector<8x324xf32>
    %18 = arith.addf %12, %17 : vector<8x324xf32>
    %c3 = arith.constant 3 : index
    %c0_18 = arith.constant 0 : index
    %c0_19 = arith.constant 0 : index
    %19 = vector.load %arg6[%c3, %c0_18, %c0_19] : memref<5x8x8xbf16, #tpu.memory_space<vmem>>, vector<1x8x8xbf16>
    %20 = vector.shape_cast %19 : vector<1x8x8xbf16> to vector<8x8xbf16>
    %c0_20 = arith.constant 0 : index
    %c0_21 = arith.constant 0 : index
    %c0_22 = arith.constant 0 : index
    %21 = vector.load %arg4[%c0_20, %c0_21, %c0_22] : memref<1x8x324xbf16, #tpu.memory_space<vmem>>, vector<1x8x324xbf16>
    %22 = vector.shape_cast %21 : vector<1x8x324xbf16> to vector<8x324xbf16>
    %cst_23 = arith.constant dense<0.000000e+00> : vector<8x324xf32>
    %23 = tpu.matmul %20, %22, %cst_23 {dimension_numbers = #tpu.dot_dimension_numbers<[1], [0], [0], [1], [0, 0, 1, 1], [], []>} : vector<8x8xbf16>, vector<8x324xbf16>, vector<8x324xf32> -> vector<8x324xf32>
    %24 = arith.addf %18, %23 : vector<8x324xf32>
    %c4 = arith.constant 4 : index
    %c0_24 = arith.constant 0 : index
    %c0_25 = arith.constant 0 : index
    %25 = vector.load %arg6[%c4, %c0_24, %c0_25] : memref<5x8x8xbf16, #tpu.memory_space<vmem>>, vector<1x8x8xbf16>
    %26 = vector.shape_cast %25 : vector<1x8x8xbf16> to vector<8x8xbf16>
    %c0_26 = arith.constant 0 : index
    %c0_27 = arith.constant 0 : index
    %c0_28 = arith.constant 0 : index
    %27 = vector.load %arg5[%c0_26, %c0_27, %c0_28] : memref<1x8x324xbf16, #tpu.memory_space<vmem>>, vector<1x8x324xbf16>
    %28 = vector.shape_cast %27 : vector<1x8x324xbf16> to vector<8x324xbf16>
    %cst_29 = arith.constant dense<0.000000e+00> : vector<8x324xf32>
    %29 = tpu.matmul %26, %28, %cst_29 {dimension_numbers = #tpu.dot_dimension_numbers<[1], [0], [0], [1], [0, 0, 1, 1], [], []>} : vector<8x8xbf16>, vector<8x324xbf16>, vector<8x324xf32> -> vector<8x324xf32>
    %30 = arith.addf %24, %29 : vector<8x324xf32>
    %c0_30 = arith.constant 0 : index
    %c0_31 = arith.constant 0 : index
    %31 = vector.load %arg7[%c0_30, %c0_31] : memref<8x1xf32, #tpu.memory_space<vmem>>, vector<8x1xf32>
    %32 = vector.broadcast %31 : vector<8x1xf32> to vector<8x324xf32>
    %33 = arith.addf %30, %32 : vector<8x324xf32>
    %cst_32 = arith.constant 0.000000e+00 : f32
    %34 = vector.broadcast %cst_32 : f32 to vector<8x324xf32>
    %35 = arith.cmpf ogt, %33, %34 : vector<8x324xf32>
    %cst_33 = arith.constant 2.000000e-01 : f32
    %36 = vector.broadcast %cst_33 : f32 to vector<8x324xf32>
    %37 = arith.mulf %36, %33 : vector<8x324xf32>
    %38 = arith.select %35, %33, %37 : vector<8x324xi1>, vector<8x324xf32>
    %c0_34 = arith.constant 0 : index
    %c0_35 = arith.constant 0 : index
    %39 = vector.load %arg8[%c0_34, %c0_35] : memref<1x324xf32, #tpu.memory_space<vmem>>, vector<1x324xf32>
    %40 = vector.broadcast %39 : vector<1x324xf32> to vector<8x324xf32>
    %41 = arith.mulf %38, %40 : vector<8x324xf32>
    %42 = arith.truncf %41 : vector<8x324xf32> to vector<8x324xbf16>
    %c0_36 = arith.constant 0 : index
    %c0_37 = arith.constant 0 : index
    %c0_38 = arith.constant 0 : index
    %43 = vector.load %arg9[%c0_36, %c0_37, %c0_38] : memref<1x8x324xbf16, #tpu.memory_space<vmem>>, vector<1x8x324xbf16>
    %44 = vector.shape_cast %43 : vector<1x8x324xbf16> to vector<8x324xbf16>
    %45 = vector.shape_cast %42 : vector<8x324xbf16> to vector<1x8x324xbf16>
    tpu.vector_store %arg9[%c0_36, %c0_37, %c0_38], %45 {strides = array<i32>} : memref<1x8x324xbf16, #tpu.memory_space<vmem>>, vector<1x8x324xbf16>,
    return
  }
  func.func @transform_0(%arg0: i32) -> (i32, i32, i32) {
    %c0_i32 = arith.constant 0 : i32
    %c0_i32_0 = arith.constant 0 : i32
    %c0_i32_1 = arith.constant 0 : i32
    return %arg0, %c0_i32, %c0_i32_0 : i32, i32, i32
  }
  func.func @transform_1(%arg0: i32) -> (i32, i32, i32) {
    %c0_i32 = arith.constant 0 : i32
    %c0_i32_0 = arith.constant 0 : i32
    %c0_i32_1 = arith.constant 0 : i32
    return %arg0, %c0_i32, %c0_i32_0 : i32, i32, i32
  }
  func.func @transform_2(%arg0: i32) -> (i32, i32, i32) {
    %c0_i32 = arith.constant 0 : i32
    %c0_i32_0 = arith.constant 0 : i32
    %c0_i32_1 = arith.constant 0 : i32
    return %arg0, %c0_i32, %c0_i32_0 : i32, i32, i32
  }
  func.func @transform_3(%arg0: i32) -> (i32, i32, i32) {
    %c0_i32 = arith.constant 0 : i32
    %c0_i32_0 = arith.constant 0 : i32
    %c0_i32_1 = arith.constant 0 : i32
    return %arg0, %c0_i32, %c0_i32_0 : i32, i32, i32
  }
  func.func @transform_4(%arg0: i32) -> (i32, i32, i32) {
    %c0_i32 = arith.constant 0 : i32
    %c0_i32_0 = arith.constant 0 : i32
    %c0_i32_1 = arith.constant 0 : i32
    return %arg0, %c0_i32, %c0_i32_0 : i32, i32, i32
  }
  func.func @transform_5(%arg0: i32) -> (i32, i32, i32) {
    %c0_i32 = arith.constant 0 : i32
    %c0_i32_0 = arith.constant 0 : i32
    %c0_i32_1 = arith.constant 0 : i32
    %c0_i32_2 = arith.constant 0 : i32
    return %c0_i32, %c0_i32_0, %c0_i32_1 : i32, i32, i32
  }
  func.func @transform_6(%arg0: i32) -> (i32, i32) {
    %c0_i32 = arith.constant 0 : i32
    %c0_i32_0 = arith.constant 0 : i32
    %c0_i32_1 = arith.constant 0 : i32
    return %c0_i32, %c0_i32_0 : i32, i32
  }
  func.func @transform_7(%arg0: i32) -> (i32, i32) {
    %c0_i32 = arith.constant 0 : i32
    %c0_i32_0 = arith.constant 0 : i32
    %c0_i32_1 = arith.constant 0 : i32
    return %c0_i32, %c0_i32_0 : i32, i32
  }
  func.func @transform_8(%arg0: i32) -> (i32, i32, i32) {
    %c0_i32 = arith.constant 0 : i32
    %c0_i32_0 = arith.constant 0 : i32
    %c0_i32_1 = arith.constant 0 : i32
    return %arg0, %c0_i32, %c0_i32_0 : i32, i32, i32
  }
}

</mosaic_0001>

<llo_original>
// kernel: _lambda_.9
$region0: #{_lambda_.9}
  #allocation0 [shape = 'u32[]', space=smem, size = 0x4, offset = 0x4, fixed_abs, tag = 'smem constant byte address 0x4 - core index']
  #allocation1 [shape = 'u32[144,128]{1,0:T(1,128)}', space=vmem, size = 0x12000, scoped, tag = 'internal scratch']
  %s0 = inlined_call_operand.vmem [shape: bf16[2,8,324], index: 0, kind: input, shape index: {}]
  %s1 = inlined_call_operand.vmem [shape: bf16[2,8,324], index: 1, kind: input, shape index: {}]
  %s2 = inlined_call_operand.vmem [shape: bf16[2,8,8], index: 2, kind: input, shape index: {}]
  %s3 = inlined_call_operand.vmem [shape: f32[8,1], index: 3, kind: input, shape index: {}]
  %s4 = inlined_call_operand.vmem [shape: f32[1,324], index: 4, kind: input, shape index: {}]
  %s5 = inlined_call_operand.vmem [shape: bf16[2,8,324], index: 5, kind: output, shape index: {}]
  %s6 = sld [smem:[#allocation0]]
  $region53: #{_lambda_.9} parent=0
    _
  %s8 = ssub.s32 1, %s6
  %s9 = scalar_select 0, %s8, %s6
  loop: start=0, step=1, limit=4
  $region2: #{_lambda_.9} parent=0 // loop_pre_header
    _
  $region3: #{_lambda_.9} parent=0 // loop_header
    %s11 = sphi 0, %s15
    %p12 = scmp.ge.s32.totalorder %s11, 4
    %s21 = sphi 0, %s23
    %s24 = sphi 0, %s21
    %s25 = sphi 0, %s24
    %s41 = sphi 0, %s25
    %s47 = sphi 0, %s49
    %s50 = sphi 0, %s47
    %s51 = sphi 0, %s50
    %s67 = sphi 0, %s51
    %s71 = sphi 0, %s71
    %s73 = sphi 0, %s71
    %s74 = sphi 0, %s73
    %s88 = sphi 0, %s74
    %s92 = sphi 0, %s92
    %s94 = sphi 0, %s92
    %s95 = sphi 0, %s94
    %s109 = sphi 0, %s95
    %s113 = sphi 0, %s113
    %s115 = sphi 0, %s113
    %s116 = sphi 0, %s115
    %s130 = sphi 0, %s116
    %s136 = sphi 0, %s138
    %s139 = sphi 0, %s136
    %s140 = sphi 0, %s139
    %s156 = sphi 0, %s140
  $region4: #{_lambda_.9} parent=0 // loop_header_branch
    %14 = sbr.rel (%p12) target = $region8
  $region5: #{_lambda_.9} parent=0 // loop_body
    %s16 = ssub.s32 %s11, 1
    %s17 = ssub.s32 %s11, 2
    %s18 = sadd.s32 %s11, 1
    %s19 = ssub.s32 %s11, %s18
    %p20 = scmp.eq.s32.totalorder %s19, 0
    %s22 = sadd.s32 %s21, 1
    %s23 = scalar_select %p20, %s21, %s22
    %p26 = pneg %p20
    %p27 = scmp.eq.s32.totalorder %s11, 1
    %p28 = por %p26, %p27
    %p29 = scmp.ne.s32.totalorder %s21, %s24
    %p30 = scmp.eq.s32.totalorder %s11, 0
    %p31 = por %p29, %p30
    %p32 = scmp.ne.s32.totalorder %s21, %s24
    %p33 = scmp.eq.s32.totalorder %s16, 1
    %p34 = por %p32, %p33
    %p35 = scmp.ne.s32.totalorder %s24, %s25
    %p36 = scmp.eq.s32.totalorder %s16, 0
    %p37 = por %p35, %p36
    %p38 = scmp.ne.s32.totalorder %s24, %s25
    %p39 = scmp.eq.s32.totalorder %s17, 1
    %p40 = por %p38, %p39
    %p42 = scmp.ne.s32.totalorder %s25, %s41
    %p43 = scmp.eq.s32.totalorder %s17, 0
    %p44 = por %p42, %p43
    %s45 = ssub.s32 %s11, %s18
    %p46 = scmp.eq.s32.totalorder %s45, 0
    %s48 = sadd.s32 %s47, 1
    %s49 = scalar_select %p46, %s47, %s48
    %p52 = pneg %p46
    %p53 = scmp.eq.s32.totalorder %s11, 1
    %p54 = por %p52, %p53
    %p55 = scmp.ne.s32.totalorder %s47, %s50
    %p56 = scmp.eq.s32.totalorder %s11, 0
    %p57 = por %p55, %p56
    %p58 = scmp.ne.s32.totalorder %s47, %s50
    %p59 = scmp.eq.s32.totalorder %s16, 1
    %p60 = por %p58, %p59
    %p61 = scmp.ne.s32.totalorder %s50, %s51
    %p62 = scmp.eq.s32.totalorder %s16, 0
    %p63 = por %p61, %p62
    %p64 = scmp.ne.s32.totalorder %s50, %s51
    %p65 = scmp.eq.s32.totalorder %s17, 1
    %p66 = por %p64, %p65
    %p68 = scmp.ne.s32.totalorder %s51, %s67
    %p69 = scmp.eq.s32.totalorder %s17, 0
    %p70 = por %p68, %p69
    %s72 = sadd.s32 %s71, 1
    %p75 = scmp.eq.s32.totalorder %s11, 1
    %p76 = scmp.ne.s32.totalorder %s71, %s73
    %p77 = scmp.eq.s32.totalorder %s11, 0
    %p78 = por %p76, %p77
    %p79 = scmp.ne.s32.totalorder %s71, %s73
    %p80 = scmp.eq.s32.totalorder %s16, 1
    %p81 = por %p79, %p80
    %p82 = scmp.ne.s32.totalorder %s73, %s74
    %p83 = scmp.eq.s32.totalorder %s16, 0
    %p84 = por %p82, %p83
    %p85 = scmp.ne.s32.totalorder %s73, %s74
    %p86 = scmp.eq.s32.totalorder %s17, 1
    %p87 = por %p85, %p86
    %p89 = scmp.ne.s32.totalorder %s74, %s88
    %p90 = scmp.eq.s32.totalorder %s17, 0
    %p91 = por %p89, %p90
    %s93 = sadd.s32 %s92, 1
    %p96 = scmp.eq.s32.totalorder %s11, 1
    %p97 = scmp.ne.s32.totalorder %s92, %s94
    %p98 = scmp.eq.s32.totalorder %s11, 0
    %p99 = por %p97, %p98
    %p100 = scmp.ne.s32.totalorder %s92, %s94
    %p101 = scmp.eq.s32.totalorder %s16, 1
    %p102 = por %p100, %p101
    %p103 = scmp.ne.s32.totalorder %s94, %s95
    %p104 = scmp.eq.s32.totalorder %s16, 0
    %p105 = por %p103, %p104
    %p106 = scmp.ne.s32.totalorder %s94, %s95
    %p107 = scmp.eq.s32.totalorder %s17, 1
    %p108 = por %p106, %p107
    %p110 = scmp.ne.s32.totalorder %s95, %s109
    %p111 = scmp.eq.s32.totalorder %s17, 0
    %p112 = por %p110, %p111
    %s114 = sadd.s32 %s113, 1
    %p117 = scmp.eq.s32.totalorder %s11, 1
    %p118 = scmp.ne.s32.totalorder %s113, %s115
    %p119 = scmp.eq.s32.totalorder %s11, 0
    %p120 = por %p118, %p119
    %p121 = scmp.ne.s32.totalorder %s113, %s115
    %p122 = scmp.eq.s32.totalorder %s16, 1
    %p123 = por %p121, %p122
    %p124 = scmp.ne.s32.totalorder %s115, %s116
    %p125 = scmp.eq.s32.totalorder %s16, 0
    %p126 = por %p124, %p125
    %p127 = scmp.ne.s32.totalorder %s115, %s116
    %p128 = scmp.eq.s32.totalorder %s17, 1
    %p129 = por %p127, %p128
    %p131 = scmp.ne.s32.totalorder %s116, %s130
    %p132 = scmp.eq.s32.totalorder %s17, 0
    %p133 = por %p131, %p132
    %s134 = ssub.s32 %s11, %s18
    %p135 = scmp.eq.s32.totalorder %s134, 0
    %s137 = sadd.s32 %s136, 1
    %s138 = scalar_select %p135, %s136, %s137
    %p141 = pneg %p135
    %p142 = scmp.eq.s32.totalorder %s11, 1
    %p143 = por %p141, %p142
    %p144 = scmp.ne.s32.totalorder %s136, %s139
    %p145 = scmp.eq.s32.totalorder %s11, 0
    %p146 = por %p144, %p145
    %p147 = scmp.ne.s32.totalorder %s136, %s139
    %p148 = scmp.eq.s32.totalorder %s16, 1
    %p149 = por %p147, %p148
    %p150 = scmp.ne.s32.totalorder %s139, %s140
    %p151 = scmp.eq.s32.totalorder %s16, 0
    %p152 = por %p150, %p151
    %p153 = scmp.ne.s32.totalorder %s139, %s140
    %p154 = scmp.eq.s32.totalorder %s17, 1
    %p155 = por %p153, %p154
    %p157 = scmp.ne.s32.totalorder %s140, %s156
    %p158 = scmp.eq.s32.totalorder %s17, 0
    %p159 = por %p157, %p158
    %p160 = scmp.le.s32.totalorder 1, %s11
    %p161 = scmp.lt.s32.totalorder %s11, 3
    %p162 = pnand %p160, %p161
    %p163 = pneg %p162
    // Predicated region
    $region9: #{_lambda_.9} parent=5 // pred_check
      _
    $region10: #{_lambda_.9} parent=5 // pred_check_branch
      %165 = sbr.rel (%p162) target = $region12
    $region11: #{_lambda_.9} parent=5 // pred_region
      %s166 = ssub.s32 %s11, 1
      // Predicated region
      $region13: #{_lambda_.9} parent=11 // pred_check
        %p167 = pneg %p84
      $region14: #{_lambda_.9} parent=11 // pred_check_branch
        %169 = sbr.rel (%p167) target = $region16
      $region15: #{_lambda_.9} parent=11 // pred_region
        _
      $region16: #{_lambda_.9} parent=11 // pred_fallthru
        _
      // Predicated region
      $region17: #{_lambda_.9} parent=11 // pred_check
        %p170 = pneg %p105
      $region18: #{_lambda_.9} parent=11 // pred_check_branch
        %172 = sbr.rel (%p170) target = $region20
      $region19: #{_lambda_.9} parent=11 // pred_region
        _
      $region20: #{_lambda_.9} parent=11 // pred_fallthru
        _
      // Predicated region
      $region21: #{_lambda_.9} parent=11 // pred_check
        %p173 = pneg %p126
      $region22: #{_lambda_.9} parent=11 // pred_check_branch
        %175 = sbr.rel (%p173) target = $region24
      $region23: #{_lambda_.9} parent=11 // pred_region
        _
      $region24: #{_lambda_.9} parent=11 // pred_fallthru
        _
    $region12: #{_lambda_.9} parent=5 // pred_fallthru
      _
    %p176 = scmp.lt.s32.totalorder %s11, 2
    // Predicated region
    $region25: #{_lambda_.9} parent=5 // pred_check
      %p177 = pneg %p176
    $region26: #{_lambda_.9} parent=5 // pred_check_branch
      %179 = sbr.rel (%p177) target = $region28
    $region27: #{_lambda_.9} parent=5 // pred_region
      // Predicated region
      $region29: #{_lambda_.9} parent=27 // pred_check
        %p180 = pneg %p31
      $region30: #{_lambda_.9} parent=27 // pred_check_branch
        %182 = sbr.rel (%p180) target = $region32
      $region31: #{_lambda_.9} parent=27 // pred_region
        %p183 = scmp.lt.s32.totalorder %s11, 1
        %s184 = scalar_select %p183, %s11, 1
        %s185 = smul.addr %s184, 3
        %s186 = smul.addr %s185, 4
        %s187 = scalar_lea.vmem %s0, %s186
      $region32: #{_lambda_.9} parent=27 // pred_fallthru
        _
      // Predicated region
      $region33: #{_lambda_.9} parent=27 // pred_check
        %p188 = pneg %p57
      $region34: #{_lambda_.9} parent=27 // pred_check_branch
        %190 = sbr.rel (%p188) target = $region36
      $region35: #{_lambda_.9} parent=27 // pred_region
        %p191 = scmp.lt.s32.totalorder %s11, 1
        %s192 = scalar_select %p191, %s11, 1
        %s193 = smul.addr %s192, 3
        %s194 = smul.addr %s193, 4
        %s195 = scalar_lea.vmem %s1, %s194
      $region36: #{_lambda_.9} parent=27 // pred_fallthru
        _
    $region28: #{_lambda_.9} parent=5 // pred_fallthru
      _
    %p196 = scmp.le.s32.totalorder 1, %s11
    %p197 = scmp.lt.s32.totalorder %s11, 3
    %p198 = pnand %p196, %p197
    %p199 = pneg %p198
    // Predicated region
    $region37: #{_lambda_.9} parent=5 // pred_check
      _
    $region38: #{_lambda_.9} parent=5 // pred_check_branch
      %201 = sbr.rel (%p198) target = $region40
    $region39: #{_lambda_.9} parent=5 // pred_region
      %s202 = ssub.s32 %s11, 1
      %p203 = scmp.lt.s32.totalorder %s16, 1
      %s204 = scalar_select %p203, %s16, 1
      %s205 = smul.addr %s204, 3
      %s206 = smul.addr %s205, 4
      %s207 = scalar_lea.vmem %s0, %s206
      %p208 = pneg %p37
      %p209 = pneg %p34
      %p210 = scmp.lt.s32.totalorder %s16, 1
      %s211 = scalar_select %p210, %s16, 1
      %s212 = smul.addr %s211, 3
      %s213 = smul.addr %s212, 4
      %s214 = scalar_lea.vmem %s1, %s213
      %p215 = pneg %p63
      %p216 = pneg %p60
      %p217 = pneg %p84
      %p218 = pneg %p81
      %p219 = pneg %p105
      %p220 = pneg %p102
      %p221 = pneg %p126
      %p222 = pneg %p123
      %p223 = pneg %p152
      %p224 = pneg %p149
      %p225 = scmp.lt.s32.totalorder %s16, 1
      %s226 = scalar_select %p225, %s16, 1
      %s227 = smul.addr %s226, 3
      %s228 = smul.addr %s227, 4
      %s229 = scalar_lea.vmem %s5, %s228
      %p230 = scmp.lt.s32.totalorder %s16, 1
      %s231 = scalar_select %p230, %s16, 1
      %s232 = smul.addr %s231, 3
      %s233 = smul.addr %s232, 4
      %s234 = scalar_lea.vmem %s0, %s233
      %p235 = scmp.lt.s32.totalorder %s16, 1
      %s236 = scalar_select %p235, %s16, 1
      %s237 = smul.addr %s236, 3
      %s238 = smul.addr %s237, 4
      %s239 = scalar_lea.vmem %s1, %s238
      %p240 = scmp.lt.s32.totalorder %s16, 1
      %s241 = scalar_select %p240, %s16, 1
      %s242 = smul.addr %s241, 3
      %s243 = smul.addr %s242, 4
      %s244 = scalar_lea.vmem %s5, %s243
      %v246 = vld [vmem:[%s2] sm:$0xf]
      %v247 = vld [vmem:[%s234] sm:$0xff]
      %v248 = vld [vmem:[%s234 + $0x8] sm:$0xf]
      %s249 = scalar_lea.vmem %s2, 4
      %v250 = vld [vmem:[%s249] sm:$0xf]
      %v251 = vld [vmem:[%s239] sm:$0xff]
      %v252 = vld [vmem:[%s239 + $0x8] sm:$0xf]
      %v255 = vunpack.c.l.b16 %v251
      %v256 = vunpack.c.h.b16 %v251
      %v257 = vunpack.c.l.b16 %v252
      %v258 = vpack.c.b16 %v255, %v255
      %v259 = vpack.c.b16 %v256, %v256
      %v260 = vpack.c.b16 %v257, %v257
      %vm261 = vcmask 64512
      %v263 = vsel %vm261, %v250, 0
      %vm265 = vcmask 1043456
      %v267 = vsel %vm265, %v258, 0
      %v270 = vsel %vm265, %v259, 0
      %v273 = vsel %vm265, %v260, 0
      %275 = vmatprep.subr.bf16.mxu0 %v270
      %276 = vmatpush1.bf16.msra.mxu0 %v267
      %277 = vmatprep.subr.bf16.mxu0 0
      %278 = vmatpush1.bf16.msra.mxu0 0
      %279 = vmatprep.subr.bf16.mxu0 0
      %280 = vmatpush1.bf16.msra.mxu0 0
      %281 = vmatprep.subr.bf16.mxu0 0
      %282 = vmatpush1.bf16.msra.mxu0 0
      %283 = vmatprep.subr.bf16.mxu0 0
      %284 = vmatpush1.bf16.msra.mxu0 0
      %285 = vmatprep.subr.bf16.mxu0 0
      %286 = vmatpush1.bf16.msra.mxu0 0
      %287 = vmatprep.subr.bf16.mxu0 0
      %288 = vmatpush1.bf16.msra.mxu0 0
      %289 = vmatprep.subr.bf16.mxu0 0
      %290 = vmatpush1.bf16.msra.mxu0 0
      %291 = vmatprep.subr.bf16.mxu0 0
      %292 = vmatpush1.bf16.msra.mxu0 0
      %293 = vmatprep.subr.bf16.mxu0 0
      %294 = vmatpush1.bf16.msra.mxu0 0
      %295 = vmatprep.subr.bf16.mxu0 0
      %296 = vmatpush1.bf16.msra.mxu0 0
      %297 = vmatprep.subr.bf16.mxu0 0
      %298 = vmatpush1.bf16.msra.mxu0 0
      %299 = vmatprep.subr.bf16.mxu0 0
      %300 = vmatpush1.bf16.msra.mxu0 0
      %301 = vmatprep.subr.bf16.mxu0 0
      %302 = vmatpush1.bf16.msra.mxu0 0
      %303 = vmatprep.subr.bf16.mxu0 0
      %304 = vmatpush1.bf16.msra.mxu0 0
      %305 = vmatprep.subr.bf16.mxu0 0
      %306 = vmatpush1.bf16.msra.mxu0 0
      %307 = vmatprep.mubr.bf16.mxu0 0
      %308 = vmatmul.mubr.bf16.gmra.mrb[0].mxu0 %v263
      %v309 = vpop.f32.mrb[0].mxu0
      %v310 = vadd.f32 0.0, %v309
      %v311 = vpop.f32.mrb[0].mxu0
      %v312 = vadd.f32 0.0, %v311
      %v313 = vpop.f32.mrb[0].mxu0
      %v314 = vpop.f32.mrb[0].mxu0
      %315 = vdwg.mxu0
      %316 = vmatprep.subr.bf16.mxu0 0
      %317 = vmatpush1.bf16.msra.mxu0 %v273
      %318 = vmatprep.subr.bf16.mxu0 0
      %319 = vmatpush1.bf16.msra.mxu0 0
      %320 = vmatprep.subr.bf16.mxu0 0
      %321 = vmatpush1.bf16.msra.mxu0 0
      %322 = vmatprep.subr.bf16.mxu0 0
      %323 = vmatpush1.bf16.msra.mxu0 0
      %324 = vmatprep.subr.bf16.mxu0 0
      %325 = vmatpush1.bf16.msra.mxu0 0
      %326 = vmatprep.subr.bf16.mxu0 0
      %327 = vmatpush1.bf16.msra.mxu0 0
      %328 = vmatprep.subr.bf16.mxu0 0
      %329 = vmatpush1.bf16.msra.mxu0 0
      %330 = vmatprep.subr.bf16.mxu0 0
      %331 = vmatpush1.bf16.msra.mxu0 0
      %332 = vmatprep.subr.bf16.mxu0 0
      %333 = vmatpush1.bf16.msra.mxu0 0
      %334 = vmatprep.subr.bf16.mxu0 0
      %335 = vmatpush1.bf16.msra.mxu0 0
      %336 = vmatprep.subr.bf16.mxu0 0
      %337 = vmatpush1.bf16.msra.mxu0 0
      %338 = vmatprep.subr.bf16.mxu0 0
      %339 = vmatpush1.bf16.msra.mxu0 0
      %340 = vmatprep.subr.bf16.mxu0 0
      %341 = vmatpush1.bf16.msra.mxu0 0
      %342 = vmatprep.subr.bf16.mxu0 0
      %343 = vmatpush1.bf16.msra.mxu0 0
      %344 = vmatprep.subr.bf16.mxu0 0
      %345 = vmatpush1.bf16.msra.mxu0 0
      %346 = vmatprep.subr.bf16.mxu0 0
      %347 = vmatpush1.bf16.msra.mxu0 0
      %348 = vmatprep.mubr.bf16.mxu0 0
      %349 = vmatmul.mubr.bf16.gmra.mrb[0].mxu0 %v263
      %v350 = vpop.f32.mrb[0].mxu0
      %v351 = vadd.f32 0.0, %v350
      %v352 = vpop.f32.mrb[0].mxu0
      %v353 = vpop.f32.mrb[0].mxu0
      %v354 = vpop.f32.mrb[0].mxu0
      %355 = vdwg.mxu0
      %v358 = vunpack.c.l.b16 %v247
      %v359 = vunpack.c.h.b16 %v247
      %v360 = vunpack.c.l.b16 %v248
      %v361 = vpack.c.b16 %v358, %v358
      %v362 = vpack.c.b16 %v359, %v359
      %v363 = vpack.c.b16 %v360, %v360
      %v365 = vsel %vm261, %v246, 0
      %v368 = vsel %vm265, %v361, 0
      %v371 = vsel %vm265, %v362, 0
      %v374 = vsel %vm265, %v363, 0
      %376 = vmatprep.subr.bf16.mxu0 %v371
      %377 = vmatpush1.bf16.msra.mxu0 %v368
      %378 = vmatprep.subr.bf16.mxu0 0
      %379 = vmatpush1.bf16.msra.mxu0 0
      %380 = vmatprep.subr.bf16.mxu0 0
      %381 = vmatpush1.bf16.msra.mxu0 0
      %382 = vmatprep.subr.bf16.mxu0 0
      %383 = vmatpush1.bf16.msra.mxu0 0
      %384 = vmatprep.subr.bf16.mxu0 0
      %385 = vmatpush1.bf16.msra.mxu0 0
      %386 = vmatprep.subr.bf16.mxu0 0
      %387 = vmatpush1.bf16.msra.mxu0 0
      %388 = vmatprep.subr.bf16.mxu0 0
      %389 = vmatpush1.bf16.msra.mxu0 0
      %390 = vmatprep.subr.bf16.mxu0 0
      %391 = vmatpush1.bf16.msra.mxu0 0
      %392 = vmatprep.subr.bf16.mxu0 0
      %393 = vmatpush1.bf16.msra.mxu0 0
      %394 = vmatprep.subr.bf16.mxu0 0
      %395 = vmatpush1.bf16.msra.mxu0 0
      %396 = vmatprep.subr.bf16.mxu0 0
      %397 = vmatpush1.bf16.msra.mxu0 0
      %398 = vmatprep.subr.bf16.mxu0 0
      %399 = vmatpush1.bf16.msra.mxu0 0
      %400 = vmatprep.subr.bf16.mxu0 0
      %401 = vmatpush1.bf16.msra.mxu0 0
      %402 = vmatprep.subr.bf16.mxu0 0
      %403 = vmatpush1.bf16.msra.mxu0 0
      %404 = vmatprep.subr.bf16.mxu0 0
      %405 = vmatpush1.bf16.msra.mxu0 0
      %406 = vmatprep.subr.bf16.mxu0 0
      %407 = vmatpush1.bf16.msra.mxu0 0
      %408 = vmatprep.mubr.bf16.mxu0 0
      %409 = vmatmul.mubr.bf16.gmra.mrb[0].mxu0 %v365
      %v410 = vpop.f32.mrb[0].mxu0
      %v411 = vadd.f32 %v310, %v410
      %v412 = vpop.f32.mrb[0].mxu0
      %v413 = vadd.f32 %v312, %v412
      %v414 = vpop.f32.mrb[0].mxu0
      %v415 = vpop.f32.mrb[0].mxu0
      %416 = vdwg.mxu0
      %417 = vmatprep.subr.bf16.mxu0 0
      %418 = vmatpush1.bf16.msra.mxu0 %v374
      %419 = vmatprep.subr.bf16.mxu0 0
      %420 = vmatpush1.bf16.msra.mxu0 0
      %421 = vmatprep.subr.bf16.mxu0 0
      %422 = vmatpush1.bf16.msra.mxu0 0
      %423 = vmatprep.subr.bf16.mxu0 0
      %424 = vmatpush1.bf16.msra.mxu0 0
      %425 = vmatprep.subr.bf16.mxu0 0
      %426 = vmatpush1.bf16.msra.mxu0 0
      %427 = vmatprep.subr.bf16.mxu0 0
      %428 = vmatpush1.bf16.msra.mxu0 0
      %429 = vmatprep.subr.bf16.mxu0 0
      %430 = vmatpush1.bf16.msra.mxu0 0
      %431 = vmatprep.subr.bf16.mxu0 0
      %432 = vmatpush1.bf16.msra.mxu0 0
      %433 = vmatprep.subr.bf16.mxu0 0
      %434 = vmatpush1.bf16.msra.mxu0 0
      %435 = vmatprep.subr.bf16.mxu0 0
      %436 = vmatpush1.bf16.msra.mxu0 0
      %437 = vmatprep.subr.bf16.mxu0 0
      %438 = vmatpush1.bf16.msra.mxu0 0
      %439 = vmatprep.subr.bf16.mxu0 0
      %440 = vmatpush1.bf16.msra.mxu0 0
      %441 = vmatprep.subr.bf16.mxu0 0
      %442 = vmatpush1.bf16.msra.mxu0 0
      %443 = vmatprep.subr.bf16.mxu0 0
      %444 = vmatpush1.bf16.msra.mxu0 0
      %445 = vmatprep.subr.bf16.mxu0 0
      %446 = vmatpush1.bf16.msra.mxu0 0
      %447 = vmatprep.subr.bf16.mxu0 0
      %448 = vmatpush1.bf16.msra.mxu0 0
      %449 = vmatprep.mubr.bf16.mxu0 0
      %450 = vmatmul.mubr.bf16.gmra.mrb[0].mxu0 %v365
      %v451 = vpop.f32.mrb[0].mxu0
      %v452 = vadd.f32 %v351, %v451
      %v453 = vpop.f32.mrb[0].mxu0
      %v454 = vpop.f32.mrb[0].mxu0
      %v455 = vpop.f32.mrb[0].mxu0
      %456 = vdwg.mxu0
      %v457 = vld [vmem:[%s3] sm:$0xff]
      %459 = vset.pattern.permute.xlu0 0
      %460 = vperm.xlu0 %459, %v457
      %v461 = vpop.permute.xlu0 %460
      %v463 = vadd.f32 %v411, %v461
      %v464 = vadd.f32 %v413, %v461
      %v465 = vadd.f32 %v452, %v461
      %vm466 = vcmp.gt.f32.partialorder %v463, 0.0
      %vm467 = vcmp.gt.f32.partialorder %v464, 0.0
      %vm468 = vcmp.gt.f32.partialorder %v465, 0.0
      %v469 = vmul.f32 %v463, 0.2
      %v470 = vmul.f32 %v464, 0.2
      %v471 = vmul.f32 %v465, 0.2
      %v472 = vsel %vm466, %v463, %v469
      %v473 = vsel %vm467, %v464, %v470
      %v474 = vsel %vm468, %v465, %v471
      %v475 = vld [vmem:[%s4] sm:$0x7]
      %v477 = vlaneseq
      %v478 = vshrl.u32 %v477, 7
      %v479 = vsub.s32 0, %v478
      %v480 = vrot.slane %v475, %v479
      %v481 = vlaneseq
      %v482 = vshrl.u32 %v481, 7
      %v483 = vsub.s32 1, %v482
      %v484 = vrot.slane %v475, %v483
      %v485 = vlaneseq
      %v486 = vshrl.u32 %v485, 7
      %v487 = vsub.s32 2, %v486
      %v488 = vrot.slane %v475, %v487
      %v492 = vmul.f32 %v472, %v480
      %v493 = vmul.f32 %v473, %v484
      %v494 = vmul.f32 %v474, %v488
      %v495 = vpack.c.bf16 %v492, %v492
      %v496 = vpack.c.bf16 %v493, %v493
      %v497 = vpack.c.bf16 %v494, %v494
      %v501 = vunpack.c.l.b16 %v495
      %v502 = vunpack.c.l.b16 %v496
      %v503 = vunpack.c.l.b16 %v497
      %v504 = vpack.c.b16 %v502, %v501
      %v505 = vpack.c.b16 %v503, %v503
      %508 = vst [vmem:[%s244] sm:$0xff] %v504
      %vm509 = vcmask 551936
      %510 = vst.msk [vmem:[%s244 + $0x8] sm:$0xf] %vm509, %v505
      %p511 = scmp.lt.s32.totalorder %s16, 1
      %s512 = scalar_select %p511, %s16, 1
      %s513 = smul.addr %s512, 3
      %s514 = smul.addr %s513, 4
      %s515 = scalar_lea.vmem %s5, %s514
      // Predicated region
      $region41: #{_lambda_.9} parent=39 // pred_check
        %p516 = pneg %p149
      $region42: #{_lambda_.9} parent=39 // pred_check_branch
        %518 = sbr.rel (%p516) target = $region44
      $region43: #{_lambda_.9} parent=39 // pred_region
        _
      $region44: #{_lambda_.9} parent=39 // pred_fallthru
        _
    $region40: #{_lambda_.9} parent=5 // pred_fallthru
      _
    %p519 = scmp.le.s32.totalorder 2, %s11
    // Predicated region
    $region45: #{_lambda_.9} parent=5 // pred_check
      %p520 = pneg %p519
    $region46: #{_lambda_.9} parent=5 // pred_check_branch
      %522 = sbr.rel (%p520) target = $region48
    $region47: #{_lambda_.9} parent=5 // pred_region
      %s523 = ssub.s32 %s11, 2
      // Predicated region
      $region49: #{_lambda_.9} parent=47 // pred_check
        %p524 = pneg %p155
      $region50: #{_lambda_.9} parent=47 // pred_check_branch
        %526 = sbr.rel (%p524) target = $region52
      $region51: #{_lambda_.9} parent=47 // pred_region
        %p527 = scmp.lt.s32.totalorder %s17, 1
        %s528 = scalar_select %p527, %s17, 1
        %s529 = smul.addr %s528, 3
        %s530 = smul.addr %s529, 4
        %s531 = scalar_lea.vmem %s5, %s530
      $region52: #{_lambda_.9} parent=47 // pred_fallthru
        _
    $region48: #{_lambda_.9} parent=5 // pred_fallthru
      _
  $region6: #{_lambda_.9} parent=0 // loop_footer
    %s15 = sadd.s32 1, %s11
  $region7: #{_lambda_.9} parent=0 // loop_footer_branch
    %10 = sbr.rel target = $region3
  $region8: #{_lambda_.9} parent=0 // loop_exit
    _

// kernel: _lambda_.11
$region0: #{_lambda_.11}
  #allocation0 [shape = 'u32[]', space=smem, size = 0x4, offset = 0x4, fixed_abs, tag = 'smem constant byte address 0x4 - core index']
  #allocation1 [shape = 'u32[144,128]{1,0:T(1,128)}', space=vmem, size = 0x12000, scoped, tag = 'internal scratch']
  %s0 = inlined_call_operand.vmem [shape: bf16[2,8,324], index: 0, kind: input, shape index: {}]
  %s1 = inlined_call_operand.vmem [shape: bf16[2,8,324], index: 1, kind: input, shape index: {}]
  %s2 = inlined_call_operand.vmem [shape: bf16[2,8,324], index: 2, kind: input, shape index: {}]
  %s3 = inlined_call_operand.vmem [shape: bf16[3,8,8], index: 3, kind: input, shape index: {}]
  %s4 = inlined_call_operand.vmem [shape: f32[8,1], index: 4, kind: input, shape index: {}]
  %s5 = inlined_call_operand.vmem [shape: f32[1,324], index: 5, kind: input, shape index: {}]
  %s6 = inlined_call_operand.vmem [shape: bf16[2,8,324], index: 6, kind: output, shape index: {}]
  %s7 = sld [smem:[#allocation0]]
  $region57: #{_lambda_.11} parent=0
    _
  %s9 = ssub.s32 1, %s7
  %s10 = scalar_select 0, %s9, %s7
  loop: start=0, step=1, limit=4
  $region2: #{_lambda_.11} parent=0 // loop_pre_header
    _
  $region3: #{_lambda_.11} parent=0 // loop_header
    %s12 = sphi 0, %s16
    %p13 = scmp.ge.s32.totalorder %s12, 4
    %s22 = sphi 0, %s24
    %s25 = sphi 0, %s22
    %s26 = sphi 0, %s25
    %s42 = sphi 0, %s26
    %s48 = sphi 0, %s50
    %s51 = sphi 0, %s48
    %s52 = sphi 0, %s51
    %s68 = sphi 0, %s52
    %s74 = sphi 0, %s76
    %s77 = sphi 0, %s74
    %s78 = sphi 0, %s77
    %s94 = sphi 0, %s78
    %s98 = sphi 0, %s98
    %s100 = sphi 0, %s98
    %s101 = sphi 0, %s100
    %s115 = sphi 0, %s101
    %s119 = sphi 0, %s119
    %s121 = sphi 0, %s119
    %s122 = sphi 0, %s121
    %s136 = sphi 0, %s122
    %s140 = sphi 0, %s140
    %s142 = sphi 0, %s140
    %s143 = sphi 0, %s142
    %s157 = sphi 0, %s143
    %s163 = sphi 0, %s165
    %s166 = sphi 0, %s163
    %s167 = sphi 0, %s166
    %s183 = sphi 0, %s167
  $region4: #{_lambda_.11} parent=0 // loop_header_branch
    %15 = sbr.rel (%p13) target = $region8
  $region5: #{_lambda_.11} parent=0 // loop_body
    %s17 = ssub.s32 %s12, 1
    %s18 = ssub.s32 %s12, 2
    %s19 = sadd.s32 %s12, 1
    %s20 = ssub.s32 %s12, %s19
    %p21 = scmp.eq.s32.totalorder %s20, 0
    %s23 = sadd.s32 %s22, 1
    %s24 = scalar_select %p21, %s22, %s23
    %p27 = pneg %p21
    %p28 = scmp.eq.s32.totalorder %s12, 1
    %p29 = por %p27, %p28
    %p30 = scmp.ne.s32.totalorder %s22, %s25
    %p31 = scmp.eq.s32.totalorder %s12, 0
    %p32 = por %p30, %p31
    %p33 = scmp.ne.s32.totalorder %s22, %s25
    %p34 = scmp.eq.s32.totalorder %s17, 1
    %p35 = por %p33, %p34
    %p36 = scmp.ne.s32.totalorder %s25, %s26
    %p37 = scmp.eq.s32.totalorder %s17, 0
    %p38 = por %p36, %p37
    %p39 = scmp.ne.s32.totalorder %s25, %s26
    %p40 = scmp.eq.s32.totalorder %s18, 1
    %p41 = por %p39, %p40
    %p43 = scmp.ne.s32.totalorder %s26, %s42
    %p44 = scmp.eq.s32.totalorder %s18, 0
    %p45 = por %p43, %p44
    %s46 = ssub.s32 %s12, %s19
    %p47 = scmp.eq.s32.totalorder %s46, 0
    %s49 = sadd.s32 %s48, 1
    %s50 = scalar_select %p47, %s48, %s49
    %p53 = pneg %p47
    %p54 = scmp.eq.s32.totalorder %s12, 1
    %p55 = por %p53, %p54
    %p56 = scmp.ne.s32.totalorder %s48, %s51
    %p57 = scmp.eq.s32.totalorder %s12, 0
    %p58 = por %p56, %p57
    %p59 = scmp.ne.s32.totalorder %s48, %s51
    %p60 = scmp.eq.s32.totalorder %s17, 1
    %p61 = por %p59, %p60
    %p62 = scmp.ne.s32.totalorder %s51, %s52
    %p63 = scmp.eq.s32.totalorder %s17, 0
    %p64 = por %p62, %p63
    %p65 = scmp.ne.s32.totalorder %s51, %s52
    %p66 = scmp.eq.s32.totalorder %s18, 1
    %p67 = por %p65, %p66
    %p69 = scmp.ne.s32.totalorder %s52, %s68
    %p70 = scmp.eq.s32.totalorder %s18, 0
    %p71 = por %p69, %p70
    %s72 = ssub.s32 %s12, %s19
    %p73 = scmp.eq.s32.totalorder %s72, 0
    %s75 = sadd.s32 %s74, 1
    %s76 = scalar_select %p73, %s74, %s75
    %p79 = pneg %p73
    %p80 = scmp.eq.s32.totalorder %s12, 1
    %p81 = por %p79, %p80
    %p82 = scmp.ne.s32.totalorder %s74, %s77
    %p83 = scmp.eq.s32.totalorder %s12, 0
    %p84 = por %p82, %p83
    %p85 = scmp.ne.s32.totalorder %s74, %s77
    %p86 = scmp.eq.s32.totalorder %s17, 1
    %p87 = por %p85, %p86
    %p88 = scmp.ne.s32.totalorder %s77, %s78
    %p89 = scmp.eq.s32.totalorder %s17, 0
    %p90 = por %p88, %p89
    %p91 = scmp.ne.s32.totalorder %s77, %s78
    %p92 = scmp.eq.s32.totalorder %s18, 1
    %p93 = por %p91, %p92
    %p95 = scmp.ne.s32.totalorder %s78, %s94
    %p96 = scmp.eq.s32.totalorder %s18, 0
    %p97 = por %p95, %p96
    %s99 = sadd.s32 %s98, 1
    %p102 = scmp.eq.s32.totalorder %s12, 1
    %p103 = scmp.ne.s32.totalorder %s98, %s100
    %p104 = scmp.eq.s32.totalorder %s12, 0
    %p105 = por %p103, %p104
    %p106 = scmp.ne.s32.totalorder %s98, %s100
    %p107 = scmp.eq.s32.totalorder %s17, 1
    %p108 = por %p106, %p107
    %p109 = scmp.ne.s32.totalorder %s100, %s101
    %p110 = scmp.eq.s32.totalorder %s17, 0
    %p111 = por %p109, %p110
    %p112 = scmp.ne.s32.totalorder %s100, %s101
    %p113 = scmp.eq.s32.totalorder %s18, 1
    %p114 = por %p112, %p113
    %p116 = scmp.ne.s32.totalorder %s101, %s115
    %p117 = scmp.eq.s32.totalorder %s18, 0
    %p118 = por %p116, %p117
    %s120 = sadd.s32 %s119, 1
    %p123 = scmp.eq.s32.totalorder %s12, 1
    %p124 = scmp.ne.s32.totalorder %s119, %s121
    %p125 = scmp.eq.s32.totalorder %s12, 0
    %p126 = por %p124, %p125
    %p127 = scmp.ne.s32.totalorder %s119, %s121
    %p128 = scmp.eq.s32.totalorder %s17, 1
    %p129 = por %p127, %p128
    %p130 = scmp.ne.s32.totalorder %s121, %s122
    %p131 = scmp.eq.s32.totalorder %s17, 0
    %p132 = por %p130, %p131
    %p133 = scmp.ne.s32.totalorder %s121, %s122
    %p134 = scmp.eq.s32.totalorder %s18, 1
    %p135 = por %p133, %p134
    %p137 = scmp.ne.s32.totalorder %s122, %s136
    %p138 = scmp.eq.s32.totalorder %s18, 0
    %p139 = por %p137, %p138
    %s141 = sadd.s32 %s140, 1
    %p144 = scmp.eq.s32.totalorder %s12, 1
    %p145 = scmp.ne.s32.totalorder %s140, %s142
    %p146 = scmp.eq.s32.totalorder %s12, 0
    %p147 = por %p145, %p146
    %p148 = scmp.ne.s32.totalorder %s140, %s142
    %p149 = scmp.eq.s32.totalorder %s17, 1
    %p150 = por %p148, %p149
    %p151 = scmp.ne.s32.totalorder %s142, %s143
    %p152 = scmp.eq.s32.totalorder %s17, 0
    %p153 = por %p151, %p152
    %p154 = scmp.ne.s32.totalorder %s142, %s143
    %p155 = scmp.eq.s32.totalorder %s18, 1
    %p156 = por %p154, %p155
    %p158 = scmp.ne.s32.totalorder %s143, %s157
    %p159 = scmp.eq.s32.totalorder %s18, 0
    %p160 = por %p158, %p159
    %s161 = ssub.s32 %s12, %s19
    %p162 = scmp.eq.s32.totalorder %s161, 0
    %s164 = sadd.s32 %s163, 1
    %s165 = scalar_select %p162, %s163, %s164
    %p168 = pneg %p162
    %p169 = scmp.eq.s32.totalorder %s12, 1
    %p170 = por %p168, %p169
    %p171 = scmp.ne.s32.totalorder %s163, %s166
    %p172 = scmp.eq.s32.totalorder %s12, 0
    %p173 = por %p171, %p172
    %p174 = scmp.ne.s32.totalorder %s163, %s166
    %p175 = scmp.eq.s32.totalorder %s17, 1
    %p176 = por %p174, %p175
    %p177 = scmp.ne.s32.totalorder %s166, %s167
    %p178 = scmp.eq.s32.totalorder %s17, 0
    %p179 = por %p177, %p178
    %p180 = scmp.ne.s32.totalorder %s166, %s167
    %p181 = scmp.eq.s32.totalorder %s18, 1
    %p182 = por %p180, %p181
    %p184 = scmp.ne.s32.totalorder %s167, %s183
    %p185 = scmp.eq.s32.totalorder %s18, 0
    %p186 = por %p184, %p185
    %p187 = scmp.le.s32.totalorder 1, %s12
    %p188 = scmp.lt.s32.totalorder %s12, 3
    %p189 = pnand %p187, %p188
    %p190 = pneg %p189
    // Predicated region
    $region9: #{_lambda_.11} parent=5 // pred_check
      _
    $region10: #{_lambda_.11} parent=5 // pred_check_branch
      %192 = sbr.rel (%p189) target = $region12
    $region11: #{_lambda_.11} parent=5 // pred_region
      %s193 = ssub.s32 %s12, 1
      // Predicated region
      $region13: #{_lambda_.11} parent=11 // pred_check
        %p194 = pneg %p111
      $region14: #{_lambda_.11} parent=11 // pred_check_branch
        %196 = sbr.rel (%p194) target = $region16
      $region15: #{_lambda_.11} parent=11 // pred_region
        _
      $region16: #{_lambda_.11} parent=11 // pred_fallthru
        _
      // Predicated region
      $region17: #{_lambda_.11} parent=11 // pred_check
        %p197 = pneg %p132
      $region18: #{_lambda_.11} parent=11 // pred_check_branch
        %199 = sbr.rel (%p197) target = $region20
      $region19: #{_lambda_.11} parent=11 // pred_region
        _
      $region20: #{_lambda_.11} parent=11 // pred_fallthru
        _
      // Predicated region
      $region21: #{_lambda_.11} parent=11 // pred_check
        %p200 = pneg %p153
      $region22: #{_lambda_.11} parent=11 // pred_check_branch
        %202 = sbr.rel (%p200) target = $region24
      $region23: #{_lambda_.11} parent=11 // pred_region
        _
      $region24: #{_lambda_.11} parent=11 // pred_fallthru
        _
    $region12: #{_lambda_.11} parent=5 // pred_fallthru
      _
    %p203 = scmp.lt.s32.totalorder %s12, 2
    // Predicated region
    $region25: #{_lambda_.11} parent=5 // pred_check
      %p204 = pneg %p203
    $region26: #{_lambda_.11} parent=5 // pred_check_branch
      %206 = sbr.rel (%p204) target = $region28
    $region27: #{_lambda_.11} parent=5 // pred_region
      // Predicated region
      $region29: #{_lambda_.11} parent=27 // pred_check
        %p207 = pneg %p32
      $region30: #{_lambda_.11} parent=27 // pred_check_branch
        %209 = sbr.rel (%p207) target = $region32
      $region31: #{_lambda_.11} parent=27 // pred_region
        %p210 = scmp.lt.s32.totalorder %s12, 1
        %s211 = scalar_select %p210, %s12, 1
        %s212 = smul.addr %s211, 3
        %s213 = smul.addr %s212, 4
        %s214 = scalar_lea.vmem %s0, %s213
      $region32: #{_lambda_.11} parent=27 // pred_fallthru
        _
      // Predicated region
      $region33: #{_lambda_.11} parent=27 // pred_check
        %p215 = pneg %p58
      $region34: #{_lambda_.11} parent=27 // pred_check_branch
        %217 = sbr.rel (%p215) target = $region36
      $region35: #{_lambda_.11} parent=27 // pred_region
        %p218 = scmp.lt.s32.totalorder %s12, 1
        %s219 = scalar_select %p218, %s12, 1
        %s220 = smul.addr %s219, 3
        %s221 = smul.addr %s220, 4
        %s222 = scalar_lea.vmem %s1, %s221
      $region36: #{_lambda_.11} parent=27 // pred_fallthru
        _
      // Predicated region
      $region37: #{_lambda_.11} parent=27 // pred_check
        %p223 = pneg %p84
      $region38: #{_lambda_.11} parent=27 // pred_check_branch
        %225 = sbr.rel (%p223) target = $region40
      $region39: #{_lambda_.11} parent=27 // pred_region
        %p226 = scmp.lt.s32.totalorder %s12, 1
        %s227 = scalar_select %p226, %s12, 1
        %s228 = smul.addr %s227, 3
        %s229 = smul.addr %s228, 4
        %s230 = scalar_lea.vmem %s2, %s229
      $region40: #{_lambda_.11} parent=27 // pred_fallthru
        _
    $region28: #{_lambda_.11} parent=5 // pred_fallthru
      _
    %p231 = scmp.le.s32.totalorder 1, %s12
    %p232 = scmp.lt.s32.totalorder %s12, 3
    %p233 = pnand %p231, %p232
    %p234 = pneg %p233
    // Predicated region
    $region41: #{_lambda_.11} parent=5 // pred_check
      _
    $region42: #{_lambda_.11} parent=5 // pred_check_branch
      %236 = sbr.rel (%p233) target = $region44
    $region43: #{_lambda_.11} parent=5 // pred_region
      %s237 = ssub.s32 %s12, 1
      %p238 = scmp.lt.s32.totalorder %s17, 1
      %s239 = scalar_select %p238, %s17, 1
      %s240 = smul.addr %s239, 3
      %s241 = smul.addr %s240, 4
      %s242 = scalar_lea.vmem %s0, %s241
      %p243 = pneg %p38
      %p244 = pneg %p35
      %p245 = scmp.lt.s32.totalorder %s17, 1
      %s246 = scalar_select %p245, %s17, 1
      %s247 = smul.addr %s246, 3
      %s248 = smul.addr %s247, 4
      %s249 = scalar_lea.vmem %s1, %s248
      %p250 = pneg %p64
      %p251 = pneg %p61
      %p252 = scmp.lt.s32.totalorder %s17, 1
      %s253 = scalar_select %p252, %s17, 1
      %s254 = smul.addr %s253, 3
      %s255 = smul.addr %s254, 4
      %s256 = scalar_lea.vmem %s2, %s255
      %p257 = pneg %p90
      %p258 = pneg %p87
      %p259 = pneg %p111
      %p260 = pneg %p108
      %p261 = pneg %p132
      %p262 = pneg %p129
      %p263 = pneg %p153
      %p264 = pneg %p150
      %p265 = pneg %p179
      %p266 = pneg %p176
      %p267 = scmp.lt.s32.totalorder %s17, 1
      %s268 = scalar_select %p267, %s17, 1
      %s269 = smul.addr %s268, 3
      %s270 = smul.addr %s269, 4
      %s271 = scalar_lea.vmem %s6, %s270
      %p272 = scmp.lt.s32.totalorder %s17, 1
      %s273 = scalar_select %p272, %s17, 1
      %s274 = smul.addr %s273, 3
      %s275 = smul.addr %s274, 4
      %s276 = scalar_lea.vmem %s0, %s275
      %p277 = scmp.lt.s32.totalorder %s17, 1
      %s278 = scalar_select %p277, %s17, 1
      %s279 = smul.addr %s278, 3
      %s280 = smul.addr %s279, 4
      %s281 = scalar_lea.vmem %s1, %s280
      %p282 = scmp.lt.s32.totalorder %s17, 1
      %s283 = scalar_select %p282, %s17, 1
      %s284 = smul.addr %s283, 3
      %s285 = smul.addr %s284, 4
      %s286 = scalar_lea.vmem %s2, %s285
      %p287 = scmp.lt.s32.totalorder %s17, 1
      %s288 = scalar_select %p287, %s17, 1
      %s289 = smul.addr %s288, 3
      %s290 = smul.addr %s289, 4
      %s291 = scalar_lea.vmem %s6, %s290
      %v293 = vld [vmem:[%s3] sm:$0xf]
      %v294 = vld [vmem:[%s276] sm:$0xff]
      %v295 = vld [vmem:[%s276 + $0x8] sm:$0xf]
      %s296 = scalar_lea.vmem %s3, 4
      %v297 = vld [vmem:[%s296] sm:$0xf]
      %v298 = vld [vmem:[%s281] sm:$0xff]
      %v299 = vld [vmem:[%s281 + $0x8] sm:$0xf]
      %v302 = vunpack.c.l.b16 %v298
      %v303 = vunpack.c.h.b16 %v298
      %v304 = vunpack.c.l.b16 %v299
      %v305 = vpack.c.b16 %v302, %v302
      %v306 = vpack.c.b16 %v303, %v303
      %v307 = vpack.c.b16 %v304, %v304
      %vm308 = vcmask 64512
      %v310 = vsel %vm308, %v297, 0
      %vm312 = vcmask 1043456
      %v314 = vsel %vm312, %v305, 0
      %v317 = vsel %vm312, %v306, 0
      %v320 = vsel %vm312, %v307, 0
      %322 = vmatprep.subr.bf16.mxu0 %v317
      %323 = vmatpush1.bf16.msra.mxu0 %v314
      %324 = vmatprep.subr.bf16.mxu0 0
      %325 = vmatpush1.bf16.msra.mxu0 0
      %326 = vmatprep.subr.bf16.mxu0 0
      %327 = vmatpush1.bf16.msra.mxu0 0
      %328 = vmatprep.subr.bf16.mxu0 0
      %329 = vmatpush1.bf16.msra.mxu0 0
      %330 = vmatprep.subr.bf16.mxu0 0
      %331 = vmatpush1.bf16.msra.mxu0 0
      %332 = vmatprep.subr.bf16.mxu0 0
      %333 = vmatpush1.bf16.msra.mxu0 0
      %334 = vmatprep.subr.bf16.mxu0 0
      %335 = vmatpush1.bf16.msra.mxu0 0
      %336 = vmatprep.subr.bf16.mxu0 0
      %337 = vmatpush1.bf16.msra.mxu0 0
      %338 = vmatprep.subr.bf16.mxu0 0
      %339 = vmatpush1.bf16.msra.mxu0 0
      %340 = vmatprep.subr.bf16.mxu0 0
      %341 = vmatpush1.bf16.msra.mxu0 0
      %342 = vmatprep.subr.bf16.mxu0 0
      %343 = vmatpush1.bf16.msra.mxu0 0
      %344 = vmatprep.subr.bf16.mxu0 0
      %345 = vmatpush1.bf16.msra.mxu0 0
      %346 = vmatprep.subr.bf16.mxu0 0
      %347 = vmatpush1.bf16.msra.mxu0 0
      %348 = vmatprep.subr.bf16.mxu0 0
      %349 = vmatpush1.bf16.msra.mxu0 0
      %350 = vmatprep.subr.bf16.mxu0 0
      %351 = vmatpush1.bf16.msra.mxu0 0
      %352 = vmatprep.subr.bf16.mxu0 0
      %353 = vmatpush1.bf16.msra.mxu0 0
      %354 = vmatprep.mubr.bf16.mxu0 0
      %355 = vmatmul.mubr.bf16.gmra.mrb[0].mxu0 %v310
      %v356 = vpop.f32.mrb[0].mxu0
      %v357 = vadd.f32 0.0, %v356
      %v358 = vpop.f32.mrb[0].mxu0
      %v359 = vadd.f32 0.0, %v358
      %v360 = vpop.f32.mrb[0].mxu0
      %v361 = vpop.f32.mrb[0].mxu0
      %362 = vdwg.mxu0
      %363 = vmatprep.subr.bf16.mxu0 0
      %364 = vmatpush1.bf16.msra.mxu0 %v320
      %365 = vmatprep.subr.bf16.mxu0 0
      %366 = vmatpush1.bf16.msra.mxu0 0
      %367 = vmatprep.subr.bf16.mxu0 0
      %368 = vmatpush1.bf16.msra.mxu0 0
      %369 = vmatprep.subr.bf16.mxu0 0
      %370 = vmatpush1.bf16.msra.mxu0 0
      %371 = vmatprep.subr.bf16.mxu0 0
      %372 = vmatpush1.bf16.msra.mxu0 0
      %373 = vmatprep.subr.bf16.mxu0 0
      %374 = vmatpush1.bf16.msra.mxu0 0
      %375 = vmatprep.subr.bf16.mxu0 0
      %376 = vmatpush1.bf16.msra.mxu0 0
      %377 = vmatprep.subr.bf16.mxu0 0
      %378 = vmatpush1.bf16.msra.mxu0 0
      %379 = vmatprep.subr.bf16.mxu0 0
      %380 = vmatpush1.bf16.msra.mxu0 0
      %381 = vmatprep.subr.bf16.mxu0 0
      %382 = vmatpush1.bf16.msra.mxu0 0
      %383 = vmatprep.subr.bf16.mxu0 0
      %384 = vmatpush1.bf16.msra.mxu0 0
      %385 = vmatprep.subr.bf16.mxu0 0
      %386 = vmatpush1.bf16.msra.mxu0 0
      %387 = vmatprep.subr.bf16.mxu0 0
      %388 = vmatpush1.bf16.msra.mxu0 0
      %389 = vmatprep.subr.bf16.mxu0 0
      %390 = vmatpush1.bf16.msra.mxu0 0
      %391 = vmatprep.subr.bf16.mxu0 0
      %392 = vmatpush1.bf16.msra.mxu0 0
      %393 = vmatprep.subr.bf16.mxu0 0
      %394 = vmatpush1.bf16.msra.mxu0 0
      %395 = vmatprep.mubr.bf16.mxu0 0
      %396 = vmatmul.mubr.bf16.gmra.mrb[0].mxu0 %v310
      %v397 = vpop.f32.mrb[0].mxu0
      %v398 = vadd.f32 0.0, %v397
      %v399 = vpop.f32.mrb[0].mxu0
      %v400 = vpop.f32.mrb[0].mxu0
      %v401 = vpop.f32.mrb[0].mxu0
      %402 = vdwg.mxu0
      %v405 = vunpack.c.l.b16 %v294
      %v406 = vunpack.c.h.b16 %v294
      %v407 = vunpack.c.l.b16 %v295
      %v408 = vpack.c.b16 %v405, %v405
      %v409 = vpack.c.b16 %v406, %v406
      %v410 = vpack.c.b16 %v407, %v407
      %v412 = vsel %vm308, %v293, 0
      %v415 = vsel %vm312, %v408, 0
      %v418 = vsel %vm312, %v409, 0
      %v421 = vsel %vm312, %v410, 0
      %423 = vmatprep.subr.bf16.mxu0 %v418
      %424 = vmatpush1.bf16.msra.mxu0 %v415
      %425 = vmatprep.subr.bf16.mxu0 0
      %426 = vmatpush1.bf16.msra.mxu0 0
      %427 = vmatprep.subr.bf16.mxu0 0
      %428 = vmatpush1.bf16.msra.mxu0 0
      %429 = vmatprep.subr.bf16.mxu0 0
      %430 = vmatpush1.bf16.msra.mxu0 0
      %431 = vmatprep.subr.bf16.mxu0 0
      %432 = vmatpush1.bf16.msra.mxu0 0
      %433 = vmatprep.subr.bf16.mxu0 0
      %434 = vmatpush1.bf16.msra.mxu0 0
      %435 = vmatprep.subr.bf16.mxu0 0
      %436 = vmatpush1.bf16.msra.mxu0 0
      %437 = vmatprep.subr.bf16.mxu0 0
      %438 = vmatpush1.bf16.msra.mxu0 0
      %439 = vmatprep.subr.bf16.mxu0 0
      %440 = vmatpush1.bf16.msra.mxu0 0
      %441 = vmatprep.subr.bf16.mxu0 0
      %442 = vmatpush1.bf16.msra.mxu0 0
      %443 = vmatprep.subr.bf16.mxu0 0
      %444 = vmatpush1.bf16.msra.mxu0 0
      %445 = vmatprep.subr.bf16.mxu0 0
      %446 = vmatpush1.bf16.msra.mxu0 0
      %447 = vmatprep.subr.bf16.mxu0 0
      %448 = vmatpush1.bf16.msra.mxu0 0
      %449 = vmatprep.subr.bf16.mxu0 0
      %450 = vmatpush1.bf16.msra.mxu0 0
      %451 = vmatprep.subr.bf16.mxu0 0
      %452 = vmatpush1.bf16.msra.mxu0 0
      %453 = vmatprep.subr.bf16.mxu0 0
      %454 = vmatpush1.bf16.msra.mxu0 0
      %455 = vmatprep.mubr.bf16.mxu0 0
      %456 = vmatmul.mubr.bf16.gmra.mrb[0].mxu0 %v412
      %v457 = vpop.f32.mrb[0].mxu0
      %v458 = vadd.f32 %v357, %v457
      %v459 = vpop.f32.mrb[0].mxu0
      %v460 = vadd.f32 %v359, %v459
      %v461 = vpop.f32.mrb[0].mxu0
      %v462 = vpop.f32.mrb[0].mxu0
      %463 = vdwg.mxu0
      %464 = vmatprep.subr.bf16.mxu0 0
      %465 = vmatpush1.bf16.msra.mxu0 %v421
      %466 = vmatprep.subr.bf16.mxu0 0
      %467 = vmatpush1.bf16.msra.mxu0 0
      %468 = vmatprep.subr.bf16.mxu0 0
      %469 = vmatpush1.bf16.msra.mxu0 0
      %470 = vmatprep.subr.bf16.mxu0 0
      %471 = vmatpush1.bf16.msra.mxu0 0
      %472 = vmatprep.subr.bf16.mxu0 0
      %473 = vmatpush1.bf16.msra.mxu0 0
      %474 = vmatprep.subr.bf16.mxu0 0
      %475 = vmatpush1.bf16.msra.mxu0 0
      %476 = vmatprep.subr.bf16.mxu0 0
      %477 = vmatpush1.bf16.msra.mxu0 0
      %478 = vmatprep.subr.bf16.mxu0 0
      %479 = vmatpush1.bf16.msra.mxu0 0
      %480 = vmatprep.subr.bf16.mxu0 0
      %481 = vmatpush1.bf16.msra.mxu0 0
      %482 = vmatprep.subr.bf16.mxu0 0
      %483 = vmatpush1.bf16.msra.mxu0 0
      %484 = vmatprep.subr.bf16.mxu0 0
      %485 = vmatpush1.bf16.msra.mxu0 0
      %486 = vmatprep.subr.bf16.mxu0 0
      %487 = vmatpush1.bf16.msra.mxu0 0
      %488 = vmatprep.subr.bf16.mxu0 0
      %489 = vmatpush1.bf16.msra.mxu0 0
      %490 = vmatprep.subr.bf16.mxu0 0
      %491 = vmatpush1.bf16.msra.mxu0 0
      %492 = vmatprep.subr.bf16.mxu0 0
      %493 = vmatpush1.bf16.msra.mxu0 0
      %494 = vmatprep.subr.bf16.mxu0 0
      %495 = vmatpush1.bf16.msra.mxu0 0
      %496 = vmatprep.mubr.bf16.mxu0 0
      %497 = vmatmul.mubr.bf16.gmra.mrb[0].mxu0 %v412
      %v498 = vpop.f32.mrb[0].mxu0
      %v499 = vadd.f32 %v398, %v498
      %v500 = vpop.f32.mrb[0].mxu0
      %v501 = vpop.f32.mrb[0].mxu0
      %v502 = vpop.f32.mrb[0].mxu0
      %503 = vdwg.mxu0
      %s504 = scalar_lea.vmem %s3, 8
      %v505 = vld [vmem:[%s504] sm:$0xf]
      %v506 = vld [vmem:[%s286] sm:$0xff]
      %v507 = vld [vmem:[%s286 + $0x8] sm:$0xf]
      %v510 = vunpack.c.l.b16 %v506
      %v511 = vunpack.c.h.b16 %v506
      %v512 = vunpack.c.l.b16 %v507
      %v513 = vpack.c.b16 %v510, %v510
      %v514 = vpack.c.b16 %v511, %v511
      %v515 = vpack.c.b16 %v512, %v512
      %v517 = vsel %vm308, %v505, 0
      %v520 = vsel %vm312, %v513, 0
      %v523 = vsel %vm312, %v514, 0
      %v526 = vsel %vm312, %v515, 0
      %528 = vmatprep.subr.bf16.mxu0 %v523
      %529 = vmatpush1.bf16.msra.mxu0 %v520
      %530 = vmatprep.subr.bf16.mxu0 0
      %531 = vmatpush1.bf16.msra.mxu0 0
      %532 = vmatprep.subr.bf16.mxu0 0
      %533 = vmatpush1.bf16.msra.mxu0 0
      %534 = vmatprep.subr.bf16.mxu0 0
      %535 = vmatpush1.bf16.msra.mxu0 0
      %536 = vmatprep.subr.bf16.mxu0 0
      %537 = vmatpush1.bf16.msra.mxu0 0
      %538 = vmatprep.subr.bf16.mxu0 0
      %539 = vmatpush1.bf16.msra.mxu0 0
      %540 = vmatprep.subr.bf16.mxu0 0
      %541 = vmatpush1.bf16.msra.mxu0 0
      %542 = vmatprep.subr.bf16.mxu0 0
      %543 = vmatpush1.bf16.msra.mxu0 0
      %544 = vmatprep.subr.bf16.mxu0 0
      %545 = vmatpush1.bf16.msra.mxu0 0
      %546 = vmatprep.subr.bf16.mxu0 0
      %547 = vmatpush1.bf16.msra.mxu0 0
      %548 = vmatprep.subr.bf16.mxu0 0
      %549 = vmatpush1.bf16.msra.mxu0 0
      %550 = vmatprep.subr.bf16.mxu0 0
      %551 = vmatpush1.bf16.msra.mxu0 0
      %552 = vmatprep.subr.bf16.mxu0 0
      %553 = vmatpush1.bf16.msra.mxu0 0
      %554 = vmatprep.subr.bf16.mxu0 0
      %555 = vmatpush1.bf16.msra.mxu0 0
      %556 = vmatprep.subr.bf16.mxu0 0
      %557 = vmatpush1.bf16.msra.mxu0 0
      %558 = vmatprep.subr.bf16.mxu0 0
      %559 = vmatpush1.bf16.msra.mxu0 0
      %560 = vmatprep.mubr.bf16.mxu0 0
      %561 = vmatmul.mubr.bf16.gmra.mrb[0].mxu0 %v517
      %v562 = vpop.f32.mrb[0].mxu0
      %v563 = vadd.f32 0.0, %v562
      %v564 = vpop.f32.mrb[0].mxu0
      %v565 = vadd.f32 0.0, %v564
      %v566 = vpop.f32.mrb[0].mxu0
      %v567 = vpop.f32.mrb[0].mxu0
      %568 = vdwg.mxu0
      %569 = vmatprep.subr.bf16.mxu0 0
      %570 = vmatpush1.bf16.msra.mxu0 %v526
      %571 = vmatprep.subr.bf16.mxu0 0
      %572 = vmatpush1.bf16.msra.mxu0 0
      %573 = vmatprep.subr.bf16.mxu0 0
      %574 = vmatpush1.bf16.msra.mxu0 0
      %575 = vmatprep.subr.bf16.mxu0 0
      %576 = vmatpush1.bf16.msra.mxu0 0
      %577 = vmatprep.subr.bf16.mxu0 0
      %578 = vmatpush1.bf16.msra.mxu0 0
      %579 = vmatprep.subr.bf16.mxu0 0
      %580 = vmatpush1.bf16.msra.mxu0 0
      %581 = vmatprep.subr.bf16.mxu0 0
      %582 = vmatpush1.bf16.msra.mxu0 0
      %583 = vmatprep.subr.bf16.mxu0 0
      %584 = vmatpush1.bf16.msra.mxu0 0
      %585 = vmatprep.subr.bf16.mxu0 0
      %586 = vmatpush1.bf16.msra.mxu0 0
      %587 = vmatprep.subr.bf16.mxu0 0
      %588 = vmatpush1.bf16.msra.mxu0 0
      %589 = vmatprep.subr.bf16.mxu0 0
      %590 = vmatpush1.bf16.msra.mxu0 0
      %591 = vmatprep.subr.bf16.mxu0 0
      %592 = vmatpush1.bf16.msra.mxu0 0
      %593 = vmatprep.subr.bf16.mxu0 0
      %594 = vmatpush1.bf16.msra.mxu0 0
      %595 = vmatprep.subr.bf16.mxu0 0
      %596 = vmatpush1.bf16.msra.mxu0 0
      %597 = vmatprep.subr.bf16.mxu0 0
      %598 = vmatpush1.bf16.msra.mxu0 0
      %599 = vmatprep.subr.bf16.mxu0 0
      %600 = vmatpush1.bf16.msra.mxu0 0
      %601 = vmatprep.mubr.bf16.mxu0 0
      %602 = vmatmul.mubr.bf16.gmra.mrb[0].mxu0 %v517
      %v603 = vpop.f32.mrb[0].mxu0
      %v604 = vadd.f32 0.0, %v603
      %v605 = vpop.f32.mrb[0].mxu0
      %v606 = vpop.f32.mrb[0].mxu0
      %v607 = vpop.f32.mrb[0].mxu0
      %608 = vdwg.mxu0
      %v609 = vadd.f32 %v458, %v563
      %v610 = vadd.f32 %v460, %v565
      %v611 = vadd.f32 %v499, %v604
      %v612 = vld [vmem:[%s4] sm:$0xff]
      %614 = vset.pattern.permute.xlu0 0
      %615 = vperm.xlu0 %614, %v612
      %v616 = vpop.permute.xlu0 %615
      %v618 = vadd.f32 %v609, %v616
      %v619 = vadd.f32 %v610, %v616
      %v620 = vadd.f32 %v611, %v616
      %vm621 = vcmp.gt.f32.partialorder %v618, 0.0
      %vm622 = vcmp.gt.f32.partialorder %v619, 0.0
      %vm623 = vcmp.gt.f32.partialorder %v620, 0.0
      %v624 = vmul.f32 %v618, 0.2
      %v625 = vmul.f32 %v619, 0.2
      %v626 = vmul.f32 %v620, 0.2
      %v627 = vsel %vm621, %v618, %v624
      %v628 = vsel %vm622, %v619, %v625
      %v629 = vsel %vm623, %v620, %v626
      %v630 = vld [vmem:[%s5] sm:$0x7]
      %v632 = vlaneseq
      %v633 = vshrl.u32 %v632, 7
      %v634 = vsub.s32 0, %v633
      %v635 = vrot.slane %v630, %v634
      %v636 = vlaneseq
      %v637 = vshrl.u32 %v636, 7
      %v638 = vsub.s32 1, %v637
      %v639 = vrot.slane %v630, %v638
      %v640 = vlaneseq
      %v641 = vshrl.u32 %v640, 7
      %v642 = vsub.s32 2, %v641
      %v643 = vrot.slane %v630, %v642
      %v647 = vmul.f32 %v627, %v635
      %v648 = vmul.f32 %v628, %v639
      %v649 = vmul.f32 %v629, %v643
      %v650 = vpack.c.bf16 %v647, %v647
      %v651 = vpack.c.bf16 %v648, %v648
      %v652 = vpack.c.bf16 %v649, %v649
      %v656 = vunpack.c.l.b16 %v650
      %v657 = vunpack.c.l.b16 %v651
      %v658 = vunpack.c.l.b16 %v652
      %v659 = vpack.c.b16 %v657, %v656
      %v660 = vpack.c.b16 %v658, %v658
      %663 = vst [vmem:[%s291] sm:$0xff] %v659
      %vm664 = vcmask 551936
      %665 = vst.msk [vmem:[%s291 + $0x8] sm:$0xf] %vm664, %v660
      %p666 = scmp.lt.s32.totalorder %s17, 1
      %s667 = scalar_select %p666, %s17, 1
      %s668 = smul.addr %s667, 3
      %s669 = smul.addr %s668, 4
      %s670 = scalar_lea.vmem %s6, %s669
      // Predicated region
      $region45: #{_lambda_.11} parent=43 // pred_check
        %p671 = pneg %p176
      $region46: #{_lambda_.11} parent=43 // pred_check_branch
        %673 = sbr.rel (%p671) target = $region48
      $region47: #{_lambda_.11} parent=43 // pred_region
        _
      $region48: #{_lambda_.11} parent=43 // pred_fallthru
        _
    $region44: #{_lambda_.11} parent=5 // pred_fallthru
      _
    %p674 = scmp.le.s32.totalorder 2, %s12
    // Predicated region
    $region49: #{_lambda_.11} parent=5 // pred_check
      %p675 = pneg %p674
    $region50: #{_lambda_.11} parent=5 // pred_check_branch
      %677 = sbr.rel (%p675) target = $region52
    $region51: #{_lambda_.11} parent=5 // pred_region
      %s678 = ssub.s32 %s12, 2
      // Predicated region
      $region53: #{_lambda_.11} parent=51 // pred_check
        %p679 = pneg %p182
      $region54: #{_lambda_.11} parent=51 // pred_check_branch
        %681 = sbr.rel (%p679) target = $region56
      $region55: #{_lambda_.11} parent=51 // pred_region
        %p682 = scmp.lt.s32.totalorder %s18, 1
        %s683 = scalar_select %p682, %s18, 1
        %s684 = smul.addr %s683, 3
        %s685 = smul.addr %s684, 4
        %s686 = scalar_lea.vmem %s6, %s685
      $region56: #{_lambda_.11} parent=51 // pred_fallthru
        _
    $region52: #{_lambda_.11} parent=5 // pred_fallthru
      _
  $region6: #{_lambda_.11} parent=0 // loop_footer
    %s16 = sadd.s32 1, %s12
  $region7: #{_lambda_.11} parent=0 // loop_footer_branch
    %11 = sbr.rel target = $region3
  $region8: #{_lambda_.11} parent=0 // loop_exit
    _

// kernel: _lambda_.13
$region0: #{_lambda_.13}
  #allocation0 [shape = 'u32[]', space=smem, size = 0x4, offset = 0x4, fixed_abs, tag = 'smem constant byte address 0x4 - core index']
  #allocation1 [shape = 'u32[144,128]{1,0:T(1,128)}', space=vmem, size = 0x12000, scoped, tag = 'internal scratch']
  %s0 = inlined_call_operand.vmem [shape: bf16[2,8,324], index: 0, kind: input, shape index: {}]
  %s1 = inlined_call_operand.vmem [shape: bf16[2,8,324], index: 1, kind: input, shape index: {}]
  %s2 = inlined_call_operand.vmem [shape: bf16[2,8,324], index: 2, kind: input, shape index: {}]
  %s3 = inlined_call_operand.vmem [shape: bf16[2,8,324], index: 3, kind: input, shape index: {}]
  %s4 = inlined_call_operand.vmem [shape: bf16[4,8,8], index: 4, kind: input, shape index: {}]
  %s5 = inlined_call_operand.vmem [shape: f32[8,1], index: 5, kind: input, shape index: {}]
  %s6 = inlined_call_operand.vmem [shape: f32[1,324], index: 6, kind: input, shape index: {}]
  %s7 = inlined_call_operand.vmem [shape: bf16[2,8,324], index: 7, kind: output, shape index: {}]
  %s8 = sld [smem:[#allocation0]]
  $region61: #{_lambda_.13} parent=0
    _
  %s10 = ssub.s32 1, %s8
  %s11 = scalar_select 0, %s10, %s8
  loop: start=0, step=1, limit=4
  $region2: #{_lambda_.13} parent=0 // loop_pre_header
    _
  $region3: #{_lambda_.13} parent=0 // loop_header
    %s13 = sphi 0, %s17
    %p14 = scmp.ge.s32.totalorder %s13, 4
    %s23 = sphi 0, %s25
    %s26 = sphi 0, %s23
    %s27 = sphi 0, %s26
    %s43 = sphi 0, %s27
    %s49 = sphi 0, %s51
    %s52 = sphi 0, %s49
    %s53 = sphi 0, %s52
    %s69 = sphi 0, %s53
    %s75 = sphi 0, %s77
    %s78 = sphi 0, %s75
    %s79 = sphi 0, %s78
    %s95 = sphi 0, %s79
    %s101 = sphi 0, %s103
    %s104 = sphi 0, %s101
    %s105 = sphi 0, %s104
    %s121 = sphi 0, %s105
    %s125 = sphi 0, %s125
    %s127 = sphi 0, %s125
    %s128 = sphi 0, %s127
    %s142 = sphi 0, %s128
    %s146 = sphi 0, %s146
    %s148 = sphi 0, %s146
    %s149 = sphi 0, %s148
    %s163 = sphi 0, %s149
    %s167 = sphi 0, %s167
    %s169 = sphi 0, %s167
    %s170 = sphi 0, %s169
    %s184 = sphi 0, %s170
    %s190 = sphi 0, %s192
    %s193 = sphi 0, %s190
    %s194 = sphi 0, %s193
    %s210 = sphi 0, %s194
  $region4: #{_lambda_.13} parent=0 // loop_header_branch
    %16 = sbr.rel (%p14) target = $region8
  $region5: #{_lambda_.13} parent=0 // loop_body
    %s18 = ssub.s32 %s13, 1
    %s19 = ssub.s32 %s13, 2
    %s20 = sadd.s32 %s13, 1
    %s21 = ssub.s32 %s13, %s20
    %p22 = scmp.eq.s32.totalorder %s21, 0
    %s24 = sadd.s32 %s23, 1
    %s25 = scalar_select %p22, %s23, %s24
    %p28 = pneg %p22
    %p29 = scmp.eq.s32.totalorder %s13, 1
    %p30 = por %p28, %p29
    %p31 = scmp.ne.s32.totalorder %s23, %s26
    %p32 = scmp.eq.s32.totalorder %s13, 0
    %p33 = por %p31, %p32
    %p34 = scmp.ne.s32.totalorder %s23, %s26
    %p35 = scmp.eq.s32.totalorder %s18, 1
    %p36 = por %p34, %p35
    %p37 = scmp.ne.s32.totalorder %s26, %s27
    %p38 = scmp.eq.s32.totalorder %s18, 0
    %p39 = por %p37, %p38
    %p40 = scmp.ne.s32.totalorder %s26, %s27
    %p41 = scmp.eq.s32.totalorder %s19, 1
    %p42 = por %p40, %p41
    %p44 = scmp.ne.s32.totalorder %s27, %s43
    %p45 = scmp.eq.s32.totalorder %s19, 0
    %p46 = por %p44, %p45
    %s47 = ssub.s32 %s13, %s20
    %p48 = scmp.eq.s32.totalorder %s47, 0
    %s50 = sadd.s32 %s49, 1
    %s51 = scalar_select %p48, %s49, %s50
    %p54 = pneg %p48
    %p55 = scmp.eq.s32.totalorder %s13, 1
    %p56 = por %p54, %p55
    %p57 = scmp.ne.s32.totalorder %s49, %s52
    %p58 = scmp.eq.s32.totalorder %s13, 0
    %p59 = por %p57, %p58
    %p60 = scmp.ne.s32.totalorder %s49, %s52
    %p61 = scmp.eq.s32.totalorder %s18, 1
    %p62 = por %p60, %p61
    %p63 = scmp.ne.s32.totalorder %s52, %s53
    %p64 = scmp.eq.s32.totalorder %s18, 0
    %p65 = por %p63, %p64
    %p66 = scmp.ne.s32.totalorder %s52, %s53
    %p67 = scmp.eq.s32.totalorder %s19, 1
    %p68 = por %p66, %p67
    %p70 = scmp.ne.s32.totalorder %s53, %s69
    %p71 = scmp.eq.s32.totalorder %s19, 0
    %p72 = por %p70, %p71
    %s73 = ssub.s32 %s13, %s20
    %p74 = scmp.eq.s32.totalorder %s73, 0
    %s76 = sadd.s32 %s75, 1
    %s77 = scalar_select %p74, %s75, %s76
    %p80 = pneg %p74
    %p81 = scmp.eq.s32.totalorder %s13, 1
    %p82 = por %p80, %p81
    %p83 = scmp.ne.s32.totalorder %s75, %s78
    %p84 = scmp.eq.s32.totalorder %s13, 0
    %p85 = por %p83, %p84
    %p86 = scmp.ne.s32.totalorder %s75, %s78
    %p87 = scmp.eq.s32.totalorder %s18, 1
    %p88 = por %p86, %p87
    %p89 = scmp.ne.s32.totalorder %s78, %s79
    %p90 = scmp.eq.s32.totalorder %s18, 0
    %p91 = por %p89, %p90
    %p92 = scmp.ne.s32.totalorder %s78, %s79
    %p93 = scmp.eq.s32.totalorder %s19, 1
    %p94 = por %p92, %p93
    %p96 = scmp.ne.s32.totalorder %s79, %s95
    %p97 = scmp.eq.s32.totalorder %s19, 0
    %p98 = por %p96, %p97
    %s99 = ssub.s32 %s13, %s20
    %p100 = scmp.eq.s32.totalorder %s99, 0
    %s102 = sadd.s32 %s101, 1
    %s103 = scalar_select %p100, %s101, %s102
    %p106 = pneg %p100
    %p107 = scmp.eq.s32.totalorder %s13, 1
    %p108 = por %p106, %p107
    %p109 = scmp.ne.s32.totalorder %s101, %s104
    %p110 = scmp.eq.s32.totalorder %s13, 0
    %p111 = por %p109, %p110
    %p112 = scmp.ne.s32.totalorder %s101, %s104
    %p113 = scmp.eq.s32.totalorder %s18, 1
    %p114 = por %p112, %p113
    %p115 = scmp.ne.s32.totalorder %s104, %s105
    %p116 = scmp.eq.s32.totalorder %s18, 0
    %p117 = por %p115, %p116
    %p118 = scmp.ne.s32.totalorder %s104, %s105
    %p119 = scmp.eq.s32.totalorder %s19, 1
    %p120 = por %p118, %p119
    %p122 = scmp.ne.s32.totalorder %s105, %s121
    %p123 = scmp.eq.s32.totalorder %s19, 0
    %p124 = por %p122, %p123
    %s126 = sadd.s32 %s125, 1
    %p129 = scmp.eq.s32.totalorder %s13, 1
    %p130 = scmp.ne.s32.totalorder %s125, %s127
    %p131 = scmp.eq.s32.totalorder %s13, 0
    %p132 = por %p130, %p131
    %p133 = scmp.ne.s32.totalorder %s125, %s127
    %p134 = scmp.eq.s32.totalorder %s18, 1
    %p135 = por %p133, %p134
    %p136 = scmp.ne.s32.totalorder %s127, %s128
    %p137 = scmp.eq.s32.totalorder %s18, 0
    %p138 = por %p136, %p137
    %p139 = scmp.ne.s32.totalorder %s127, %s128
    %p140 = scmp.eq.s32.totalorder %s19, 1
    %p141 = por %p139, %p140
    %p143 = scmp.ne.s32.totalorder %s128, %s142
    %p144 = scmp.eq.s32.totalorder %s19, 0
    %p145 = por %p143, %p144
    %s147 = sadd.s32 %s146, 1
    %p150 = scmp.eq.s32.totalorder %s13, 1
    %p151 = scmp.ne.s32.totalorder %s146, %s148
    %p152 = scmp.eq.s32.totalorder %s13, 0
    %p153 = por %p151, %p152
    %p154 = scmp.ne.s32.totalorder %s146, %s148
    %p155 = scmp.eq.s32.totalorder %s18, 1
    %p156 = por %p154, %p155
    %p157 = scmp.ne.s32.totalorder %s148, %s149
    %p158 = scmp.eq.s32.totalorder %s18, 0
    %p159 = por %p157, %p158
    %p160 = scmp.ne.s32.totalorder %s148, %s149
    %p161 = scmp.eq.s32.totalorder %s19, 1
    %p162 = por %p160, %p161
    %p164 = scmp.ne.s32.totalorder %s149, %s163
    %p165 = scmp.eq.s32.totalorder %s19, 0
    %p166 = por %p164, %p165
    %s168 = sadd.s32 %s167, 1
    %p171 = scmp.eq.s32.totalorder %s13, 1
    %p172 = scmp.ne.s32.totalorder %s167, %s169
    %p173 = scmp.eq.s32.totalorder %s13, 0
    %p174 = por %p172, %p173
    %p175 = scmp.ne.s32.totalorder %s167, %s169
    %p176 = scmp.eq.s32.totalorder %s18, 1
    %p177 = por %p175, %p176
    %p178 = scmp.ne.s32.totalorder %s169, %s170
    %p179 = scmp.eq.s32.totalorder %s18, 0
    %p180 = por %p178, %p179
    %p181 = scmp.ne.s32.totalorder %s169, %s170
    %p182 = scmp.eq.s32.totalorder %s19, 1
    %p183 = por %p181, %p182
    %p185 = scmp.ne.s32.totalorder %s170, %s184
    %p186 = scmp.eq.s32.totalorder %s19, 0
    %p187 = por %p185, %p186
    %s188 = ssub.s32 %s13, %s20
    %p189 = scmp.eq.s32.totalorder %s188, 0
    %s191 = sadd.s32 %s190, 1
    %s192 = scalar_select %p189, %s190, %s191
    %p195 = pneg %p189
    %p196 = scmp.eq.s32.totalorder %s13, 1
    %p197 = por %p195, %p196
    %p198 = scmp.ne.s32.totalorder %s190, %s193
    %p199 = scmp.eq.s32.totalorder %s13, 0
    %p200 = por %p198, %p199
    %p201 = scmp.ne.s32.totalorder %s190, %s193
    %p202 = scmp.eq.s32.totalorder %s18, 1
    %p203 = por %p201, %p202
    %p204 = scmp.ne.s32.totalorder %s193, %s194
    %p205 = scmp.eq.s32.totalorder %s18, 0
    %p206 = por %p204, %p205
    %p207 = scmp.ne.s32.totalorder %s193, %s194
    %p208 = scmp.eq.s32.totalorder %s19, 1
    %p209 = por %p207, %p208
    %p211 = scmp.ne.s32.totalorder %s194, %s210
    %p212 = scmp.eq.s32.totalorder %s19, 0
    %p213 = por %p211, %p212
    %p214 = scmp.le.s32.totalorder 1, %s13
    %p215 = scmp.lt.s32.totalorder %s13, 3
    %p216 = pnand %p214, %p215
    %p217 = pneg %p216
    // Predicated region
    $region9: #{_lambda_.13} parent=5 // pred_check
      _
    $region10: #{_lambda_.13} parent=5 // pred_check_branch
      %219 = sbr.rel (%p216) target = $region12
    $region11: #{_lambda_.13} parent=5 // pred_region
      %s220 = ssub.s32 %s13, 1
      // Predicated region
      $region13: #{_lambda_.13} parent=11 // pred_check
        %p221 = pneg %p138
      $region14: #{_lambda_.13} parent=11 // pred_check_branch
        %223 = sbr.rel (%p221) target = $region16
      $region15: #{_lambda_.13} parent=11 // pred_region
        _
      $region16: #{_lambda_.13} parent=11 // pred_fallthru
        _
      // Predicated region
      $region17: #{_lambda_.13} parent=11 // pred_check
        %p224 = pneg %p159
      $region18: #{_lambda_.13} parent=11 // pred_check_branch
        %226 = sbr.rel (%p224) target = $region20
      $region19: #{_lambda_.13} parent=11 // pred_region
        _
      $region20: #{_lambda_.13} parent=11 // pred_fallthru
        _
      // Predicated region
      $region21: #{_lambda_.13} parent=11 // pred_check
        %p227 = pneg %p180
      $region22: #{_lambda_.13} parent=11 // pred_check_branch
        %229 = sbr.rel (%p227) target = $region24
      $region23: #{_lambda_.13} parent=11 // pred_region
        _
      $region24: #{_lambda_.13} parent=11 // pred_fallthru
        _
    $region12: #{_lambda_.13} parent=5 // pred_fallthru
      _
    %p230 = scmp.lt.s32.totalorder %s13, 2
    // Predicated region
    $region25: #{_lambda_.13} parent=5 // pred_check
      %p231 = pneg %p230
    $region26: #{_lambda_.13} parent=5 // pred_check_branch
      %233 = sbr.rel (%p231) target = $region28
    $region27: #{_lambda_.13} parent=5 // pred_region
      // Predicated region
      $region29: #{_lambda_.13} parent=27 // pred_check
        %p234 = pneg %p33
      $region30: #{_lambda_.13} parent=27 // pred_check_branch
        %236 = sbr.rel (%p234) target = $region32
      $region31: #{_lambda_.13} parent=27 // pred_region
        %p237 = scmp.lt.s32.totalorder %s13, 1
        %s238 = scalar_select %p237, %s13, 1
        %s239 = smul.addr %s238, 3
        %s240 = smul.addr %s239, 4
        %s241 = scalar_lea.vmem %s0, %s240
      $region32: #{_lambda_.13} parent=27 // pred_fallthru
        _
      // Predicated region
      $region33: #{_lambda_.13} parent=27 // pred_check
        %p242 = pneg %p59
      $region34: #{_lambda_.13} parent=27 // pred_check_branch
        %244 = sbr.rel (%p242) target = $region36
      $region35: #{_lambda_.13} parent=27 // pred_region
        %p245 = scmp.lt.s32.totalorder %s13, 1
        %s246 = scalar_select %p245, %s13, 1
        %s247 = smul.addr %s246, 3
        %s248 = smul.addr %s247, 4
        %s249 = scalar_lea.vmem %s1, %s248
      $region36: #{_lambda_.13} parent=27 // pred_fallthru
        _
      // Predicated region
      $region37: #{_lambda_.13} parent=27 // pred_check
        %p250 = pneg %p85
      $region38: #{_lambda_.13} parent=27 // pred_check_branch
        %252 = sbr.rel (%p250) target = $region40
      $region39: #{_lambda_.13} parent=27 // pred_region
        %p253 = scmp.lt.s32.totalorder %s13, 1
        %s254 = scalar_select %p253, %s13, 1
        %s255 = smul.addr %s254, 3
        %s256 = smul.addr %s255, 4
        %s257 = scalar_lea.vmem %s2, %s256
      $region40: #{_lambda_.13} parent=27 // pred_fallthru
        _
      // Predicated region
      $region41: #{_lambda_.13} parent=27 // pred_check
        %p258 = pneg %p111
      $region42: #{_lambda_.13} parent=27 // pred_check_branch
        %260 = sbr.rel (%p258) target = $region44
      $region43: #{_lambda_.13} parent=27 // pred_region
        %p261 = scmp.lt.s32.totalorder %s13, 1
        %s262 = scalar_select %p261, %s13, 1
        %s263 = smul.addr %s262, 3
        %s264 = smul.addr %s263, 4
        %s265 = scalar_lea.vmem %s3, %s264
      $region44: #{_lambda_.13} parent=27 // pred_fallthru
        _
    $region28: #{_lambda_.13} parent=5 // pred_fallthru
      _
    %p266 = scmp.le.s32.totalorder 1, %s13
    %p267 = scmp.lt.s32.totalorder %s13, 3
    %p268 = pnand %p266, %p267
    %p269 = pneg %p268
    // Predicated region
    $region45: #{_lambda_.13} parent=5 // pred_check
      _
    $region46: #{_lambda_.13} parent=5 // pred_check_branch
      %271 = sbr.rel (%p268) target = $region48
    $region47: #{_lambda_.13} parent=5 // pred_region
      %s272 = ssub.s32 %s13, 1
      %p273 = scmp.lt.s32.totalorder %s18, 1
      %s274 = scalar_select %p273, %s18, 1
      %s275 = smul.addr %s274, 3
      %s276 = smul.addr %s275, 4
      %s277 = scalar_lea.vmem %s0, %s276
      %p278 = pneg %p39
      %p279 = pneg %p36
      %p280 = scmp.lt.s32.totalorder %s18, 1
      %s281 = scalar_select %p280, %s18, 1
      %s282 = smul.addr %s281, 3
      %s283 = smul.addr %s282, 4
      %s284 = scalar_lea.vmem %s1, %s283
      %p285 = pneg %p65
      %p286 = pneg %p62
      %p287 = scmp.lt.s32.totalorder %s18, 1
      %s288 = scalar_select %p287, %s18, 1
      %s289 = smul.addr %s288, 3
      %s290 = smul.addr %s289, 4
      %s291 = scalar_lea.vmem %s2, %s290
      %p292 = pneg %p91
      %p293 = pneg %p88
      %p294 = scmp.lt.s32.totalorder %s18, 1
      %s295 = scalar_select %p294, %s18, 1
      %s296 = smul.addr %s295, 3
      %s297 = smul.addr %s296, 4
      %s298 = scalar_lea.vmem %s3, %s297
      %p299 = pneg %p117
      %p300 = pneg %p114
      %p301 = pneg %p138
      %p302 = pneg %p135
      %p303 = pneg %p159
      %p304 = pneg %p156
      %p305 = pneg %p180
      %p306 = pneg %p177
      %p307 = pneg %p206
      %p308 = pneg %p203
      %p309 = scmp.lt.s32.totalorder %s18, 1
      %s310 = scalar_select %p309, %s18, 1
      %s311 = smul.addr %s310, 3
      %s312 = smul.addr %s311, 4
      %s313 = scalar_lea.vmem %s7, %s312
      %p314 = scmp.lt.s32.totalorder %s18, 1
      %s315 = scalar_select %p314, %s18, 1
      %s316 = smul.addr %s315, 3
      %s317 = smul.addr %s316, 4
      %s318 = scalar_lea.vmem %s0, %s317
      %p319 = scmp.lt.s32.totalorder %s18, 1
      %s320 = scalar_select %p319, %s18, 1
      %s321 = smul.addr %s320, 3
      %s322 = smul.addr %s321, 4
      %s323 = scalar_lea.vmem %s1, %s322
      %p324 = scmp.lt.s32.totalorder %s18, 1
      %s325 = scalar_select %p324, %s18, 1
      %s326 = smul.addr %s325, 3
      %s327 = smul.addr %s326, 4
      %s328 = scalar_lea.vmem %s2, %s327
      %p329 = scmp.lt.s32.totalorder %s18, 1
      %s330 = scalar_select %p329, %s18, 1
      %s331 = smul.addr %s330, 3
      %s332 = smul.addr %s331, 4
      %s333 = scalar_lea.vmem %s3, %s332
      %p334 = scmp.lt.s32.totalorder %s18, 1
      %s335 = scalar_select %p334, %s18, 1
      %s336 = smul.addr %s335, 3
      %s337 = smul.addr %s336, 4
      %s338 = scalar_lea.vmem %s7, %s337
      %v340 = vld [vmem:[%s4] sm:$0xf]
      %v341 = vld [vmem:[%s318] sm:$0xff]
      %v342 = vld [vmem:[%s318 + $0x8] sm:$0xf]
      %s343 = scalar_lea.vmem %s4, 4
      %v344 = vld [vmem:[%s343] sm:$0xf]
      %v345 = vld [vmem:[%s323] sm:$0xff]
      %v346 = vld [vmem:[%s323 + $0x8] sm:$0xf]
      %v349 = vunpack.c.l.b16 %v345
      %v350 = vunpack.c.h.b16 %v345
      %v351 = vunpack.c.l.b16 %v346
      %v352 = vpack.c.b16 %v349, %v349
      %v353 = vpack.c.b16 %v350, %v350
      %v354 = vpack.c.b16 %v351, %v351
      %vm355 = vcmask 64512
      %v357 = vsel %vm355, %v344, 0
      %vm359 = vcmask 1043456
      %v361 = vsel %vm359, %v352, 0
      %v364 = vsel %vm359, %v353, 0
      %v367 = vsel %vm359, %v354, 0
      %369 = vmatprep.subr.bf16.mxu0 %v364
      %370 = vmatpush1.bf16.msra.mxu0 %v361
      %371 = vmatprep.subr.bf16.mxu0 0
      %372 = vmatpush1.bf16.msra.mxu0 0
      %373 = vmatprep.subr.bf16.mxu0 0
      %374 = vmatpush1.bf16.msra.mxu0 0
      %375 = vmatprep.subr.bf16.mxu0 0
      %376 = vmatpush1.bf16.msra.mxu0 0
      %377 = vmatprep.subr.bf16.mxu0 0
      %378 = vmatpush1.bf16.msra.mxu0 0
      %379 = vmatprep.subr.bf16.mxu0 0
      %380 = vmatpush1.bf16.msra.mxu0 0
      %381 = vmatprep.subr.bf16.mxu0 0
      %382 = vmatpush1.bf16.msra.mxu0 0
      %383 = vmatprep.subr.bf16.mxu0 0
      %384 = vmatpush1.bf16.msra.mxu0 0
      %385 = vmatprep.subr.bf16.mxu0 0
      %386 = vmatpush1.bf16.msra.mxu0 0
      %387 = vmatprep.subr.bf16.mxu0 0
      %388 = vmatpush1.bf16.msra.mxu0 0
      %389 = vmatprep.subr.bf16.mxu0 0
      %390 = vmatpush1.bf16.msra.mxu0 0
      %391 = vmatprep.subr.bf16.mxu0 0
      %392 = vmatpush1.bf16.msra.mxu0 0
      %393 = vmatprep.subr.bf16.mxu0 0
      %394 = vmatpush1.bf16.msra.mxu0 0
      %395 = vmatprep.subr.bf16.mxu0 0
      %396 = vmatpush1.bf16.msra.mxu0 0
      %397 = vmatprep.subr.bf16.mxu0 0
      %398 = vmatpush1.bf16.msra.mxu0 0
      %399 = vmatprep.subr.bf16.mxu0 0
      %400 = vmatpush1.bf16.msra.mxu0 0
      %401 = vmatprep.mubr.bf16.mxu0 0
      %402 = vmatmul.mubr.bf16.gmra.mrb[0].mxu0 %v357
      %v403 = vpop.f32.mrb[0].mxu0
      %v404 = vadd.f32 0.0, %v403
      %v405 = vpop.f32.mrb[0].mxu0
      %v406 = vadd.f32 0.0, %v405
      %v407 = vpop.f32.mrb[0].mxu0
      %v408 = vpop.f32.mrb[0].mxu0
      %409 = vdwg.mxu0
      %410 = vmatprep.subr.bf16.mxu0 0
      %411 = vmatpush1.bf16.msra.mxu0 %v367
      %412 = vmatprep.subr.bf16.mxu0 0
      %413 = vmatpush1.bf16.msra.mxu0 0
      %414 = vmatprep.subr.bf16.mxu0 0
      %415 = vmatpush1.bf16.msra.mxu0 0
      %416 = vmatprep.subr.bf16.mxu0 0
      %417 = vmatpush1.bf16.msra.mxu0 0
      %418 = vmatprep.subr.bf16.mxu0 0
      %419 = vmatpush1.bf16.msra.mxu0 0
      %420 = vmatprep.subr.bf16.mxu0 0
      %421 = vmatpush1.bf16.msra.mxu0 0
      %422 = vmatprep.subr.bf16.mxu0 0
      %423 = vmatpush1.bf16.msra.mxu0 0
      %424 = vmatprep.subr.bf16.mxu0 0
      %425 = vmatpush1.bf16.msra.mxu0 0
      %426 = vmatprep.subr.bf16.mxu0 0
      %427 = vmatpush1.bf16.msra.mxu0 0
      %428 = vmatprep.subr.bf16.mxu0 0
      %429 = vmatpush1.bf16.msra.mxu0 0
      %430 = vmatprep.subr.bf16.mxu0 0
      %431 = vmatpush1.bf16.msra.mxu0 0
      %432 = vmatprep.subr.bf16.mxu0 0
      %433 = vmatpush1.bf16.msra.mxu0 0
      %434 = vmatprep.subr.bf16.mxu0 0
      %435 = vmatpush1.bf16.msra.mxu0 0
      %436 = vmatprep.subr.bf16.mxu0 0
      %437 = vmatpush1.bf16.msra.mxu0 0
      %438 = vmatprep.subr.bf16.mxu0 0
      %439 = vmatpush1.bf16.msra.mxu0 0
      %440 = vmatprep.subr.bf16.mxu0 0
      %441 = vmatpush1.bf16.msra.mxu0 0
      %442 = vmatprep.mubr.bf16.mxu0 0
      %443 = vmatmul.mubr.bf16.gmra.mrb[0].mxu0 %v357
      %v444 = vpop.f32.mrb[0].mxu0
      %v445 = vadd.f32 0.0, %v444
      %v446 = vpop.f32.mrb[0].mxu0
      %v447 = vpop.f32.mrb[0].mxu0
      %v448 = vpop.f32.mrb[0].mxu0
      %449 = vdwg.mxu0
      %v452 = vunpack.c.l.b16 %v341
      %v453 = vunpack.c.h.b16 %v341
      %v454 = vunpack.c.l.b16 %v342
      %v455 = vpack.c.b16 %v452, %v452
      %v456 = vpack.c.b16 %v453, %v453
      %v457 = vpack.c.b16 %v454, %v454
      %v459 = vsel %vm355, %v340, 0
      %v462 = vsel %vm359, %v455, 0
      %v465 = vsel %vm359, %v456, 0
      %v468 = vsel %vm359, %v457, 0
      %470 = vmatprep.subr.bf16.mxu0 %v465
      %471 = vmatpush1.bf16.msra.mxu0 %v462
      %472 = vmatprep.subr.bf16.mxu0 0
      %473 = vmatpush1.bf16.msra.mxu0 0
      %474 = vmatprep.subr.bf16.mxu0 0
      %475 = vmatpush1.bf16.msra.mxu0 0
      %476 = vmatprep.subr.bf16.mxu0 0
      %477 = vmatpush1.bf16.msra.mxu0 0
      %478 = vmatprep.subr.bf16.mxu0 0
      %479 = vmatpush1.bf16.msra.mxu0 0
      %480 = vmatprep.subr.bf16.mxu0 0
      %481 = vmatpush1.bf16.msra.mxu0 0
      %482 = vmatprep.subr.bf16.mxu0 0
      %483 = vmatpush1.bf16.msra.mxu0 0
      %484 = vmatprep.subr.bf16.mxu0 0
      %485 = vmatpush1.bf16.msra.mxu0 0
      %486 = vmatprep.subr.bf16.mxu0 0
      %487 = vmatpush1.bf16.msra.mxu0 0
      %488 = vmatprep.subr.bf16.mxu0 0
      %489 = vmatpush1.bf16.msra.mxu0 0
      %490 = vmatprep.subr.bf16.mxu0 0
      %491 = vmatpush1.bf16.msra.mxu0 0
      %492 = vmatprep.subr.bf16.mxu0 0
      %493 = vmatpush1.bf16.msra.mxu0 0
      %494 = vmatprep.subr.bf16.mxu0 0
      %495 = vmatpush1.bf16.msra.mxu0 0
      %496 = vmatprep.subr.bf16.mxu0 0
      %497 = vmatpush1.bf16.msra.mxu0 0
      %498 = vmatprep.subr.bf16.mxu0 0
      %499 = vmatpush1.bf16.msra.mxu0 0
      %500 = vmatprep.subr.bf16.mxu0 0
      %501 = vmatpush1.bf16.msra.mxu0 0
      %502 = vmatprep.mubr.bf16.mxu0 0
      %503 = vmatmul.mubr.bf16.gmra.mrb[0].mxu0 %v459
      %v504 = vpop.f32.mrb[0].mxu0
      %v505 = vadd.f32 %v404, %v504
      %v506 = vpop.f32.mrb[0].mxu0
      %v507 = vadd.f32 %v406, %v506
      %v508 = vpop.f32.mrb[0].mxu0
      %v509 = vpop.f32.mrb[0].mxu0
      %510 = vdwg.mxu0
      %511 = vmatprep.subr.bf16.mxu0 0
      %512 = vmatpush1.bf16.msra.mxu0 %v468
      %513 = vmatprep.subr.bf16.mxu0 0
      %514 = vmatpush1.bf16.msra.mxu0 0
      %515 = vmatprep.subr.bf16.mxu0 0
      %516 = vmatpush1.bf16.msra.mxu0 0
      %517 = vmatprep.subr.bf16.mxu0 0
      %518 = vmatpush1.bf16.msra.mxu0 0
      %519 = vmatprep.subr.bf16.mxu0 0
      %520 = vmatpush1.bf16.msra.mxu0 0
      %521 = vmatprep.subr.bf16.mxu0 0
      %522 = vmatpush1.bf16.msra.mxu0 0
      %523 = vmatprep.subr.bf16.mxu0 0
      %524 = vmatpush1.bf16.msra.mxu0 0
      %525 = vmatprep.subr.bf16.mxu0 0
      %526 = vmatpush1.bf16.msra.mxu0 0
      %527 = vmatprep.subr.bf16.mxu0 0
      %528 = vmatpush1.bf16.msra.mxu0 0
      %529 = vmatprep.subr.bf16.mxu0 0
      %530 = vmatpush1.bf16.msra.mxu0 0
      %531 = vmatprep.subr.bf16.mxu0 0
      %532 = vmatpush1.bf16.msra.mxu0 0
      %533 = vmatprep.subr.bf16.mxu0 0
      %534 = vmatpush1.bf16.msra.mxu0 0
      %535 = vmatprep.subr.bf16.mxu0 0
      %536 = vmatpush1.bf16.msra.mxu0 0
      %537 = vmatprep.subr.bf16.mxu0 0
      %538 = vmatpush1.bf16.msra.mxu0 0
      %539 = vmatprep.subr.bf16.mxu0 0
      %540 = vmatpush1.bf16.msra.mxu0 0
      %541 = vmatprep.subr.bf16.mxu0 0
      %542 = vmatpush1.bf16.msra.mxu0 0
      %543 = vmatprep.mubr.bf16.mxu0 0
      %544 = vmatmul.mubr.bf16.gmra.mrb[0].mxu0 %v459
      %v545 = vpop.f32.mrb[0].mxu0
      %v546 = vadd.f32 %v445, %v545
      %v547 = vpop.f32.mrb[0].mxu0
      %v548 = vpop.f32.mrb[0].mxu0
      %v549 = vpop.f32.mrb[0].mxu0
      %550 = vdwg.mxu0
      %s551 = scalar_lea.vmem %s4, 8
      %v552 = vld [vmem:[%s551] sm:$0xf]
      %v553 = vld [vmem:[%s328] sm:$0xff]
      %v554 = vld [vmem:[%s328 + $0x8] sm:$0xf]
      %v557 = vunpack.c.l.b16 %v553
      %v558 = vunpack.c.h.b16 %v553
      %v559 = vunpack.c.l.b16 %v554
      %v560 = vpack.c.b16 %v557, %v557
      %v561 = vpack.c.b16 %v558, %v558
      %v562 = vpack.c.b16 %v559, %v559
      %v564 = vsel %vm355, %v552, 0
      %v567 = vsel %vm359, %v560, 0
      %v570 = vsel %vm359, %v561, 0
      %v573 = vsel %vm359, %v562, 0
      %575 = vmatprep.subr.bf16.mxu0 %v570
      %576 = vmatpush1.bf16.msra.mxu0 %v567
      %577 = vmatprep.subr.bf16.mxu0 0
      %578 = vmatpush1.bf16.msra.mxu0 0
      %579 = vmatprep.subr.bf16.mxu0 0
      %580 = vmatpush1.bf16.msra.mxu0 0
      %581 = vmatprep.subr.bf16.mxu0 0
      %582 = vmatpush1.bf16.msra.mxu0 0
      %583 = vmatprep.subr.bf16.mxu0 0
      %584 = vmatpush1.bf16.msra.mxu0 0
      %585 = vmatprep.subr.bf16.mxu0 0
      %586 = vmatpush1.bf16.msra.mxu0 0
      %587 = vmatprep.subr.bf16.mxu0 0
      %588 = vmatpush1.bf16.msra.mxu0 0
      %589 = vmatprep.subr.bf16.mxu0 0
      %590 = vmatpush1.bf16.msra.mxu0 0
      %591 = vmatprep.subr.bf16.mxu0 0
      %592 = vmatpush1.bf16.msra.mxu0 0
      %593 = vmatprep.subr.bf16.mxu0 0
      %594 = vmatpush1.bf16.msra.mxu0 0
      %595 = vmatprep.subr.bf16.mxu0 0
      %596 = vmatpush1.bf16.msra.mxu0 0
      %597 = vmatprep.subr.bf16.mxu0 0
      %598 = vmatpush1.bf16.msra.mxu0 0
      %599 = vmatprep.subr.bf16.mxu0 0
      %600 = vmatpush1.bf16.msra.mxu0 0
      %601 = vmatprep.subr.bf16.mxu0 0
      %602 = vmatpush1.bf16.msra.mxu0 0
      %603 = vmatprep.subr.bf16.mxu0 0
      %604 = vmatpush1.bf16.msra.mxu0 0
      %605 = vmatprep.subr.bf16.mxu0 0
      %606 = vmatpush1.bf16.msra.mxu0 0
      %607 = vmatprep.mubr.bf16.mxu0 0
      %608 = vmatmul.mubr.bf16.gmra.mrb[0].mxu0 %v564
      %v609 = vpop.f32.mrb[0].mxu0
      %v610 = vadd.f32 0.0, %v609
      %v611 = vpop.f32.mrb[0].mxu0
      %v612 = vadd.f32 0.0, %v611
      %v613 = vpop.f32.mrb[0].mxu0
      %v614 = vpop.f32.mrb[0].mxu0
      %615 = vdwg.mxu0
      %616 = vmatprep.subr.bf16.mxu0 0
      %617 = vmatpush1.bf16.msra.mxu0 %v573
      %618 = vmatprep.subr.bf16.mxu0 0
      %619 = vmatpush1.bf16.msra.mxu0 0
      %620 = vmatprep.subr.bf16.mxu0 0
      %621 = vmatpush1.bf16.msra.mxu0 0
      %622 = vmatprep.subr.bf16.mxu0 0
      %623 = vmatpush1.bf16.msra.mxu0 0
      %624 = vmatprep.subr.bf16.mxu0 0
      %625 = vmatpush1.bf16.msra.mxu0 0
      %626 = vmatprep.subr.bf16.mxu0 0
      %627 = vmatpush1.bf16.msra.mxu0 0
      %628 = vmatprep.subr.bf16.mxu0 0
      %629 = vmatpush1.bf16.msra.mxu0 0
      %630 = vmatprep.subr.bf16.mxu0 0
      %631 = vmatpush1.bf16.msra.mxu0 0
      %632 = vmatprep.subr.bf16.mxu0 0
      %633 = vmatpush1.bf16.msra.mxu0 0
      %634 = vmatprep.subr.bf16.mxu0 0
      %635 = vmatpush1.bf16.msra.mxu0 0
      %636 = vmatprep.subr.bf16.mxu0 0
      %637 = vmatpush1.bf16.msra.mxu0 0
      %638 = vmatprep.subr.bf16.mxu0 0
      %639 = vmatpush1.bf16.msra.mxu0 0
      %640 = vmatprep.subr.bf16.mxu0 0
      %641 = vmatpush1.bf16.msra.mxu0 0
      %642 = vmatprep.subr.bf16.mxu0 0
      %643 = vmatpush1.bf16.msra.mxu0 0
      %644 = vmatprep.subr.bf16.mxu0 0
      %645 = vmatpush1.bf16.msra.mxu0 0
      %646 = vmatprep.subr.bf16.mxu0 0
      %647 = vmatpush1.bf16.msra.mxu0 0
      %648 = vmatprep.mubr.bf16.mxu0 0
      %649 = vmatmul.mubr.bf16.gmra.mrb[0].mxu0 %v564
      %v650 = vpop.f32.mrb[0].mxu0
      %v651 = vadd.f32 0.0, %v650
      %v652 = vpop.f32.mrb[0].mxu0
      %v653 = vpop.f32.mrb[0].mxu0
      %v654 = vpop.f32.mrb[0].mxu0
      %655 = vdwg.mxu0
      %v656 = vadd.f32 %v505, %v610
      %v657 = vadd.f32 %v507, %v612
      %v658 = vadd.f32 %v546, %v651
      %s659 = scalar_lea.vmem %s4, 12
      %v660 = vld [vmem:[%s659] sm:$0xf]
      %v661 = vld [vmem:[%s333] sm:$0xff]
      %v662 = vld [vmem:[%s333 + $0x8] sm:$0xf]
      %v665 = vunpack.c.l.b16 %v661
      %v666 = vunpack.c.h.b16 %v661
      %v667 = vunpack.c.l.b16 %v662
      %v668 = vpack.c.b16 %v665, %v665
      %v669 = vpack.c.b16 %v666, %v666
      %v670 = vpack.c.b16 %v667, %v667
      %v672 = vsel %vm355, %v660, 0
      %v675 = vsel %vm359, %v668, 0
      %v678 = vsel %vm359, %v669, 0
      %v681 = vsel %vm359, %v670, 0
      %683 = vmatprep.subr.bf16.mxu0 %v678
      %684 = vmatpush1.bf16.msra.mxu0 %v675
      %685 = vmatprep.subr.bf16.mxu0 0
      %686 = vmatpush1.bf16.msra.mxu0 0
      %687 = vmatprep.subr.bf16.mxu0 0
      %688 = vmatpush1.bf16.msra.mxu0 0
      %689 = vmatprep.subr.bf16.mxu0 0
      %690 = vmatpush1.bf16.msra.mxu0 0
      %691 = vmatprep.subr.bf16.mxu0 0
      %692 = vmatpush1.bf16.msra.mxu0 0
      %693 = vmatprep.subr.bf16.mxu0 0
      %694 = vmatpush1.bf16.msra.mxu0 0
      %695 = vmatprep.subr.bf16.mxu0 0
      %696 = vmatpush1.bf16.msra.mxu0 0
      %697 = vmatprep.subr.bf16.mxu0 0
      %698 = vmatpush1.bf16.msra.mxu0 0
      %699 = vmatprep.subr.bf16.mxu0 0
      %700 = vmatpush1.bf16.msra.mxu0 0
      %701 = vmatprep.subr.bf16.mxu0 0
      %702 = vmatpush1.bf16.msra.mxu0 0
      %703 = vmatprep.subr.bf16.mxu0 0
      %704 = vmatpush1.bf16.msra.mxu0 0
      %705 = vmatprep.subr.bf16.mxu0 0
      %706 = vmatpush1.bf16.msra.mxu0 0
      %707 = vmatprep.subr.bf16.mxu0 0
      %708 = vmatpush1.bf16.msra.mxu0 0
      %709 = vmatprep.subr.bf16.mxu0 0
      %710 = vmatpush1.bf16.msra.mxu0 0
      %711 = vmatprep.subr.bf16.mxu0 0
      %712 = vmatpush1.bf16.msra.mxu0 0
      %713 = vmatprep.subr.bf16.mxu0 0
      %714 = vmatpush1.bf16.msra.mxu0 0
      %715 = vmatprep.mubr.bf16.mxu0 0
      %716 = vmatmul.mubr.bf16.gmra.mrb[0].mxu0 %v672
      %v717 = vpop.f32.mrb[0].mxu0
      %v718 = vadd.f32 0.0, %v717
      %v719 = vpop.f32.mrb[0].mxu0
      %v720 = vadd.f32 0.0, %v719
      %v721 = vpop.f32.mrb[0].mxu0
      %v722 = vpop.f32.mrb[0].mxu0
      %723 = vdwg.mxu0
      %724 = vmatprep.subr.bf16.mxu0 0
      %725 = vmatpush1.bf16.msra.mxu0 %v681
      %726 = vmatprep.subr.bf16.mxu0 0
      %727 = vmatpush1.bf16.msra.mxu0 0
      %728 = vmatprep.subr.bf16.mxu0 0
      %729 = vmatpush1.bf16.msra.mxu0 0
      %730 = vmatprep.subr.bf16.mxu0 0
      %731 = vmatpush1.bf16.msra.mxu0 0
      %732 = vmatprep.subr.bf16.mxu0 0
      %733 = vmatpush1.bf16.msra.mxu0 0
      %734 = vmatprep.subr.bf16.mxu0 0
      %735 = vmatpush1.bf16.msra.mxu0 0
      %736 = vmatprep.subr.bf16.mxu0 0
      %737 = vmatpush1.bf16.msra.mxu0 0
      %738 = vmatprep.subr.bf16.mxu0 0
      %739 = vmatpush1.bf16.msra.mxu0 0
      %740 = vmatprep.subr.bf16.mxu0 0
      %741 = vmatpush1.bf16.msra.mxu0 0
      %742 = vmatprep.subr.bf16.mxu0 0
      %743 = vmatpush1.bf16.msra.mxu0 0
      %744 = vmatprep.subr.bf16.mxu0 0
      %745 = vmatpush1.bf16.msra.mxu0 0
      %746 = vmatprep.subr.bf16.mxu0 0
      %747 = vmatpush1.bf16.msra.mxu0 0
      %748 = vmatprep.subr.bf16.mxu0 0
      %749 = vmatpush1.bf16.msra.mxu0 0
      %750 = vmatprep.subr.bf16.mxu0 0
      %751 = vmatpush1.bf16.msra.mxu0 0
      %752 = vmatprep.subr.bf16.mxu0 0
      %753 = vmatpush1.bf16.msra.mxu0 0
      %754 = vmatprep.subr.bf16.mxu0 0
      %755 = vmatpush1.bf16.msra.mxu0 0
      %756 = vmatprep.mubr.bf16.mxu0 0
      %757 = vmatmul.mubr.bf16.gmra.mrb[0].mxu0 %v672
      %v758 = vpop.f32.mrb[0].mxu0
      %v759 = vadd.f32 0.0, %v758
      %v760 = vpop.f32.mrb[0].mxu0
      %v761 = vpop.f32.mrb[0].mxu0
      %v762 = vpop.f32.mrb[0].mxu0
      %763 = vdwg.mxu0
      %v764 = vadd.f32 %v656, %v718
      %v765 = vadd.f32 %v657, %v720
      %v766 = vadd.f32 %v658, %v759
      %v767 = vld [vmem:[%s5] sm:$0xff]
      %769 = vset.pattern.permute.xlu0 0
      %770 = vperm.xlu0 %769, %v767
      %v771 = vpop.permute.xlu0 %770
      %v773 = vadd.f32 %v764, %v771
      %v774 = vadd.f32 %v765, %v771
      %v775 = vadd.f32 %v766, %v771
      %vm776 = vcmp.gt.f32.partialorder %v773, 0.0
      %vm777 = vcmp.gt.f32.partialorder %v774, 0.0
      %vm778 = vcmp.gt.f32.partialorder %v775, 0.0
      %v779 = vmul.f32 %v773, 0.2
      %v780 = vmul.f32 %v774, 0.2
      %v781 = vmul.f32 %v775, 0.2
      %v782 = vsel %vm776, %v773, %v779
      %v783 = vsel %vm777, %v774, %v780
      %v784 = vsel %vm778, %v775, %v781
      %v785 = vld [vmem:[%s6] sm:$0x7]
      %v787 = vlaneseq
      %v788 = vshrl.u32 %v787, 7
      %v789 = vsub.s32 0, %v788
      %v790 = vrot.slane %v785, %v789
      %v791 = vlaneseq
      %v792 = vshrl.u32 %v791, 7
      %v793 = vsub.s32 1, %v792
      %v794 = vrot.slane %v785, %v793
      %v795 = vlaneseq
      %v796 = vshrl.u32 %v795, 7
      %v797 = vsub.s32 2, %v796
      %v798 = vrot.slane %v785, %v797
      %v802 = vmul.f32 %v782, %v790
      %v803 = vmul.f32 %v783, %v794
      %v804 = vmul.f32 %v784, %v798
      %v805 = vpack.c.bf16 %v802, %v802
      %v806 = vpack.c.bf16 %v803, %v803
      %v807 = vpack.c.bf16 %v804, %v804
      %v811 = vunpack.c.l.b16 %v805
      %v812 = vunpack.c.l.b16 %v806
      %v813 = vunpack.c.l.b16 %v807
      %v814 = vpack.c.b16 %v812, %v811
      %v815 = vpack.c.b16 %v813, %v813
      %818 = vst [vmem:[%s338] sm:$0xff] %v814
      %vm819 = vcmask 551936
      %820 = vst.msk [vmem:[%s338 + $0x8] sm:$0xf] %vm819, %v815
      %p821 = scmp.lt.s32.totalorder %s18, 1
      %s822 = scalar_select %p821, %s18, 1
      %s823 = smul.addr %s822, 3
      %s824 = smul.addr %s823, 4
      %s825 = scalar_lea.vmem %s7, %s824
      // Predicated region
      $region49: #{_lambda_.13} parent=47 // pred_check
        %p826 = pneg %p203
      $region50: #{_lambda_.13} parent=47 // pred_check_branch
        %828 = sbr.rel (%p826) target = $region52
      $region51: #{_lambda_.13} parent=47 // pred_region
        _
      $region52: #{_lambda_.13} parent=47 // pred_fallthru
        _
    $region48: #{_lambda_.13} parent=5 // pred_fallthru
      _
    %p829 = scmp.le.s32.totalorder 2, %s13
    // Predicated region
    $region53: #{_lambda_.13} parent=5 // pred_check
      %p830 = pneg %p829
    $region54: #{_lambda_.13} parent=5 // pred_check_branch
      %832 = sbr.rel (%p830) target = $region56
    $region55: #{_lambda_.13} parent=5 // pred_region
      %s833 = ssub.s32 %s13, 2
      // Predicated region
      $region57: #{_lambda_.13} parent=55 // pred_check
        %p834 = pneg %p209
      $region58: #{_lambda_.13} parent=55 // pred_check_branch
        %836 = sbr.rel (%p834) target = $region60
      $region59: #{_lambda_.13} parent=55 // pred_region
        %p837 = scmp.lt.s32.totalorder %s19, 1
        %s838 = scalar_select %p837, %s19, 1
        %s839 = smul.addr %s838, 3
        %s840 = smul.addr %s839, 4
        %s841 = scalar_lea.vmem %s7, %s840
      $region60: #{_lambda_.13} parent=55 // pred_fallthru
        _
    $region56: #{_lambda_.13} parent=5 // pred_fallthru
      _
  $region6: #{_lambda_.13} parent=0 // loop_footer
    %s17 = sadd.s32 1, %s13
  $region7: #{_lambda_.13} parent=0 // loop_footer_branch
    %12 = sbr.rel target = $region3
  $region8: #{_lambda_.13} parent=0 // loop_exit
    _

// kernel: _lambda_.8
$region0: #{_lambda_.8}
  #allocation0 [shape = 'u32[]', space=smem, size = 0x4, offset = 0x4, fixed_abs, tag = 'smem constant byte address 0x4 - core index']
  #allocation1 [shape = 'u32[144,128]{1,0:T(1,128)}', space=vmem, size = 0x12000, scoped, tag = 'internal scratch']
  #allocation2 [shape = 'bf16[8,324]{1,0:T(8,128)(2,1)}', space=vmem, size = 0x1800, scoped, tag = 'scratch operand']
  %s0 = inlined_call_operand.vmem [shape: bf16[2,8,324], index: 0, kind: input, shape index: {}]
  %s1 = inlined_call_operand.vmem [shape: bf16[9,8,8], index: 1, kind: input, shape index: {}]
  %s2 = inlined_call_operand.vmem [shape: f32[8,1], index: 2, kind: input, shape index: {}]
  %s3 = inlined_call_operand.vmem [shape: bf16[9,8,8], index: 3, kind: input, shape index: {}]
  %s4 = inlined_call_operand.vmem [shape: f32[8,1], index: 4, kind: input, shape index: {}]
  %s5 = inlined_call_operand.vmem [shape: f32[1,286], index: 5, kind: input, shape index: {}]
  %s6 = inlined_call_operand.vmem [shape: bf16[2,8,324], index: 6, kind: output, shape index: {}]
  %s7 = sld [smem:[#allocation0]]
  $region57: #{_lambda_.8} parent=0
    _
  %s9 = ssub.s32 1, %s7
  %s10 = scalar_select 0, %s9, %s7
  loop: start=0, step=1, limit=4
  $region2: #{_lambda_.8} parent=0 // loop_pre_header
    _
  $region3: #{_lambda_.8} parent=0 // loop_header
    %s12 = sphi 0, %s16
    %p13 = scmp.ge.s32.totalorder %s12, 4
    %s22 = sphi 0, %s24
    %s25 = sphi 0, %s22
    %s26 = sphi 0, %s25
    %s42 = sphi 0, %s26
    %s46 = sphi 0, %s46
    %s48 = sphi 0, %s46
    %s49 = sphi 0, %s48
    %s63 = sphi 0, %s49
    %s67 = sphi 0, %s67
    %s69 = sphi 0, %s67
    %s70 = sphi 0, %s69
    %s84 = sphi 0, %s70
    %s88 = sphi 0, %s88
    %s90 = sphi 0, %s88
    %s91 = sphi 0, %s90
    %s105 = sphi 0, %s91
    %s109 = sphi 0, %s109
    %s111 = sphi 0, %s109
    %s112 = sphi 0, %s111
    %s126 = sphi 0, %s112
    %s130 = sphi 0, %s130
    %s132 = sphi 0, %s130
    %s133 = sphi 0, %s132
    %s147 = sphi 0, %s133
    %s153 = sphi 0, %s155
    %s156 = sphi 0, %s153
    %s157 = sphi 0, %s156
    %s173 = sphi 0, %s157
  $region4: #{_lambda_.8} parent=0 // loop_header_branch
    %15 = sbr.rel (%p13) target = $region8
  $region5: #{_lambda_.8} parent=0 // loop_body
    %s17 = ssub.s32 %s12, 1
    %s18 = ssub.s32 %s12, 2
    %s19 = sadd.s32 %s12, 1
    %s20 = ssub.s32 %s12, %s19
    %p21 = scmp.eq.s32.totalorder %s20, 0
    %s23 = sadd.s32 %s22, 1
    %s24 = scalar_select %p21, %s22, %s23
    %p27 = pneg %p21
    %p28 = scmp.eq.s32.totalorder %s12, 1
    %p29 = por %p27, %p28
    %p30 = scmp.ne.s32.totalorder %s22, %s25
    %p31 = scmp.eq.s32.totalorder %s12, 0
    %p32 = por %p30, %p31
    %p33 = scmp.ne.s32.totalorder %s22, %s25
    %p34 = scmp.eq.s32.totalorder %s17, 1
    %p35 = por %p33, %p34
    %p36 = scmp.ne.s32.totalorder %s25, %s26
    %p37 = scmp.eq.s32.totalorder %s17, 0
    %p38 = por %p36, %p37
    %p39 = scmp.ne.s32.totalorder %s25, %s26
    %p40 = scmp.eq.s32.totalorder %s18, 1
    %p41 = por %p39, %p40
    %p43 = scmp.ne.s32.totalorder %s26, %s42
    %p44 = scmp.eq.s32.totalorder %s18, 0
    %p45 = por %p43, %p44
    %s47 = sadd.s32 %s46, 1
    %p50 = scmp.eq.s32.totalorder %s12, 1
    %p51 = scmp.ne.s32.totalorder %s46, %s48
    %p52 = scmp.eq.s32.totalorder %s12, 0
    %p53 = por %p51, %p52
    %p54 = scmp.ne.s32.totalorder %s46, %s48
    %p55 = scmp.eq.s32.totalorder %s17, 1
    %p56 = por %p54, %p55
    %p57 = scmp.ne.s32.totalorder %s48, %s49
    %p58 = scmp.eq.s32.totalorder %s17, 0
    %p59 = por %p57, %p58
    %p60 = scmp.ne.s32.totalorder %s48, %s49
    %p61 = scmp.eq.s32.totalorder %s18, 1
    %p62 = por %p60, %p61
    %p64 = scmp.ne.s32.totalorder %s49, %s63
    %p65 = scmp.eq.s32.totalorder %s18, 0
    %p66 = por %p64, %p65
    %s68 = sadd.s32 %s67, 1
    %p71 = scmp.eq.s32.totalorder %s12, 1
    %p72 = scmp.ne.s32.totalorder %s67, %s69
    %p73 = scmp.eq.s32.totalorder %s12, 0
    %p74 = por %p72, %p73
    %p75 = scmp.ne.s32.totalorder %s67, %s69
    %p76 = scmp.eq.s32.totalorder %s17, 1
    %p77 = por %p75, %p76
    %p78 = scmp.ne.s32.totalorder %s69, %s70
    %p79 = scmp.eq.s32.totalorder %s17, 0
    %p80 = por %p78, %p79
    %p81 = scmp.ne.s32.totalorder %s69, %s70
    %p82 = scmp.eq.s32.totalorder %s18, 1
    %p83 = por %p81, %p82
    %p85 = scmp.ne.s32.totalorder %s70, %s84
    %p86 = scmp.eq.s32.totalorder %s18, 0
    %p87 = por %p85, %p86
    %s89 = sadd.s32 %s88, 1
    %p92 = scmp.eq.s32.totalorder %s12, 1
    %p93 = scmp.ne.s32.totalorder %s88, %s90
    %p94 = scmp.eq.s32.totalorder %s12, 0
    %p95 = por %p93, %p94
    %p96 = scmp.ne.s32.totalorder %s88, %s90
    %p97 = scmp.eq.s32.totalorder %s17, 1
    %p98 = por %p96, %p97
    %p99 = scmp.ne.s32.totalorder %s90, %s91
    %p100 = scmp.eq.s32.totalorder %s17, 0
    %p101 = por %p99, %p100
    %p102 = scmp.ne.s32.totalorder %s90, %s91
    %p103 = scmp.eq.s32.totalorder %s18, 1
    %p104 = por %p102, %p103
    %p106 = scmp.ne.s32.totalorder %s91, %s105
    %p107 = scmp.eq.s32.totalorder %s18, 0
    %p108 = por %p106, %p107
    %s110 = sadd.s32 %s109, 1
    %p113 = scmp.eq.s32.totalorder %s12, 1
    %p114 = scmp.ne.s32.totalorder %s109, %s111
    %p115 = scmp.eq.s32.totalorder %s12, 0
    %p116 = por %p114, %p115
    %p117 = scmp.ne.s32.totalorder %s109, %s111
    %p118 = scmp.eq.s32.totalorder %s17, 1
    %p119 = por %p117, %p118
    %p120 = scmp.ne.s32.totalorder %s111, %s112
    %p121 = scmp.eq.s32.totalorder %s17, 0
    %p122 = por %p120, %p121
    %p123 = scmp.ne.s32.totalorder %s111, %s112
    %p124 = scmp.eq.s32.totalorder %s18, 1
    %p125 = por %p123, %p124
    %p127 = scmp.ne.s32.totalorder %s112, %s126
    %p128 = scmp.eq.s32.totalorder %s18, 0
    %p129 = por %p127, %p128
    %s131 = sadd.s32 %s130, 1
    %p134 = scmp.eq.s32.totalorder %s12, 1
    %p135 = scmp.ne.s32.totalorder %s130, %s132
    %p136 = scmp.eq.s32.totalorder %s12, 0
    %p137 = por %p135, %p136
    %p138 = scmp.ne.s32.totalorder %s130, %s132
    %p139 = scmp.eq.s32.totalorder %s17, 1
    %p140 = por %p138, %p139
    %p141 = scmp.ne.s32.totalorder %s132, %s133
    %p142 = scmp.eq.s32.totalorder %s17, 0
    %p143 = por %p141, %p142
    %p144 = scmp.ne.s32.totalorder %s132, %s133
    %p145 = scmp.eq.s32.totalorder %s18, 1
    %p146 = por %p144, %p145
    %p148 = scmp.ne.s32.totalorder %s133, %s147
    %p149 = scmp.eq.s32.totalorder %s18, 0
    %p150 = por %p148, %p149
    %s151 = ssub.s32 %s12, %s19
    %p152 = scmp.eq.s32.totalorder %s151, 0
    %s154 = sadd.s32 %s153, 1
    %s155 = scalar_select %p152, %s153, %s154
    %p158 = pneg %p152
    %p159 = scmp.eq.s32.totalorder %s12, 1
    %p160 = por %p158, %p159
    %p161 = scmp.ne.s32.totalorder %s153, %s156
    %p162 = scmp.eq.s32.totalorder %s12, 0
    %p163 = por %p161, %p162
    %p164 = scmp.ne.s32.totalorder %s153, %s156
    %p165 = scmp.eq.s32.totalorder %s17, 1
    %p166 = por %p164, %p165
    %p167 = scmp.ne.s32.totalorder %s156, %s157
    %p168 = scmp.eq.s32.totalorder %s17, 0
    %p169 = por %p167, %p168
    %p170 = scmp.ne.s32.totalorder %s156, %s157
    %p171 = scmp.eq.s32.totalorder %s18, 1
    %p172 = por %p170, %p171
    %p174 = scmp.ne.s32.totalorder %s157, %s173
    %p175 = scmp.eq.s32.totalorder %s18, 0
    %p176 = por %p174, %p175
    %p177 = scmp.le.s32.totalorder 1, %s12
    %p178 = scmp.lt.s32.totalorder %s12, 3
    %p179 = pnand %p177, %p178
    %p180 = pneg %p179
    // Predicated region
    $region9: #{_lambda_.8} parent=5 // pred_check
      _
    $region10: #{_lambda_.8} parent=5 // pred_check_branch
      %182 = sbr.rel (%p179) target = $region12
    $region11: #{_lambda_.8} parent=5 // pred_region
      %s183 = ssub.s32 %s12, 1
      // Predicated region
      $region13: #{_lambda_.8} parent=11 // pred_check
        %p184 = pneg %p59
      $region14: #{_lambda_.8} parent=11 // pred_check_branch
        %186 = sbr.rel (%p184) target = $region16
      $region15: #{_lambda_.8} parent=11 // pred_region
        _
      $region16: #{_lambda_.8} parent=11 // pred_fallthru
        _
      // Predicated region
      $region17: #{_lambda_.8} parent=11 // pred_check
        %p187 = pneg %p80
      $region18: #{_lambda_.8} parent=11 // pred_check_branch
        %189 = sbr.rel (%p187) target = $region20
      $region19: #{_lambda_.8} parent=11 // pred_region
        _
      $region20: #{_lambda_.8} parent=11 // pred_fallthru
        _
      // Predicated region
      $region21: #{_lambda_.8} parent=11 // pred_check
        %p190 = pneg %p101
      $region22: #{_lambda_.8} parent=11 // pred_check_branch
        %192 = sbr.rel (%p190) target = $region24
      $region23: #{_lambda_.8} parent=11 // pred_region
        _
      $region24: #{_lambda_.8} parent=11 // pred_fallthru
        _
      // Predicated region
      $region25: #{_lambda_.8} parent=11 // pred_check
        %p193 = pneg %p122
      $region26: #{_lambda_.8} parent=11 // pred_check_branch
        %195 = sbr.rel (%p193) target = $region28
      $region27: #{_lambda_.8} parent=11 // pred_region
        _
      $region28: #{_lambda_.8} parent=11 // pred_fallthru
        _
      // Predicated region
      $region29: #{_lambda_.8} parent=11 // pred_check
        %p196 = pneg %p143
      $region30: #{_lambda_.8} parent=11 // pred_check_branch
        %198 = sbr.rel (%p196) target = $region32
      $region31: #{_lambda_.8} parent=11 // pred_region
        _
      $region32: #{_lambda_.8} parent=11 // pred_fallthru
        _
    $region12: #{_lambda_.8} parent=5 // pred_fallthru
      _
    %p199 = scmp.lt.s32.totalorder %s12, 2
    // Predicated region
    $region33: #{_lambda_.8} parent=5 // pred_check
      %p200 = pneg %p199
    $region34: #{_lambda_.8} parent=5 // pred_check_branch
      %202 = sbr.rel (%p200) target = $region36
    $region35: #{_lambda_.8} parent=5 // pred_region
      // Predicated region
      $region37: #{_lambda_.8} parent=35 // pred_check
        %p203 = pneg %p32
      $region38: #{_lambda_.8} parent=35 // pred_check_branch
        %205 = sbr.rel (%p203) target = $region40
      $region39: #{_lambda_.8} parent=35 // pred_region
        %p206 = scmp.lt.s32.totalorder %s12, 1
        %s207 = scalar_select %p206, %s12, 1
        %s208 = smul.addr %s207, 3
        %s209 = smul.addr %s208, 4
        %s210 = scalar_lea.vmem %s0, %s209
      $region40: #{_lambda_.8} parent=35 // pred_fallthru
        _
    $region36: #{_lambda_.8} parent=5 // pred_fallthru
      _
    %p211 = scmp.le.s32.totalorder 1, %s12
    %p212 = scmp.lt.s32.totalorder %s12, 3
    %p213 = pnand %p211, %p212
    %p214 = pneg %p213
    // Predicated region
    $region41: #{_lambda_.8} parent=5 // pred_check
      _
    $region42: #{_lambda_.8} parent=5 // pred_check_branch
      %216 = sbr.rel (%p213) target = $region44
    $region43: #{_lambda_.8} parent=5 // pred_region
      %s217 = ssub.s32 %s12, 1
      %p218 = scmp.lt.s32.totalorder %s17, 1
      %s219 = scalar_select %p218, %s17, 1
      %s220 = smul.addr %s219, 3
      %s221 = smul.addr %s220, 4
      %s222 = scalar_lea.vmem %s0, %s221
      %p223 = pneg %p38
      %p224 = pneg %p35
      %p225 = pneg %p59
      %p226 = pneg %p56
      %p227 = pneg %p80
      %p228 = pneg %p77
      %p229 = pneg %p101
      %p230 = pneg %p98
      %p231 = pneg %p122
      %p232 = pneg %p119
      %p233 = pneg %p143
      %p234 = pneg %p140
      %p235 = pneg %p169
      %p236 = pneg %p166
      %p237 = scmp.lt.s32.totalorder %s17, 1
      %s238 = scalar_select %p237, %s17, 1
      %s239 = smul.addr %s238, 3
      %s240 = smul.addr %s239, 4
      %s241 = scalar_lea.vmem %s6, %s240
      %p242 = scmp.lt.s32.totalorder %s17, 1
      %s243 = scalar_select %p242, %s17, 1
      %s244 = smul.addr %s243, 3
      %s245 = smul.addr %s244, 4
      %s246 = scalar_lea.vmem %s0, %s245
      %p247 = scmp.lt.s32.totalorder %s17, 1
      %s248 = scalar_select %p247, %s17, 1
      %s249 = smul.addr %s248, 3
      %s250 = smul.addr %s249, 4
      %s251 = scalar_lea.vmem %s6, %s250
      %v253 = vld [vmem:[%s5] sm:$0x7]
      %v254 = vld [vmem:[%s246] sm:$0xff]
      %v255 = vld [vmem:[%s246 + $0x8] sm:$0xf]
      %v256 = vunpack.c.l.bf16 %v254
      %v257 = vunpack.c.h.bf16 %v254
      %v258 = vunpack.c.l.bf16 %v255
      %v259 = vld [vmem:[%s1] sm:$0xf]
      %s260 = scalar_lea.vmem %s1, 4
      %v261 = vld [vmem:[%s260] sm:$0xf]
      %v264 = vunpack.c.l.b16 %v254
      %v265 = vunpack.c.h.b16 %v254
      %v266 = vunpack.c.l.b16 %v255
      %v267 = vpack.c.b16 %v264, %v264
      %v268 = vpack.c.b16 %v265, %v265
      %v269 = vpack.c.b16 %v266, %v266
      %270 = vrot.lane.b32.xlu0 %v267, 127
      %v271 = vpop.permute.xlu0 %270
      %272 = vrot.lane.b32.xlu0 %v268, 127
      %v273 = vpop.permute.xlu0 %272
      %274 = vrot.lane.b32.xlu0 %v269, 127
      %v275 = vpop.permute.xlu0 %274
      %vm276 = vcmask 1039360
      %v277 = vsel %vm276, %v271, %v273
      %v278 = vsel %vm276, %v273, %v275
      %vm279 = vcmask 64512
      %v281 = vsel %vm279, %v261, 0
      %vm283 = vcmask 1043456
      %v285 = vsel %vm283, %v277, 0
      %v288 = vsel %vm283, %v278, 0
      %v291 = vsel %vm283, %v275, 0
      %293 = vmatprep.subr.bf16.mxu0 %v288
      %294 = vmatpush1.bf16.msra.mxu0 %v285
      %295 = vmatprep.subr.bf16.mxu0 0
      %296 = vmatpush1.bf16.msra.mxu0 0
      %297 = vmatprep.subr.bf16.mxu0 0
      %298 = vmatpush1.bf16.msra.mxu0 0
      %299 = vmatprep.subr.bf16.mxu0 0
      %300 = vmatpush1.bf16.msra.mxu0 0
      %301 = vmatprep.subr.bf16.mxu0 0
      %302 = vmatpush1.bf16.msra.mxu0 0
      %303 = vmatprep.subr.bf16.mxu0 0
      %304 = vmatpush1.bf16.msra.mxu0 0
      %305 = vmatprep.subr.bf16.mxu0 0
      %306 = vmatpush1.bf16.msra.mxu0 0
      %307 = vmatprep.subr.bf16.mxu0 0
      %308 = vmatpush1.bf16.msra.mxu0 0
      %309 = vmatprep.subr.bf16.mxu0 0
      %310 = vmatpush1.bf16.msra.mxu0 0
      %311 = vmatprep.subr.bf16.mxu0 0
      %312 = vmatpush1.bf16.msra.mxu0 0
      %313 = vmatprep.subr.bf16.mxu0 0
      %314 = vmatpush1.bf16.msra.mxu0 0
      %315 = vmatprep.subr.bf16.mxu0 0
      %316 = vmatpush1.bf16.msra.mxu0 0
      %317 = vmatprep.subr.bf16.mxu0 0
      %318 = vmatpush1.bf16.msra.mxu0 0
      %319 = vmatprep.subr.bf16.mxu0 0
      %320 = vmatpush1.bf16.msra.mxu0 0
      %321 = vmatprep.subr.bf16.mxu0 0
      %322 = vmatpush1.bf16.msra.mxu0 0
      %323 = vmatprep.subr.bf16.mxu0 0
      %324 = vmatpush1.bf16.msra.mxu0 0
      %325 = vmatprep.mubr.bf16.mxu0 0
      %326 = vmatmul.mubr.bf16.gmra.mrb[0].mxu0 %v281
      %v327 = vpop.f32.mrb[0].mxu0
      %v328 = vadd.f32 0.0, %v327
      %v329 = vpop.f32.mrb[0].mxu0
      %v330 = vadd.f32 0.0, %v329
      %v331 = vpop.f32.mrb[0].mxu0
      %v332 = vpop.f32.mrb[0].mxu0
      %333 = vdwg.mxu0
      %334 = vmatprep.subr.bf16.mxu0 0
      %335 = vmatpush1.bf16.msra.mxu0 %v291
      %336 = vmatprep.subr.bf16.mxu0 0
      %337 = vmatpush1.bf16.msra.mxu0 0
      %338 = vmatprep.subr.bf16.mxu0 0
      %339 = vmatpush1.bf16.msra.mxu0 0
      %340 = vmatprep.subr.bf16.mxu0 0
      %341 = vmatpush1.bf16.msra.mxu0 0
      %342 = vmatprep.subr.bf16.mxu0 0
      %343 = vmatpush1.bf16.msra.mxu0 0
      %344 = vmatprep.subr.bf16.mxu0 0
      %345 = vmatpush1.bf16.msra.mxu0 0
      %346 = vmatprep.subr.bf16.mxu0 0
      %347 = vmatpush1.bf16.msra.mxu0 0
      %348 = vmatprep.subr.bf16.mxu0 0
      %349 = vmatpush1.bf16.msra.mxu0 0
      %350 = vmatprep.subr.bf16.mxu0 0
      %351 = vmatpush1.bf16.msra.mxu0 0
      %352 = vmatprep.subr.bf16.mxu0 0
      %353 = vmatpush1.bf16.msra.mxu0 0
      %354 = vmatprep.subr.bf16.mxu0 0
      %355 = vmatpush1.bf16.msra.mxu0 0
      %356 = vmatprep.subr.bf16.mxu0 0
      %357 = vmatpush1.bf16.msra.mxu0 0
      %358 = vmatprep.subr.bf16.mxu0 0
      %359 = vmatpush1.bf16.msra.mxu0 0
      %360 = vmatprep.subr.bf16.mxu0 0
      %361 = vmatpush1.bf16.msra.mxu0 0
      %362 = vmatprep.subr.bf16.mxu0 0
      %363 = vmatpush1.bf16.msra.mxu0 0
      %364 = vmatprep.subr.bf16.mxu0 0
      %365 = vmatpush1.bf16.msra.mxu0 0
      %366 = vmatprep.mubr.bf16.mxu0 0
      %367 = vmatmul.mubr.bf16.gmra.mrb[0].mxu0 %v281
      %v368 = vpop.f32.mrb[0].mxu0
      %v369 = vadd.f32 0.0, %v368
      %v370 = vpop.f32.mrb[0].mxu0
      %v371 = vpop.f32.mrb[0].mxu0
      %v372 = vpop.f32.mrb[0].mxu0
      %373 = vdwg.mxu0
      %v375 = vsel %vm279, %v259, 0
      %v378 = vsel %vm283, %v267, 0
      %v381 = vsel %vm283, %v268, 0
      %v384 = vsel %vm283, %v269, 0
      %386 = vmatprep.subr.bf16.mxu0 %v381
      %387 = vmatpush1.bf16.msra.mxu0 %v378
      %388 = vmatprep.subr.bf16.mxu0 0
      %389 = vmatpush1.bf16.msra.mxu0 0
      %390 = vmatprep.subr.bf16.mxu0 0
      %391 = vmatpush1.bf16.msra.mxu0 0
      %392 = vmatprep.subr.bf16.mxu0 0
      %393 = vmatpush1.bf16.msra.mxu0 0
      %394 = vmatprep.subr.bf16.mxu0 0
      %395 = vmatpush1.bf16.msra.mxu0 0
      %396 = vmatprep.subr.bf16.mxu0 0
      %397 = vmatpush1.bf16.msra.mxu0 0
      %398 = vmatprep.subr.bf16.mxu0 0
      %399 = vmatpush1.bf16.msra.mxu0 0
      %400 = vmatprep.subr.bf16.mxu0 0
      %401 = vmatpush1.bf16.msra.mxu0 0
      %402 = vmatprep.subr.bf16.mxu0 0
      %403 = vmatpush1.bf16.msra.mxu0 0
      %404 = vmatprep.subr.bf16.mxu0 0
      %405 = vmatpush1.bf16.msra.mxu0 0
      %406 = vmatprep.subr.bf16.mxu0 0
      %407 = vmatpush1.bf16.msra.mxu0 0
      %408 = vmatprep.subr.bf16.mxu0 0
      %409 = vmatpush1.bf16.msra.mxu0 0
      %410 = vmatprep.subr.bf16.mxu0 0
      %411 = vmatpush1.bf16.msra.mxu0 0
      %412 = vmatprep.subr.bf16.mxu0 0
      %413 = vmatpush1.bf16.msra.mxu0 0
      %414 = vmatprep.subr.bf16.mxu0 0
      %415 = vmatpush1.bf16.msra.mxu0 0
      %416 = vmatprep.subr.bf16.mxu0 0
      %417 = vmatpush1.bf16.msra.mxu0 0
      %418 = vmatprep.mubr.bf16.mxu0 0
      %419 = vmatmul.mubr.bf16.gmra.mrb[0].mxu0 %v375
      %v420 = vpop.f32.mrb[0].mxu0
      %v421 = vadd.f32 %v328, %v420
      %v422 = vpop.f32.mrb[0].mxu0
      %v423 = vadd.f32 %v330, %v422
      %v424 = vpop.f32.mrb[0].mxu0
      %v425 = vpop.f32.mrb[0].mxu0
      %426 = vdwg.mxu0
      %427 = vmatprep.subr.bf16.mxu0 0
      %428 = vmatpush1.bf16.msra.mxu0 %v384
      %429 = vmatprep.subr.bf16.mxu0 0
      %430 = vmatpush1.bf16.msra.mxu0 0
      %431 = vmatprep.subr.bf16.mxu0 0
      %432 = vmatpush1.bf16.msra.mxu0 0
      %433 = vmatprep.subr.bf16.mxu0 0
      %434 = vmatpush1.bf16.msra.mxu0 0
      %435 = vmatprep.subr.bf16.mxu0 0
      %436 = vmatpush1.bf16.msra.mxu0 0
      %437 = vmatprep.subr.bf16.mxu0 0
      %438 = vmatpush1.bf16.msra.mxu0 0
      %439 = vmatprep.subr.bf16.mxu0 0
      %440 = vmatpush1.bf16.msra.mxu0 0
      %441 = vmatprep.subr.bf16.mxu0 0
      %442 = vmatpush1.bf16.msra.mxu0 0
      %443 = vmatprep.subr.bf16.mxu0 0
      %444 = vmatpush1.bf16.msra.mxu0 0
      %445 = vmatprep.subr.bf16.mxu0 0
      %446 = vmatpush1.bf16.msra.mxu0 0
      %447 = vmatprep.subr.bf16.mxu0 0
      %448 = vmatpush1.bf16.msra.mxu0 0
      %449 = vmatprep.subr.bf16.mxu0 0
      %450 = vmatpush1.bf16.msra.mxu0 0
      %451 = vmatprep.subr.bf16.mxu0 0
      %452 = vmatpush1.bf16.msra.mxu0 0
      %453 = vmatprep.subr.bf16.mxu0 0
      %454 = vmatpush1.bf16.msra.mxu0 0
      %455 = vmatprep.subr.bf16.mxu0 0
      %456 = vmatpush1.bf16.msra.mxu0 0
      %457 = vmatprep.subr.bf16.mxu0 0
      %458 = vmatpush1.bf16.msra.mxu0 0
      %459 = vmatprep.mubr.bf16.mxu0 0
      %460 = vmatmul.mubr.bf16.gmra.mrb[0].mxu0 %v375
      %v461 = vpop.f32.mrb[0].mxu0
      %v462 = vadd.f32 %v369, %v461
      %v463 = vpop.f32.mrb[0].mxu0
      %v464 = vpop.f32.mrb[0].mxu0
      %v465 = vpop.f32.mrb[0].mxu0
      %466 = vdwg.mxu0
      %s467 = scalar_lea.vmem %s1, 8
      %v468 = vld [vmem:[%s467] sm:$0xf]
      %469 = vrot.lane.b32.xlu0 %v267, 126
      %v470 = vpop.permute.xlu0 %469
      %471 = vrot.lane.b32.xlu0 %v268, 126
      %v472 = vpop.permute.xlu0 %471
      %473 = vrot.lane.b32.xlu0 %v269, 126
      %v474 = vpop.permute.xlu0 %473
      %vm475 = vcmask 1031168
      %v476 = vsel %vm475, %v470, %v472
      %v477 = vsel %vm475, %v472, %v474
      %v479 = vsel %vm279, %v468, 0
      %v482 = vsel %vm283, %v476, 0
      %v485 = vsel %vm283, %v477, 0
      %v488 = vsel %vm283, %v474, 0
      %490 = vmatprep.subr.bf16.mxu0 %v485
      %491 = vmatpush1.bf16.msra.mxu0 %v482
      %492 = vmatprep.subr.bf16.mxu0 0
      %493 = vmatpush1.bf16.msra.mxu0 0
      %494 = vmatprep.subr.bf16.mxu0 0
      %495 = vmatpush1.bf16.msra.mxu0 0
      %496 = vmatprep.subr.bf16.mxu0 0
      %497 = vmatpush1.bf16.msra.mxu0 0
      %498 = vmatprep.subr.bf16.mxu0 0
      %499 = vmatpush1.bf16.msra.mxu0 0
      %500 = vmatprep.subr.bf16.mxu0 0
      %501 = vmatpush1.bf16.msra.mxu0 0
      %502 = vmatprep.subr.bf16.mxu0 0
      %503 = vmatpush1.bf16.msra.mxu0 0
      %504 = vmatprep.subr.bf16.mxu0 0
      %505 = vmatpush1.bf16.msra.mxu0 0
      %506 = vmatprep.subr.bf16.mxu0 0
      %507 = vmatpush1.bf16.msra.mxu0 0
      %508 = vmatprep.subr.bf16.mxu0 0
      %509 = vmatpush1.bf16.msra.mxu0 0
      %510 = vmatprep.subr.bf16.mxu0 0
      %511 = vmatpush1.bf16.msra.mxu0 0
      %512 = vmatprep.subr.bf16.mxu0 0
      %513 = vmatpush1.bf16.msra.mxu0 0
      %514 = vmatprep.subr.bf16.mxu0 0
      %515 = vmatpush1.bf16.msra.mxu0 0
      %516 = vmatprep.subr.bf16.mxu0 0
      %517 = vmatpush1.bf16.msra.mxu0 0
      %518 = vmatprep.subr.bf16.mxu0 0
      %519 = vmatpush1.bf16.msra.mxu0 0
      %520 = vmatprep.subr.bf16.mxu0 0
      %521 = vmatpush1.bf16.msra.mxu0 0
      %522 = vmatprep.mubr.bf16.mxu0 0
      %523 = vmatmul.mubr.bf16.gmra.mrb[0].mxu0 %v479
      %v524 = vpop.f32.mrb[0].mxu0
      %v525 = vadd.f32 0.0, %v524
      %v526 = vpop.f32.mrb[0].mxu0
      %v527 = vadd.f32 0.0, %v526
      %v528 = vpop.f32.mrb[0].mxu0
      %v529 = vpop.f32.mrb[0].mxu0
      %530 = vdwg.mxu0
      %531 = vmatprep.subr.bf16.mxu0 0
      %532 = vmatpush1.bf16.msra.mxu0 %v488
      %533 = vmatprep.subr.bf16.mxu0 0
      %534 = vmatpush1.bf16.msra.mxu0 0
      %535 = vmatprep.subr.bf16.mxu0 0
      %536 = vmatpush1.bf16.msra.mxu0 0
      %537 = vmatprep.subr.bf16.mxu0 0
      %538 = vmatpush1.bf16.msra.mxu0 0
      %539 = vmatprep.subr.bf16.mxu0 0
      %540 = vmatpush1.bf16.msra.mxu0 0
      %541 = vmatprep.subr.bf16.mxu0 0
      %542 = vmatpush1.bf16.msra.mxu0 0
      %543 = vmatprep.subr.bf16.mxu0 0
      %544 = vmatpush1.bf16.msra.mxu0 0
      %545 = vmatprep.subr.bf16.mxu0 0
      %546 = vmatpush1.bf16.msra.mxu0 0
      %547 = vmatprep.subr.bf16.mxu0 0
      %548 = vmatpush1.bf16.msra.mxu0 0
      %549 = vmatprep.subr.bf16.mxu0 0
      %550 = vmatpush1.bf16.msra.mxu0 0
      %551 = vmatprep.subr.bf16.mxu0 0
      %552 = vmatpush1.bf16.msra.mxu0 0
      %553 = vmatprep.subr.bf16.mxu0 0
      %554 = vmatpush1.bf16.msra.mxu0 0
      %555 = vmatprep.subr.bf16.mxu0 0
      %556 = vmatpush1.bf16.msra.mxu0 0
      %557 = vmatprep.subr.bf16.mxu0 0
      %558 = vmatpush1.bf16.msra.mxu0 0
      %559 = vmatprep.subr.bf16.mxu0 0
      %560 = vmatpush1.bf16.msra.mxu0 0
      %561 = vmatprep.subr.bf16.mxu0 0
      %562 = vmatpush1.bf16.msra.mxu0 0
      %563 = vmatprep.mubr.bf16.mxu0 0
      %564 = vmatmul.mubr.bf16.gmra.mrb[0].mxu0 %v479
      %v565 = vpop.f32.mrb[0].mxu0
      %v566 = vadd.f32 0.0, %v565
      %v567 = vpop.f32.mrb[0].mxu0
      %v568 = vpop.f32.mrb[0].mxu0
      %v569 = vpop.f32.mrb[0].mxu0
      %570 = vdwg.mxu0
      %v571 = vadd.f32 %v421, %v525
      %v572 = vadd.f32 %v423, %v527
      %v573 = vadd.f32 %v462, %v566
      %s574 = scalar_lea.vmem %s1, 12
      %v575 = vld [vmem:[%s574] sm:$0xf]
      %576 = vrot.lane.b32.xlu0 %v267, 110
      %v577 = vpop.permute.xlu0 %576
      %578 = vrot.lane.b32.xlu0 %v268, 110
      %v579 = vpop.permute.xlu0 %578
      %580 = vrot.lane.b32.xlu0 %v269, 110
      %v581 = vpop.permute.xlu0 %580
      %vm582 = vcmask 900096
      %v583 = vsel %vm582, %v577, %v579
      %v584 = vsel %vm582, %v579, %v581
      %v586 = vsel %vm279, %v575, 0
      %v589 = vsel %vm283, %v583, 0
      %v592 = vsel %vm283, %v584, 0
      %v595 = vsel %vm283, %v581, 0
      %597 = vmatprep.subr.bf16.mxu0 %v592
      %598 = vmatpush1.bf16.msra.mxu0 %v589
      %599 = vmatprep.subr.bf16.mxu0 0
      %600 = vmatpush1.bf16.msra.mxu0 0
      %601 = vmatprep.subr.bf16.mxu0 0
      %602 = vmatpush1.bf16.msra.mxu0 0
      %603 = vmatprep.subr.bf16.mxu0 0
      %604 = vmatpush1.bf16.msra.mxu0 0
      %605 = vmatprep.subr.bf16.mxu0 0
      %606 = vmatpush1.bf16.msra.mxu0 0
      %607 = vmatprep.subr.bf16.mxu0 0
      %608 = vmatpush1.bf16.msra.mxu0 0
      %609 = vmatprep.subr.bf16.mxu0 0
      %610 = vmatpush1.bf16.msra.mxu0 0
      %611 = vmatprep.subr.bf16.mxu0 0
      %612 = vmatpush1.bf16.msra.mxu0 0
      %613 = vmatprep.subr.bf16.mxu0 0
      %614 = vmatpush1.bf16.msra.mxu0 0
      %615 = vmatprep.subr.bf16.mxu0 0
      %616 = vmatpush1.bf16.msra.mxu0 0
      %617 = vmatprep.subr.bf16.mxu0 0
      %618 = vmatpush1.bf16.msra.mxu0 0
      %619 = vmatprep.subr.bf16.mxu0 0
      %620 = vmatpush1.bf16.msra.mxu0 0
      %621 = vmatprep.subr.bf16.mxu0 0
      %622 = vmatpush1.bf16.msra.mxu0 0
      %623 = vmatprep.subr.bf16.mxu0 0
      %624 = vmatpush1.bf16.msra.mxu0 0
      %625 = vmatprep.subr.bf16.mxu0 0
      %626 = vmatpush1.bf16.msra.mxu0 0
      %627 = vmatprep.subr.bf16.mxu0 0
      %628 = vmatpush1.bf16.msra.mxu0 0
      %629 = vmatprep.mubr.bf16.mxu0 0
      %630 = vmatmul.mubr.bf16.gmra.mrb[0].mxu0 %v586
      %v631 = vpop.f32.mrb[0].mxu0
      %v632 = vadd.f32 0.0, %v631
      %v633 = vpop.f32.mrb[0].mxu0
      %v634 = vadd.f32 0.0, %v633
      %v635 = vpop.f32.mrb[0].mxu0
      %v636 = vpop.f32.mrb[0].mxu0
      %637 = vdwg.mxu0
      %638 = vmatprep.subr.bf16.mxu0 0
      %639 = vmatpush1.bf16.msra.mxu0 %v595
      %640 = vmatprep.subr.bf16.mxu0 0
      %641 = vmatpush1.bf16.msra.mxu0 0
      %642 = vmatprep.subr.bf16.mxu0 0
      %643 = vmatpush1.bf16.msra.mxu0 0
      %644 = vmatprep.subr.bf16.mxu0 0
      %645 = vmatpush1.bf16.msra.mxu0 0
      %646 = vmatprep.subr.bf16.mxu0 0
      %647 = vmatpush1.bf16.msra.mxu0 0
      %648 = vmatprep.subr.bf16.mxu0 0
      %649 = vmatpush1.bf16.msra.mxu0 0
      %650 = vmatprep.subr.bf16.mxu0 0
      %651 = vmatpush1.bf16.msra.mxu0 0
      %652 = vmatprep.subr.bf16.mxu0 0
      %653 = vmatpush1.bf16.msra.mxu0 0
      %654 = vmatprep.subr.bf16.mxu0 0
      %655 = vmatpush1.bf16.msra.mxu0 0
      %656 = vmatprep.subr.bf16.mxu0 0
      %657 = vmatpush1.bf16.msra.mxu0 0
      %658 = vmatprep.subr.bf16.mxu0 0
      %659 = vmatpush1.bf16.msra.mxu0 0
      %660 = vmatprep.subr.bf16.mxu0 0
      %661 = vmatpush1.bf16.msra.mxu0 0
      %662 = vmatprep.subr.bf16.mxu0 0
      %663 = vmatpush1.bf16.msra.mxu0 0
      %664 = vmatprep.subr.bf16.mxu0 0
      %665 = vmatpush1.bf16.msra.mxu0 0
      %666 = vmatprep.subr.bf16.mxu0 0
      %667 = vmatpush1.bf16.msra.mxu0 0
      %668 = vmatprep.subr.bf16.mxu0 0
      %669 = vmatpush1.bf16.msra.mxu0 0
      %670 = vmatprep.mubr.bf16.mxu0 0
      %671 = vmatmul.mubr.bf16.gmra.mrb[0].mxu0 %v586
      %v672 = vpop.f32.mrb[0].mxu0
      %v673 = vadd.f32 0.0, %v672
      %v674 = vpop.f32.mrb[0].mxu0
      %v675 = vpop.f32.mrb[0].mxu0
      %v676 = vpop.f32.mrb[0].mxu0
      %677 = vdwg.mxu0
      %v678 = vadd.f32 %v571, %v632
      %v679 = vadd.f32 %v572, %v634
      %v680 = vadd.f32 %v573, %v673
      %s681 = scalar_lea.vmem %s1, 16
      %v682 = vld [vmem:[%s681] sm:$0xf]
      %683 = vrot.lane.b32.xlu0 %v267, 109
      %v684 = vpop.permute.xlu0 %683
      %685 = vrot.lane.b32.xlu0 %v268, 109
      %v686 = vpop.permute.xlu0 %685
      %687 = vrot.lane.b32.xlu0 %v269, 109
      %v688 = vpop.permute.xlu0 %687
      %vm689 = vcmask 891904
      %v690 = vsel %vm689, %v684, %v686
      %v691 = vsel %vm689, %v686, %v688
      %v693 = vsel %vm279, %v682, 0
      %v696 = vsel %vm283, %v690, 0
      %v699 = vsel %vm283, %v691, 0
      %v702 = vsel %vm283, %v688, 0
      %704 = vmatprep.subr.bf16.mxu0 %v699
      %705 = vmatpush1.bf16.msra.mxu0 %v696
      %706 = vmatprep.subr.bf16.mxu0 0
      %707 = vmatpush1.bf16.msra.mxu0 0
      %708 = vmatprep.subr.bf16.mxu0 0
      %709 = vmatpush1.bf16.msra.mxu0 0
      %710 = vmatprep.subr.bf16.mxu0 0
      %711 = vmatpush1.bf16.msra.mxu0 0
      %712 = vmatprep.subr.bf16.mxu0 0
      %713 = vmatpush1.bf16.msra.mxu0 0
      %714 = vmatprep.subr.bf16.mxu0 0
      %715 = vmatpush1.bf16.msra.mxu0 0
      %716 = vmatprep.subr.bf16.mxu0 0
      %717 = vmatpush1.bf16.msra.mxu0 0
      %718 = vmatprep.subr.bf16.mxu0 0
      %719 = vmatpush1.bf16.msra.mxu0 0
      %720 = vmatprep.subr.bf16.mxu0 0
      %721 = vmatpush1.bf16.msra.mxu0 0
      %722 = vmatprep.subr.bf16.mxu0 0
      %723 = vmatpush1.bf16.msra.mxu0 0
      %724 = vmatprep.subr.bf16.mxu0 0
      %725 = vmatpush1.bf16.msra.mxu0 0
      %726 = vmatprep.subr.bf16.mxu0 0
      %727 = vmatpush1.bf16.msra.mxu0 0
      %728 = vmatprep.subr.bf16.mxu0 0
      %729 = vmatpush1.bf16.msra.mxu0 0
      %730 = vmatprep.subr.bf16.mxu0 0
      %731 = vmatpush1.bf16.msra.mxu0 0
      %732 = vmatprep.subr.bf16.mxu0 0
      %733 = vmatpush1.bf16.msra.mxu0 0
      %734 = vmatprep.subr.bf16.mxu0 0
      %735 = vmatpush1.bf16.msra.mxu0 0
      %736 = vmatprep.mubr.bf16.mxu0 0
      %737 = vmatmul.mubr.bf16.gmra.mrb[0].mxu0 %v693
      %v738 = vpop.f32.mrb[0].mxu0
      %v739 = vadd.f32 0.0, %v738
      %v740 = vpop.f32.mrb[0].mxu0
      %v741 = vadd.f32 0.0, %v740
      %v742 = vpop.f32.mrb[0].mxu0
      %v743 = vpop.f32.mrb[0].mxu0
      %744 = vdwg.mxu0
      %745 = vmatprep.subr.bf16.mxu0 0
      %746 = vmatpush1.bf16.msra.mxu0 %v702
      %747 = vmatprep.subr.bf16.mxu0 0
      %748 = vmatpush1.bf16.msra.mxu0 0
      %749 = vmatprep.subr.bf16.mxu0 0
      %750 = vmatpush1.bf16.msra.mxu0 0
      %751 = vmatprep.subr.bf16.mxu0 0
      %752 = vmatpush1.bf16.msra.mxu0 0
      %753 = vmatprep.subr.bf16.mxu0 0
      %754 = vmatpush1.bf16.msra.mxu0 0
      %755 = vmatprep.subr.bf16.mxu0 0
      %756 = vmatpush1.bf16.msra.mxu0 0
      %757 = vmatprep.subr.bf16.mxu0 0
      %758 = vmatpush1.bf16.msra.mxu0 0
      %759 = vmatprep.subr.bf16.mxu0 0
      %760 = vmatpush1.bf16.msra.mxu0 0
      %761 = vmatprep.subr.bf16.mxu0 0
      %762 = vmatpush1.bf16.msra.mxu0 0
      %763 = vmatprep.subr.bf16.mxu0 0
      %764 = vmatpush1.bf16.msra.mxu0 0
      %765 = vmatprep.subr.bf16.mxu0 0
      %766 = vmatpush1.bf16.msra.mxu0 0
      %767 = vmatprep.subr.bf16.mxu0 0
      %768 = vmatpush1.bf16.msra.mxu0 0
      %769 = vmatprep.subr.bf16.mxu0 0
      %770 = vmatpush1.bf16.msra.mxu0 0
      %771 = vmatprep.subr.bf16.mxu0 0
      %772 = vmatpush1.bf16.msra.mxu0 0
      %773 = vmatprep.subr.bf16.mxu0 0
      %774 = vmatpush1.bf16.msra.mxu0 0
      %775 = vmatprep.subr.bf16.mxu0 0
      %776 = vmatpush1.bf16.msra.mxu0 0
      %777 = vmatprep.mubr.bf16.mxu0 0
      %778 = vmatmul.mubr.bf16.gmra.mrb[0].mxu0 %v693
      %v779 = vpop.f32.mrb[0].mxu0
      %v780 = vadd.f32 0.0, %v779
      %v781 = vpop.f32.mrb[0].mxu0
      %v782 = vpop.f32.mrb[0].mxu0
      %v783 = vpop.f32.mrb[0].mxu0
      %784 = vdwg.mxu0
      %v785 = vadd.f32 %v678, %v739
      %v786 = vadd.f32 %v679, %v741
      %v787 = vadd.f32 %v680, %v780
      %s788 = scalar_lea.vmem %s1, 20
      %v789 = vld [vmem:[%s788] sm:$0xf]
      %790 = vrot.lane.b32.xlu0 %v267, 108
      %v791 = vpop.permute.xlu0 %790
      %792 = vrot.lane.b32.xlu0 %v268, 108
      %v793 = vpop.permute.xlu0 %792
      %794 = vrot.lane.b32.xlu0 %v269, 108
      %v795 = vpop.permute.xlu0 %794
      %vm796 = vcmask 883712
      %v797 = vsel %vm796, %v791, %v793
      %v798 = vsel %vm796, %v793, %v795
      %v800 = vsel %vm279, %v789, 0
      %v803 = vsel %vm283, %v797, 0
      %v806 = vsel %vm283, %v798, 0
      %v809 = vsel %vm283, %v795, 0
      %811 = vmatprep.subr.bf16.mxu0 %v806
      %812 = vmatpush1.bf16.msra.mxu0 %v803
      %813 = vmatprep.subr.bf16.mxu0 0
      %814 = vmatpush1.bf16.msra.mxu0 0
      %815 = vmatprep.subr.bf16.mxu0 0
      %816 = vmatpush1.bf16.msra.mxu0 0
      %817 = vmatprep.subr.bf16.mxu0 0
      %818 = vmatpush1.bf16.msra.mxu0 0
      %819 = vmatprep.subr.bf16.mxu0 0
      %820 = vmatpush1.bf16.msra.mxu0 0
      %821 = vmatprep.subr.bf16.mxu0 0
      %822 = vmatpush1.bf16.msra.mxu0 0
      %823 = vmatprep.subr.bf16.mxu0 0
      %824 = vmatpush1.bf16.msra.mxu0 0
      %825 = vmatprep.subr.bf16.mxu0 0
      %826 = vmatpush1.bf16.msra.mxu0 0
      %827 = vmatprep.subr.bf16.mxu0 0
      %828 = vmatpush1.bf16.msra.mxu0 0
      %829 = vmatprep.subr.bf16.mxu0 0
      %830 = vmatpush1.bf16.msra.mxu0 0
      %831 = vmatprep.subr.bf16.mxu0 0
      %832 = vmatpush1.bf16.msra.mxu0 0
      %833 = vmatprep.subr.bf16.mxu0 0
      %834 = vmatpush1.bf16.msra.mxu0 0
      %835 = vmatprep.subr.bf16.mxu0 0
      %836 = vmatpush1.bf16.msra.mxu0 0
      %837 = vmatprep.subr.bf16.mxu0 0
      %838 = vmatpush1.bf16.msra.mxu0 0
      %839 = vmatprep.subr.bf16.mxu0 0
      %840 = vmatpush1.bf16.msra.mxu0 0
      %841 = vmatprep.subr.bf16.mxu0 0
      %842 = vmatpush1.bf16.msra.mxu0 0
      %843 = vmatprep.mubr.bf16.mxu0 0
      %844 = vmatmul.mubr.bf16.gmra.mrb[0].mxu0 %v800
      %v845 = vpop.f32.mrb[0].mxu0
      %v846 = vadd.f32 0.0, %v845
      %v847 = vpop.f32.mrb[0].mxu0
      %v848 = vadd.f32 0.0, %v847
      %v849 = vpop.f32.mrb[0].mxu0
      %v850 = vpop.f32.mrb[0].mxu0
      %851 = vdwg.mxu0
      %852 = vmatprep.subr.bf16.mxu0 0
      %853 = vmatpush1.bf16.msra.mxu0 %v809
      %854 = vmatprep.subr.bf16.mxu0 0
      %855 = vmatpush1.bf16.msra.mxu0 0
      %856 = vmatprep.subr.bf16.mxu0 0
      %857 = vmatpush1.bf16.msra.mxu0 0
      %858 = vmatprep.subr.bf16.mxu0 0
      %859 = vmatpush1.bf16.msra.mxu0 0
      %860 = vmatprep.subr.bf16.mxu0 0
      %861 = vmatpush1.bf16.msra.mxu0 0
      %862 = vmatprep.subr.bf16.mxu0 0
      %863 = vmatpush1.bf16.msra.mxu0 0
      %864 = vmatprep.subr.bf16.mxu0 0
      %865 = vmatpush1.bf16.msra.mxu0 0
      %866 = vmatprep.subr.bf16.mxu0 0
      %867 = vmatpush1.bf16.msra.mxu0 0
      %868 = vmatprep.subr.bf16.mxu0 0
      %869 = vmatpush1.bf16.msra.mxu0 0
      %870 = vmatprep.subr.bf16.mxu0 0
      %871 = vmatpush1.bf16.msra.mxu0 0
      %872 = vmatprep.subr.bf16.mxu0 0
      %873 = vmatpush1.bf16.msra.mxu0 0
      %874 = vmatprep.subr.bf16.mxu0 0
      %875 = vmatpush1.bf16.msra.mxu0 0
      %876 = vmatprep.subr.bf16.mxu0 0
      %877 = vmatpush1.bf16.msra.mxu0 0
      %878 = vmatprep.subr.bf16.mxu0 0
      %879 = vmatpush1.bf16.msra.mxu0 0
      %880 = vmatprep.subr.bf16.mxu0 0
      %881 = vmatpush1.bf16.msra.mxu0 0
      %882 = vmatprep.subr.bf16.mxu0 0
      %883 = vmatpush1.bf16.msra.mxu0 0
      %884 = vmatprep.mubr.bf16.mxu0 0
      %885 = vmatmul.mubr.bf16.gmra.mrb[0].mxu0 %v800
      %v886 = vpop.f32.mrb[0].mxu0
      %v887 = vadd.f32 0.0, %v886
      %v888 = vpop.f32.mrb[0].mxu0
      %v889 = vpop.f32.mrb[0].mxu0
      %v890 = vpop.f32.mrb[0].mxu0
      %891 = vdwg.mxu0
      %v892 = vadd.f32 %v785, %v846
      %v893 = vadd.f32 %v786, %v848
      %v894 = vadd.f32 %v787, %v887
      %s895 = scalar_lea.vmem %s1, 24
      %v896 = vld [vmem:[%s895] sm:$0xf]
      %897 = vrot.lane.b32.xlu0 %v267, 92
      %v898 = vpop.permute.xlu0 %897
      %899 = vrot.lane.b32.xlu0 %v268, 92
      %v900 = vpop.permute.xlu0 %899
      %901 = vrot.lane.b32.xlu0 %v269, 92
      %v902 = vpop.permute.xlu0 %901
      %vm903 = vcmask 752640
      %v904 = vsel %vm903, %v898, %v900
      %v905 = vsel %vm903, %v900, %v902
      %v907 = vsel %vm279, %v896, 0
      %v910 = vsel %vm283, %v904, 0
      %v913 = vsel %vm283, %v905, 0
      %v916 = vsel %vm283, %v902, 0
      %918 = vmatprep.subr.bf16.mxu0 %v913
      %919 = vmatpush1.bf16.msra.mxu0 %v910
      %920 = vmatprep.subr.bf16.mxu0 0
      %921 = vmatpush1.bf16.msra.mxu0 0
      %922 = vmatprep.subr.bf16.mxu0 0
      %923 = vmatpush1.bf16.msra.mxu0 0
      %924 = vmatprep.subr.bf16.mxu0 0
      %925 = vmatpush1.bf16.msra.mxu0 0
      %926 = vmatprep.subr.bf16.mxu0 0
      %927 = vmatpush1.bf16.msra.mxu0 0
      %928 = vmatprep.subr.bf16.mxu0 0
      %929 = vmatpush1.bf16.msra.mxu0 0
      %930 = vmatprep.subr.bf16.mxu0 0
      %931 = vmatpush1.bf16.msra.mxu0 0
      %932 = vmatprep.subr.bf16.mxu0 0
      %933 = vmatpush1.bf16.msra.mxu0 0
      %934 = vmatprep.subr.bf16.mxu0 0
      %935 = vmatpush1.bf16.msra.mxu0 0
      %936 = vmatprep.subr.bf16.mxu0 0
      %937 = vmatpush1.bf16.msra.mxu0 0
      %938 = vmatprep.subr.bf16.mxu0 0
      %939 = vmatpush1.bf16.msra.mxu0 0
      %940 = vmatprep.subr.bf16.mxu0 0
      %941 = vmatpush1.bf16.msra.mxu0 0
      %942 = vmatprep.subr.bf16.mxu0 0
      %943 = vmatpush1.bf16.msra.mxu0 0
      %944 = vmatprep.subr.bf16.mxu0 0
      %945 = vmatpush1.bf16.msra.mxu0 0
      %946 = vmatprep.subr.bf16.mxu0 0
      %947 = vmatpush1.bf16.msra.mxu0 0
      %948 = vmatprep.subr.bf16.mxu0 0
      %949 = vmatpush1.bf16.msra.mxu0 0
      %950 = vmatprep.mubr.bf16.mxu0 0
      %951 = vmatmul.mubr.bf16.gmra.mrb[0].mxu0 %v907
      %v952 = vpop.f32.mrb[0].mxu0
      %v953 = vadd.f32 0.0, %v952
      %v954 = vpop.f32.mrb[0].mxu0
      %v955 = vadd.f32 0.0, %v954
      %v956 = vpop.f32.mrb[0].mxu0
      %v957 = vpop.f32.mrb[0].mxu0
      %958 = vdwg.mxu0
      %959 = vmatprep.subr.bf16.mxu0 0
      %960 = vmatpush1.bf16.msra.mxu0 %v916
      %961 = vmatprep.subr.bf16.mxu0 0
      %962 = vmatpush1.bf16.msra.mxu0 0
      %963 = vmatprep.subr.bf16.mxu0 0
      %964 = vmatpush1.bf16.msra.mxu0 0
      %965 = vmatprep.subr.bf16.mxu0 0
      %966 = vmatpush1.bf16.msra.mxu0 0
      %967 = vmatprep.subr.bf16.mxu0 0
      %968 = vmatpush1.bf16.msra.mxu0 0
      %969 = vmatprep.subr.bf16.mxu0 0
      %970 = vmatpush1.bf16.msra.mxu0 0
      %971 = vmatprep.subr.bf16.mxu0 0
      %972 = vmatpush1.bf16.msra.mxu0 0
      %973 = vmatprep.subr.bf16.mxu0 0
      %974 = vmatpush1.bf16.msra.mxu0 0
      %975 = vmatprep.subr.bf16.mxu0 0
      %976 = vmatpush1.bf16.msra.mxu0 0
      %977 = vmatprep.subr.bf16.mxu0 0
      %978 = vmatpush1.bf16.msra.mxu0 0
      %979 = vmatprep.subr.bf16.mxu0 0
      %980 = vmatpush1.bf16.msra.mxu0 0
      %981 = vmatprep.subr.bf16.mxu0 0
      %982 = vmatpush1.bf16.msra.mxu0 0
      %983 = vmatprep.subr.bf16.mxu0 0
      %984 = vmatpush1.bf16.msra.mxu0 0
      %985 = vmatprep.subr.bf16.mxu0 0
      %986 = vmatpush1.bf16.msra.mxu0 0
      %987 = vmatprep.subr.bf16.mxu0 0
      %988 = vmatpush1.bf16.msra.mxu0 0
      %989 = vmatprep.subr.bf16.mxu0 0
      %990 = vmatpush1.bf16.msra.mxu0 0
      %991 = vmatprep.mubr.bf16.mxu0 0
      %992 = vmatmul.mubr.bf16.gmra.mrb[0].mxu0 %v907
      %v993 = vpop.f32.mrb[0].mxu0
      %v994 = vadd.f32 0.0, %v993
      %v995 = vpop.f32.mrb[0].mxu0
      %v996 = vpop.f32.mrb[0].mxu0
      %v997 = vpop.f32.mrb[0].mxu0
      %998 = vdwg.mxu0
      %v999 = vadd.f32 %v892, %v953
      %v1000 = vadd.f32 %v893, %v955
      %v1001 = vadd.f32 %v894, %v994
      %s1002 = scalar_lea.vmem %s1, 28
      %v1003 = vld [vmem:[%s1002] sm:$0xf]
      %1004 = vrot.lane.b32.xlu0 %v267, 91
      %v1005 = vpop.permute.xlu0 %1004
      %1006 = vrot.lane.b32.xlu0 %v268, 91
      %v1007 = vpop.permute.xlu0 %1006
      %1008 = vrot.lane.b32.xlu0 %v269, 91
      %v1009 = vpop.permute.xlu0 %1008
      %vm1010 = vcmask 744448
      %v1011 = vsel %vm1010, %v1005, %v1007
      %v1012 = vsel %vm1010, %v1007, %v1009
      %v1014 = vsel %vm279, %v1003, 0
      %v1017 = vsel %vm283, %v1011, 0
      %v1020 = vsel %vm283, %v1012, 0
      %v1023 = vsel %vm283, %v1009, 0
      %1025 = vmatprep.subr.bf16.mxu0 %v1020
      %1026 = vmatpush1.bf16.msra.mxu0 %v1017
      %1027 = vmatprep.subr.bf16.mxu0 0
      %1028 = vmatpush1.bf16.msra.mxu0 0
      %1029 = vmatprep.subr.bf16.mxu0 0
      %1030 = vmatpush1.bf16.msra.mxu0 0
      %1031 = vmatprep.subr.bf16.mxu0 0
      %1032 = vmatpush1.bf16.msra.mxu0 0
      %1033 = vmatprep.subr.bf16.mxu0 0
      %1034 = vmatpush1.bf16.msra.mxu0 0
      %1035 = vmatprep.subr.bf16.mxu0 0
      %1036 = vmatpush1.bf16.msra.mxu0 0
      %1037 = vmatprep.subr.bf16.mxu0 0
      %1038 = vmatpush1.bf16.msra.mxu0 0
      %1039 = vmatprep.subr.bf16.mxu0 0
      %1040 = vmatpush1.bf16.msra.mxu0 0
      %1041 = vmatprep.subr.bf16.mxu0 0
      %1042 = vmatpush1.bf16.msra.mxu0 0
      %1043 = vmatprep.subr.bf16.mxu0 0
      %1044 = vmatpush1.bf16.msra.mxu0 0
      %1045 = vmatprep.subr.bf16.mxu0 0
      %1046 = vmatpush1.bf16.msra.mxu0 0
      %1047 = vmatprep.subr.bf16.mxu0 0
      %1048 = vmatpush1.bf16.msra.mxu0 0
      %1049 = vmatprep.subr.bf16.mxu0 0
      %1050 = vmatpush1.bf16.msra.mxu0 0
      %1051 = vmatprep.subr.bf16.mxu0 0
      %1052 = vmatpush1.bf16.msra.mxu0 0
      %1053 = vmatprep.subr.bf16.mxu0 0
      %1054 = vmatpush1.bf16.msra.mxu0 0
      %1055 = vmatprep.subr.bf16.mxu0 0
      %1056 = vmatpush1.bf16.msra.mxu0 0
      %1057 = vmatprep.mubr.bf16.mxu0 0
      %1058 = vmatmul.mubr.bf16.gmra.mrb[0].mxu0 %v1014
      %v1059 = vpop.f32.mrb[0].mxu0
      %v1060 = vadd.f32 0.0, %v1059
      %v1061 = vpop.f32.mrb[0].mxu0
      %v1062 = vadd.f32 0.0, %v1061
      %v1063 = vpop.f32.mrb[0].mxu0
      %v1064 = vpop.f32.mrb[0].mxu0
      %1065 = vdwg.mxu0
      %1066 = vmatprep.subr.bf16.mxu0 0
      %1067 = vmatpush1.bf16.msra.mxu0 %v1023
      %1068 = vmatprep.subr.bf16.mxu0 0
      %1069 = vmatpush1.bf16.msra.mxu0 0
      %1070 = vmatprep.subr.bf16.mxu0 0
      %1071 = vmatpush1.bf16.msra.mxu0 0
      %1072 = vmatprep.subr.bf16.mxu0 0
      %1073 = vmatpush1.bf16.msra.mxu0 0
      %1074 = vmatprep.subr.bf16.mxu0 0
      %1075 = vmatpush1.bf16.msra.mxu0 0
      %1076 = vmatprep.subr.bf16.mxu0 0
      %1077 = vmatpush1.bf16.msra.mxu0 0
      %1078 = vmatprep.subr.bf16.mxu0 0
      %1079 = vmatpush1.bf16.msra.mxu0 0
      %1080 = vmatprep.subr.bf16.mxu0 0
      %1081 = vmatpush1.bf16.msra.mxu0 0
      %1082 = vmatprep.subr.bf16.mxu0 0
      %1083 = vmatpush1.bf16.msra.mxu0 0
      %1084 = vmatprep.subr.bf16.mxu0 0
      %1085 = vmatpush1.bf16.msra.mxu0 0
      %1086 = vmatprep.subr.bf16.mxu0 0
      %1087 = vmatpush1.bf16.msra.mxu0 0
      %1088 = vmatprep.subr.bf16.mxu0 0
      %1089 = vmatpush1.bf16.msra.mxu0 0
      %1090 = vmatprep.subr.bf16.mxu0 0
      %1091 = vmatpush1.bf16.msra.mxu0 0
      %1092 = vmatprep.subr.bf16.mxu0 0
      %1093 = vmatpush1.bf16.msra.mxu0 0
      %1094 = vmatprep.subr.bf16.mxu0 0
      %1095 = vmatpush1.bf16.msra.mxu0 0
      %1096 = vmatprep.subr.bf16.mxu0 0
      %1097 = vmatpush1.bf16.msra.mxu0 0
      %1098 = vmatprep.mubr.bf16.mxu0 0
      %1099 = vmatmul.mubr.bf16.gmra.mrb[0].mxu0 %v1014
      %v1100 = vpop.f32.mrb[0].mxu0
      %v1101 = vadd.f32 0.0, %v1100
      %v1102 = vpop.f32.mrb[0].mxu0
      %v1103 = vpop.f32.mrb[0].mxu0
      %v1104 = vpop.f32.mrb[0].mxu0
      %1105 = vdwg.mxu0
      %v1106 = vadd.f32 %v999, %v1060
      %v1107 = vadd.f32 %v1000, %v1062
      %v1108 = vadd.f32 %v1001, %v1101
      %s1109 = scalar_lea.vmem %s1, 32
      %v1110 = vld [vmem:[%s1109] sm:$0xf]
      %1111 = vrot.lane.b32.xlu0 %v267, 90
      %v1112 = vpop.permute.xlu0 %1111
      %1113 = vrot.lane.b32.xlu0 %v268, 90
      %v1114 = vpop.permute.xlu0 %1113
      %1115 = vrot.lane.b32.xlu0 %v269, 90
      %v1116 = vpop.permute.xlu0 %1115
      %vm1117 = vcmask 736256
      %v1118 = vsel %vm1117, %v1112, %v1114
      %v1119 = vsel %vm1117, %v1114, %v1116
      %v1121 = vsel %vm279, %v1110, 0
      %v1124 = vsel %vm283, %v1118, 0
      %v1127 = vsel %vm283, %v1119, 0
      %v1130 = vsel %vm283, %v1116, 0
      %1132 = vmatprep.subr.bf16.mxu0 %v1127
      %1133 = vmatpush1.bf16.msra.mxu0 %v1124
      %1134 = vmatprep.subr.bf16.mxu0 0
      %1135 = vmatpush1.bf16.msra.mxu0 0
      %1136 = vmatprep.subr.bf16.mxu0 0
      %1137 = vmatpush1.bf16.msra.mxu0 0
      %1138 = vmatprep.subr.bf16.mxu0 0
      %1139 = vmatpush1.bf16.msra.mxu0 0
      %1140 = vmatprep.subr.bf16.mxu0 0
      %1141 = vmatpush1.bf16.msra.mxu0 0
      %1142 = vmatprep.subr.bf16.mxu0 0
      %1143 = vmatpush1.bf16.msra.mxu0 0
      %1144 = vmatprep.subr.bf16.mxu0 0
      %1145 = vmatpush1.bf16.msra.mxu0 0
      %1146 = vmatprep.subr.bf16.mxu0 0
      %1147 = vmatpush1.bf16.msra.mxu0 0
      %1148 = vmatprep.subr.bf16.mxu0 0
      %1149 = vmatpush1.bf16.msra.mxu0 0
      %1150 = vmatprep.subr.bf16.mxu0 0
      %1151 = vmatpush1.bf16.msra.mxu0 0
      %1152 = vmatprep.subr.bf16.mxu0 0
      %1153 = vmatpush1.bf16.msra.mxu0 0
      %1154 = vmatprep.subr.bf16.mxu0 0
      %1155 = vmatpush1.bf16.msra.mxu0 0
      %1156 = vmatprep.subr.bf16.mxu0 0
      %1157 = vmatpush1.bf16.msra.mxu0 0
      %1158 = vmatprep.subr.bf16.mxu0 0
      %1159 = vmatpush1.bf16.msra.mxu0 0
      %1160 = vmatprep.subr.bf16.mxu0 0
      %1161 = vmatpush1.bf16.msra.mxu0 0
      %1162 = vmatprep.subr.bf16.mxu0 0
      %1163 = vmatpush1.bf16.msra.mxu0 0
      %1164 = vmatprep.mubr.bf16.mxu0 0
      %1165 = vmatmul.mubr.bf16.gmra.mrb[0].mxu0 %v1121
      %v1166 = vpop.f32.mrb[0].mxu0
      %v1167 = vadd.f32 0.0, %v1166
      %v1168 = vpop.f32.mrb[0].mxu0
      %v1169 = vadd.f32 0.0, %v1168
      %v1170 = vpop.f32.mrb[0].mxu0
      %v1171 = vpop.f32.mrb[0].mxu0
      %1172 = vdwg.mxu0
      %1173 = vmatprep.subr.bf16.mxu0 0
      %1174 = vmatpush1.bf16.msra.mxu0 %v1130
      %1175 = vmatprep.subr.bf16.mxu0 0
      %1176 = vmatpush1.bf16.msra.mxu0 0
      %1177 = vmatprep.subr.bf16.mxu0 0
      %1178 = vmatpush1.bf16.msra.mxu0 0
      %1179 = vmatprep.subr.bf16.mxu0 0
      %1180 = vmatpush1.bf16.msra.mxu0 0
      %1181 = vmatprep.subr.bf16.mxu0 0
      %1182 = vmatpush1.bf16.msra.mxu0 0
      %1183 = vmatprep.subr.bf16.mxu0 0
      %1184 = vmatpush1.bf16.msra.mxu0 0
      %1185 = vmatprep.subr.bf16.mxu0 0
      %1186 = vmatpush1.bf16.msra.mxu0 0
      %1187 = vmatprep.subr.bf16.mxu0 0
      %1188 = vmatpush1.bf16.msra.mxu0 0
      %1189 = vmatprep.subr.bf16.mxu0 0
      %1190 = vmatpush1.bf16.msra.mxu0 0
      %1191 = vmatprep.subr.bf16.mxu0 0
      %1192 = vmatpush1.bf16.msra.mxu0 0
      %1193 = vmatprep.subr.bf16.mxu0 0
      %1194 = vmatpush1.bf16.msra.mxu0 0
      %1195 = vmatprep.subr.bf16.mxu0 0
      %1196 = vmatpush1.bf16.msra.mxu0 0
      %1197 = vmatprep.subr.bf16.mxu0 0
      %1198 = vmatpush1.bf16.msra.mxu0 0
      %1199 = vmatprep.subr.bf16.mxu0 0
      %1200 = vmatpush1.bf16.msra.mxu0 0
      %1201 = vmatprep.subr.bf16.mxu0 0
      %1202 = vmatpush1.bf16.msra.mxu0 0
      %1203 = vmatprep.subr.bf16.mxu0 0
      %1204 = vmatpush1.bf16.msra.mxu0 0
      %1205 = vmatprep.mubr.bf16.mxu0 0
      %1206 = vmatmul.mubr.bf16.gmra.mrb[0].mxu0 %v1121
      %v1207 = vpop.f32.mrb[0].mxu0
      %v1208 = vadd.f32 0.0, %v1207
      %v1209 = vpop.f32.mrb[0].mxu0
      %v1210 = vpop.f32.mrb[0].mxu0
      %v1211 = vpop.f32.mrb[0].mxu0
      %1212 = vdwg.mxu0
      %v1213 = vadd.f32 %v1106, %v1167
      %v1214 = vadd.f32 %v1107, %v1169
      %v1215 = vadd.f32 %v1108, %v1208
      %v1216 = vld [vmem:[%s2] sm:$0xff]
      %1218 = vset.pattern.permute.xlu0 0
      %1219 = vperm.xlu0 %1218, %v1216
      %v1220 = vpop.permute.xlu0 %1219
      %v1222 = vadd.f32 %v1213, %v1220
      %v1223 = vadd.f32 %v1214, %v1220
      %v1224 = vadd.f32 %v1215, %v1220
      %vm1225 = vcmp.gt.f32.partialorder %v1222, 0.0
      %vm1226 = vcmp.gt.f32.partialorder %v1223, 0.0
      %vm1227 = vcmp.gt.f32.partialorder %v1224, 0.0
      %v1228 = vmul.f32 %v1222, 0.2
      %v1229 = vmul.f32 %v1223, 0.2
      %v1230 = vmul.f32 %v1224, 0.2
      %v1231 = vsel %vm1225, %v1222, %v1228
      %v1232 = vsel %vm1226, %v1223, %v1229
      %v1233 = vsel %vm1227, %v1224, %v1230
      %v1235 = vlaneseq
      %v1236 = vshrl.u32 %v1235, 7
      %v1237 = vsub.s32 0, %v1236
      %v1238 = vrot.slane %v253, %v1237
      %v1239 = vlaneseq
      %v1240 = vshrl.u32 %v1239, 7
      %v1241 = vsub.s32 1, %v1240
      %v1242 = vrot.slane %v253, %v1241
      %v1243 = vlaneseq
      %v1244 = vshrl.u32 %v1243, 7
      %v1245 = vsub.s32 2, %v1244
      %v1246 = vrot.slane %v253, %v1245
      %v1250 = vmul.f32 %v1231, %v1238
      %v1251 = vmul.f32 %v1232, %v1242
      %v1252 = vmul.f32 %v1233, %v1246
      %1253 = vst [vmem:[#allocation2] sm:$0xff] 0
      %vm1254 = vcmask 551936
      %1255 = vst.msk [vmem:[#allocation2 + $0x8] sm:$0xf] %vm1254, 0
      %v1256 = vpack.c.bf16 %v1250, %v1250
      %v1257 = vpack.c.bf16 %v1251, %v1251
      %v1258 = vpack.c.bf16 %v1252, %v1252
      %v1262 = vunpack.c.l.b16 %v1256
      %v1263 = vunpack.c.l.b16 %v1257
      %v1264 = vunpack.c.l.b16 %v1258
      %v1265 = vpack.c.b16 %v1263, %v1262
      %v1266 = vpack.c.b16 %v1264, %v1264
      %1267 = vrot.lane.b32.xlu0 %v1265, 19
      %v1268 = vpop.permute.xlu0 %1267
      %1269 = vrot.lane.b32.xlu0 %v1266, 19
      %v1270 = vpop.permute.xlu0 %1269
      %v1271 = vrot.slane %v1268, 4
      %vm1272 = vcmask 154624
      %v1273 = vsel %vm1272, %v1271, %v1268
      %v1274 = vsel %vm1272, %v1271, %v1270
      %vm1277 = vcmask 1043608
      %vm1278 = vcmask 1047556
      %vm1279 = vmor %vm1278, %vm1277
      %1280 = vst.msk [vmem:[#allocation2] sm:$0xff] %vm1279, %v1273
      %vm1281 = vcmask 396288
      %1282 = vst.msk [vmem:[#allocation2 + $0x8] sm:$0xf] %vm1281, %v1274
      %v1283 = vld [vmem:[#allocation2] sm:$0xff]
      %v1284 = vld [vmem:[#allocation2 + $0x8] sm:$0xf]
      %v1285 = vld [vmem:[%s3] sm:$0xf]
      %s1286 = scalar_lea.vmem %s3, 4
      %v1287 = vld [vmem:[%s1286] sm:$0xf]
      %v1290 = vunpack.c.l.b16 %v1283
      %v1291 = vunpack.c.h.b16 %v1283
      %v1292 = vunpack.c.l.b16 %v1284
      %v1293 = vpack.c.b16 %v1290, %v1290
      %v1294 = vpack.c.b16 %v1291, %v1291
      %v1295 = vpack.c.b16 %v1292, %v1292
      %1296 = vrot.lane.b32.xlu0 %v1293, 127
      %v1297 = vpop.permute.xlu0 %1296
      %1298 = vrot.lane.b32.xlu0 %v1294, 127
      %v1299 = vpop.permute.xlu0 %1298
      %1300 = vrot.lane.b32.xlu0 %v1295, 127
      %v1301 = vpop.permute.xlu0 %1300
      %v1302 = vsel %vm276, %v1297, %v1299
      %v1303 = vsel %vm276, %v1299, %v1301
      %v1305 = vsel %vm279, %v1287, 0
      %v1308 = vsel %vm283, %v1302, 0
      %v1311 = vsel %vm283, %v1303, 0
      %v1314 = vsel %vm283, %v1301, 0
      %1316 = vmatprep.subr.bf16.mxu0 %v1311
      %1317 = vmatpush1.bf16.msra.mxu0 %v1308
      %1318 = vmatprep.subr.bf16.mxu0 0
      %1319 = vmatpush1.bf16.msra.mxu0 0
      %1320 = vmatprep.subr.bf16.mxu0 0
      %1321 = vmatpush1.bf16.msra.mxu0 0
      %1322 = vmatprep.subr.bf16.mxu0 0
      %1323 = vmatpush1.bf16.msra.mxu0 0
      %1324 = vmatprep.subr.bf16.mxu0 0
      %1325 = vmatpush1.bf16.msra.mxu0 0
      %1326 = vmatprep.subr.bf16.mxu0 0
      %1327 = vmatpush1.bf16.msra.mxu0 0
      %1328 = vmatprep.subr.bf16.mxu0 0
      %1329 = vmatpush1.bf16.msra.mxu0 0
      %1330 = vmatprep.subr.bf16.mxu0 0
      %1331 = vmatpush1.bf16.msra.mxu0 0
      %1332 = vmatprep.subr.bf16.mxu0 0
      %1333 = vmatpush1.bf16.msra.mxu0 0
      %1334 = vmatprep.subr.bf16.mxu0 0
      %1335 = vmatpush1.bf16.msra.mxu0 0
      %1336 = vmatprep.subr.bf16.mxu0 0
      %1337 = vmatpush1.bf16.msra.mxu0 0
      %1338 = vmatprep.subr.bf16.mxu0 0
      %1339 = vmatpush1.bf16.msra.mxu0 0
      %1340 = vmatprep.subr.bf16.mxu0 0
      %1341 = vmatpush1.bf16.msra.mxu0 0
      %1342 = vmatprep.subr.bf16.mxu0 0
      %1343 = vmatpush1.bf16.msra.mxu0 0
      %1344 = vmatprep.subr.bf16.mxu0 0
      %1345 = vmatpush1.bf16.msra.mxu0 0
      %1346 = vmatprep.subr.bf16.mxu0 0
      %1347 = vmatpush1.bf16.msra.mxu0 0
      %1348 = vmatprep.mubr.bf16.mxu0 0
      %1349 = vmatmul.mubr.bf16.gmra.mrb[0].mxu0 %v1305
      %v1350 = vpop.f32.mrb[0].mxu0
      %v1351 = vadd.f32 0.0, %v1350
      %v1352 = vpop.f32.mrb[0].mxu0
      %v1353 = vadd.f32 0.0, %v1352
      %v1354 = vpop.f32.mrb[0].mxu0
      %v1355 = vpop.f32.mrb[0].mxu0
      %1356 = vdwg.mxu0
      %1357 = vmatprep.subr.bf16.mxu0 0
      %1358 = vmatpush1.bf16.msra.mxu0 %v1314
      %1359 = vmatprep.subr.bf16.mxu0 0
      %1360 = vmatpush1.bf16.msra.mxu0 0
      %1361 = vmatprep.subr.bf16.mxu0 0
      %1362 = vmatpush1.bf16.msra.mxu0 0
      %1363 = vmatprep.subr.bf16.mxu0 0
      %1364 = vmatpush1.bf16.msra.mxu0 0
      %1365 = vmatprep.subr.bf16.mxu0 0
      %1366 = vmatpush1.bf16.msra.mxu0 0
      %1367 = vmatprep.subr.bf16.mxu0 0
      %1368 = vmatpush1.bf16.msra.mxu0 0
      %1369 = vmatprep.subr.bf16.mxu0 0
      %1370 = vmatpush1.bf16.msra.mxu0 0
      %1371 = vmatprep.subr.bf16.mxu0 0
      %1372 = vmatpush1.bf16.msra.mxu0 0
      %1373 = vmatprep.subr.bf16.mxu0 0
      %1374 = vmatpush1.bf16.msra.mxu0 0
      %1375 = vmatprep.subr.bf16.mxu0 0
      %1376 = vmatpush1.bf16.msra.mxu0 0
      %1377 = vmatprep.subr.bf16.mxu0 0
      %1378 = vmatpush1.bf16.msra.mxu0 0
      %1379 = vmatprep.subr.bf16.mxu0 0
      %1380 = vmatpush1.bf16.msra.mxu0 0
      %1381 = vmatprep.subr.bf16.mxu0 0
      %1382 = vmatpush1.bf16.msra.mxu0 0
      %1383 = vmatprep.subr.bf16.mxu0 0
      %1384 = vmatpush1.bf16.msra.mxu0 0
      %1385 = vmatprep.subr.bf16.mxu0 0
      %1386 = vmatpush1.bf16.msra.mxu0 0
      %1387 = vmatprep.subr.bf16.mxu0 0
      %1388 = vmatpush1.bf16.msra.mxu0 0
      %1389 = vmatprep.mubr.bf16.mxu0 0
      %1390 = vmatmul.mubr.bf16.gmra.mrb[0].mxu0 %v1305
      %v1391 = vpop.f32.mrb[0].mxu0
      %v1392 = vadd.f32 0.0, %v1391
      %v1393 = vpop.f32.mrb[0].mxu0
      %v1394 = vpop.f32.mrb[0].mxu0
      %v1395 = vpop.f32.mrb[0].mxu0
      %1396 = vdwg.mxu0
      %v1398 = vsel %vm279, %v1285, 0
      %v1401 = vsel %vm283, %v1293, 0
      %v1404 = vsel %vm283, %v1294, 0
      %v1407 = vsel %vm283, %v1295, 0
      %1409 = vmatprep.subr.bf16.mxu0 %v1404
      %1410 = vmatpush1.bf16.msra.mxu0 %v1401
      %1411 = vmatprep.subr.bf16.mxu0 0
      %1412 = vmatpush1.bf16.msra.mxu0 0
      %1413 = vmatprep.subr.bf16.mxu0 0
      %1414 = vmatpush1.bf16.msra.mxu0 0
      %1415 = vmatprep.subr.bf16.mxu0 0
      %1416 = vmatpush1.bf16.msra.mxu0 0
      %1417 = vmatprep.subr.bf16.mxu0 0
      %1418 = vmatpush1.bf16.msra.mxu0 0
      %1419 = vmatprep.subr.bf16.mxu0 0
      %1420 = vmatpush1.bf16.msra.mxu0 0
      %1421 = vmatprep.subr.bf16.mxu0 0
      %1422 = vmatpush1.bf16.msra.mxu0 0
      %1423 = vmatprep.subr.bf16.mxu0 0
      %1424 = vmatpush1.bf16.msra.mxu0 0
      %1425 = vmatprep.subr.bf16.mxu0 0
      %1426 = vmatpush1.bf16.msra.mxu0 0
      %1427 = vmatprep.subr.bf16.mxu0 0
      %1428 = vmatpush1.bf16.msra.mxu0 0
      %1429 = vmatprep.subr.bf16.mxu0 0
      %1430 = vmatpush1.bf16.msra.mxu0 0
      %1431 = vmatprep.subr.bf16.mxu0 0
      %1432 = vmatpush1.bf16.msra.mxu0 0
      %1433 = vmatprep.subr.bf16.mxu0 0
      %1434 = vmatpush1.bf16.msra.mxu0 0
      %1435 = vmatprep.subr.bf16.mxu0 0
      %1436 = vmatpush1.bf16.msra.mxu0 0
      %1437 = vmatprep.subr.bf16.mxu0 0
      %1438 = vmatpush1.bf16.msra.mxu0 0
      %1439 = vmatprep.subr.bf16.mxu0 0
      %1440 = vmatpush1.bf16.msra.mxu0 0
      %1441 = vmatprep.mubr.bf16.mxu0 0
      %1442 = vmatmul.mubr.bf16.gmra.mrb[0].mxu0 %v1398
      %v1443 = vpop.f32.mrb[0].mxu0
      %v1444 = vadd.f32 %v1351, %v1443
      %v1445 = vpop.f32.mrb[0].mxu0
      %v1446 = vadd.f32 %v1353, %v1445
      %v1447 = vpop.f32.mrb[0].mxu0
      %v1448 = vpop.f32.mrb[0].mxu0
      %1449 = vdwg.mxu0
      %1450 = vmatprep.subr.bf16.mxu0 0
      %1451 = vmatpush1.bf16.msra.mxu0 %v1407
      %1452 = vmatprep.subr.bf16.mxu0 0
      %1453 = vmatpush1.bf16.msra.mxu0 0
      %1454 = vmatprep.subr.bf16.mxu0 0
      %1455 = vmatpush1.bf16.msra.mxu0 0
      %1456 = vmatprep.subr.bf16.mxu0 0
      %1457 = vmatpush1.bf16.msra.mxu0 0
      %1458 = vmatprep.subr.bf16.mxu0 0
      %1459 = vmatpush1.bf16.msra.mxu0 0
      %1460 = vmatprep.subr.bf16.mxu0 0
      %1461 = vmatpush1.bf16.msra.mxu0 0
      %1462 = vmatprep.subr.bf16.mxu0 0
      %1463 = vmatpush1.bf16.msra.mxu0 0
      %1464 = vmatprep.subr.bf16.mxu0 0
      %1465 = vmatpush1.bf16.msra.mxu0 0
      %1466 = vmatprep.subr.bf16.mxu0 0
      %1467 = vmatpush1.bf16.msra.mxu0 0
      %1468 = vmatprep.subr.bf16.mxu0 0
      %1469 = vmatpush1.bf16.msra.mxu0 0
      %1470 = vmatprep.subr.bf16.mxu0 0
      %1471 = vmatpush1.bf16.msra.mxu0 0
      %1472 = vmatprep.subr.bf16.mxu0 0
      %1473 = vmatpush1.bf16.msra.mxu0 0
      %1474 = vmatprep.subr.bf16.mxu0 0
      %1475 = vmatpush1.bf16.msra.mxu0 0
      %1476 = vmatprep.subr.bf16.mxu0 0
      %1477 = vmatpush1.bf16.msra.mxu0 0
      %1478 = vmatprep.subr.bf16.mxu0 0
      %1479 = vmatpush1.bf16.msra.mxu0 0
      %1480 = vmatprep.subr.bf16.mxu0 0
      %1481 = vmatpush1.bf16.msra.mxu0 0
      %1482 = vmatprep.mubr.bf16.mxu0 0
      %1483 = vmatmul.mubr.bf16.gmra.mrb[0].mxu0 %v1398
      %v1484 = vpop.f32.mrb[0].mxu0
      %v1485 = vadd.f32 %v1392, %v1484
      %v1486 = vpop.f32.mrb[0].mxu0
      %v1487 = vpop.f32.mrb[0].mxu0
      %v1488 = vpop.f32.mrb[0].mxu0
      %1489 = vdwg.mxu0
      %s1490 = scalar_lea.vmem %s3, 8
      %v1491 = vld [vmem:[%s1490] sm:$0xf]
      %1492 = vrot.lane.b32.xlu0 %v1293, 126
      %v1493 = vpop.permute.xlu0 %1492
      %1494 = vrot.lane.b32.xlu0 %v1294, 126
      %v1495 = vpop.permute.xlu0 %1494
      %1496 = vrot.lane.b32.xlu0 %v1295, 126
      %v1497 = vpop.permute.xlu0 %1496
      %v1498 = vsel %vm475, %v1493, %v1495
      %v1499 = vsel %vm475, %v1495, %v1497
      %v1501 = vsel %vm279, %v1491, 0
      %v1504 = vsel %vm283, %v1498, 0
      %v1507 = vsel %vm283, %v1499, 0
      %v1510 = vsel %vm283, %v1497, 0
      %1512 = vmatprep.subr.bf16.mxu0 %v1507
      %1513 = vmatpush1.bf16.msra.mxu0 %v1504
      %1514 = vmatprep.subr.bf16.mxu0 0
      %1515 = vmatpush1.bf16.msra.mxu0 0
      %1516 = vmatprep.subr.bf16.mxu0 0
      %1517 = vmatpush1.bf16.msra.mxu0 0
      %1518 = vmatprep.subr.bf16.mxu0 0
      %1519 = vmatpush1.bf16.msra.mxu0 0
      %1520 = vmatprep.subr.bf16.mxu0 0
      %1521 = vmatpush1.bf16.msra.mxu0 0
      %1522 = vmatprep.subr.bf16.mxu0 0
      %1523 = vmatpush1.bf16.msra.mxu0 0
      %1524 = vmatprep.subr.bf16.mxu0 0
      %1525 = vmatpush1.bf16.msra.mxu0 0
      %1526 = vmatprep.subr.bf16.mxu0 0
      %1527 = vmatpush1.bf16.msra.mxu0 0
      %1528 = vmatprep.subr.bf16.mxu0 0
      %1529 = vmatpush1.bf16.msra.mxu0 0
      %1530 = vmatprep.subr.bf16.mxu0 0
      %1531 = vmatpush1.bf16.msra.mxu0 0
      %1532 = vmatprep.subr.bf16.mxu0 0
      %1533 = vmatpush1.bf16.msra.mxu0 0
      %1534 = vmatprep.subr.bf16.mxu0 0
      %1535 = vmatpush1.bf16.msra.mxu0 0
      %1536 = vmatprep.subr.bf16.mxu0 0
      %1537 = vmatpush1.bf16.msra.mxu0 0
      %1538 = vmatprep.subr.bf16.mxu0 0
      %1539 = vmatpush1.bf16.msra.mxu0 0
      %1540 = vmatprep.subr.bf16.mxu0 0
      %1541 = vmatpush1.bf16.msra.mxu0 0
      %1542 = vmatprep.subr.bf16.mxu0 0
      %1543 = vmatpush1.bf16.msra.mxu0 0
      %1544 = vmatprep.mubr.bf16.mxu0 0
      %1545 = vmatmul.mubr.bf16.gmra.mrb[0].mxu0 %v1501
      %v1546 = vpop.f32.mrb[0].mxu0
      %v1547 = vadd.f32 0.0, %v1546
      %v1548 = vpop.f32.mrb[0].mxu0
      %v1549 = vadd.f32 0.0, %v1548
      %v1550 = vpop.f32.mrb[0].mxu0
      %v1551 = vpop.f32.mrb[0].mxu0
      %1552 = vdwg.mxu0
      %1553 = vmatprep.subr.bf16.mxu0 0
      %1554 = vmatpush1.bf16.msra.mxu0 %v1510
      %1555 = vmatprep.subr.bf16.mxu0 0
      %1556 = vmatpush1.bf16.msra.mxu0 0
      %1557 = vmatprep.subr.bf16.mxu0 0
      %1558 = vmatpush1.bf16.msra.mxu0 0
      %1559 = vmatprep.subr.bf16.mxu0 0
      %1560 = vmatpush1.bf16.msra.mxu0 0
      %1561 = vmatprep.subr.bf16.mxu0 0
      %1562 = vmatpush1.bf16.msra.mxu0 0
      %1563 = vmatprep.subr.bf16.mxu0 0
      %1564 = vmatpush1.bf16.msra.mxu0 0
      %1565 = vmatprep.subr.bf16.mxu0 0
      %1566 = vmatpush1.bf16.msra.mxu0 0
      %1567 = vmatprep.subr.bf16.mxu0 0
      %1568 = vmatpush1.bf16.msra.mxu0 0
      %1569 = vmatprep.subr.bf16.mxu0 0
      %1570 = vmatpush1.bf16.msra.mxu0 0
      %1571 = vmatprep.subr.bf16.mxu0 0
      %1572 = vmatpush1.bf16.msra.mxu0 0
      %1573 = vmatprep.subr.bf16.mxu0 0
      %1574 = vmatpush1.bf16.msra.mxu0 0
      %1575 = vmatprep.subr.bf16.mxu0 0
      %1576 = vmatpush1.bf16.msra.mxu0 0
      %1577 = vmatprep.subr.bf16.mxu0 0
      %1578 = vmatpush1.bf16.msra.mxu0 0
      %1579 = vmatprep.subr.bf16.mxu0 0
      %1580 = vmatpush1.bf16.msra.mxu0 0
      %1581 = vmatprep.subr.bf16.mxu0 0
      %1582 = vmatpush1.bf16.msra.mxu0 0
      %1583 = vmatprep.subr.bf16.mxu0 0
      %1584 = vmatpush1.bf16.msra.mxu0 0
      %1585 = vmatprep.mubr.bf16.mxu0 0
      %1586 = vmatmul.mubr.bf16.gmra.mrb[0].mxu0 %v1501
      %v1587 = vpop.f32.mrb[0].mxu0
      %v1588 = vadd.f32 0.0, %v1587
      %v1589 = vpop.f32.mrb[0].mxu0
      %v1590 = vpop.f32.mrb[0].mxu0
      %v1591 = vpop.f32.mrb[0].mxu0
      %1592 = vdwg.mxu0
      %v1593 = vadd.f32 %v1444, %v1547
      %v1594 = vadd.f32 %v1446, %v1549
      %v1595 = vadd.f32 %v1485, %v1588
      %s1596 = scalar_lea.vmem %s3, 12
      %v1597 = vld [vmem:[%s1596] sm:$0xf]
      %1598 = vrot.lane.b32.xlu0 %v1293, 110
      %v1599 = vpop.permute.xlu0 %1598
      %1600 = vrot.lane.b32.xlu0 %v1294, 110
      %v1601 = vpop.permute.xlu0 %1600
      %1602 = vrot.lane.b32.xlu0 %v1295, 110
      %v1603 = vpop.permute.xlu0 %1602
      %v1604 = vsel %vm582, %v1599, %v1601
      %v1605 = vsel %vm582, %v1601, %v1603
      %v1607 = vsel %vm279, %v1597, 0
      %v1610 = vsel %vm283, %v1604, 0
      %v1613 = vsel %vm283, %v1605, 0
      %v1616 = vsel %vm283, %v1603, 0
      %1618 = vmatprep.subr.bf16.mxu0 %v1613
      %1619 = vmatpush1.bf16.msra.mxu0 %v1610
      %1620 = vmatprep.subr.bf16.mxu0 0
      %1621 = vmatpush1.bf16.msra.mxu0 0
      %1622 = vmatprep.subr.bf16.mxu0 0
      %1623 = vmatpush1.bf16.msra.mxu0 0
      %1624 = vmatprep.subr.bf16.mxu0 0
      %1625 = vmatpush1.bf16.msra.mxu0 0
      %1626 = vmatprep.subr.bf16.mxu0 0
      %1627 = vmatpush1.bf16.msra.mxu0 0
      %1628 = vmatprep.subr.bf16.mxu0 0
      %1629 = vmatpush1.bf16.msra.mxu0 0
      %1630 = vmatprep.subr.bf16.mxu0 0
      %1631 = vmatpush1.bf16.msra.mxu0 0
      %1632 = vmatprep.subr.bf16.mxu0 0
      %1633 = vmatpush1.bf16.msra.mxu0 0
      %1634 = vmatprep.subr.bf16.mxu0 0
      %1635 = vmatpush1.bf16.msra.mxu0 0
      %1636 = vmatprep.subr.bf16.mxu0 0
      %1637 = vmatpush1.bf16.msra.mxu0 0
      %1638 = vmatprep.subr.bf16.mxu0 0
      %1639 = vmatpush1.bf16.msra.mxu0 0
      %1640 = vmatprep.subr.bf16.mxu0 0
      %1641 = vmatpush1.bf16.msra.mxu0 0
      %1642 = vmatprep.subr.bf16.mxu0 0
      %1643 = vmatpush1.bf16.msra.mxu0 0
      %1644 = vmatprep.subr.bf16.mxu0 0
      %1645 = vmatpush1.bf16.msra.mxu0 0
      %1646 = vmatprep.subr.bf16.mxu0 0
      %1647 = vmatpush1.bf16.msra.mxu0 0
      %1648 = vmatprep.subr.bf16.mxu0 0
      %1649 = vmatpush1.bf16.msra.mxu0 0
      %1650 = vmatprep.mubr.bf16.mxu0 0
      %1651 = vmatmul.mubr.bf16.gmra.mrb[0].mxu0 %v1607
      %v1652 = vpop.f32.mrb[0].mxu0
      %v1653 = vadd.f32 0.0, %v1652
      %v1654 = vpop.f32.mrb[0].mxu0
      %v1655 = vadd.f32 0.0, %v1654
      %v1656 = vpop.f32.mrb[0].mxu0
      %v1657 = vpop.f32.mrb[0].mxu0
      %1658 = vdwg.mxu0
      %1659 = vmatprep.subr.bf16.mxu0 0
      %1660 = vmatpush1.bf16.msra.mxu0 %v1616
      %1661 = vmatprep.subr.bf16.mxu0 0
      %1662 = vmatpush1.bf16.msra.mxu0 0
      %1663 = vmatprep.subr.bf16.mxu0 0
      %1664 = vmatpush1.bf16.msra.mxu0 0
      %1665 = vmatprep.subr.bf16.mxu0 0
      %1666 = vmatpush1.bf16.msra.mxu0 0
      %1667 = vmatprep.subr.bf16.mxu0 0
      %1668 = vmatpush1.bf16.msra.mxu0 0
      %1669 = vmatprep.subr.bf16.mxu0 0
      %1670 = vmatpush1.bf16.msra.mxu0 0
      %1671 = vmatprep.subr.bf16.mxu0 0
      %1672 = vmatpush1.bf16.msra.mxu0 0
      %1673 = vmatprep.subr.bf16.mxu0 0
      %1674 = vmatpush1.bf16.msra.mxu0 0
      %1675 = vmatprep.subr.bf16.mxu0 0
      %1676 = vmatpush1.bf16.msra.mxu0 0
      %1677 = vmatprep.subr.bf16.mxu0 0
      %1678 = vmatpush1.bf16.msra.mxu0 0
      %1679 = vmatprep.subr.bf16.mxu0 0
      %1680 = vmatpush1.bf16.msra.mxu0 0
      %1681 = vmatprep.subr.bf16.mxu0 0
      %1682 = vmatpush1.bf16.msra.mxu0 0
      %1683 = vmatprep.subr.bf16.mxu0 0
      %1684 = vmatpush1.bf16.msra.mxu0 0
      %1685 = vmatprep.subr.bf16.mxu0 0
      %1686 = vmatpush1.bf16.msra.mxu0 0
      %1687 = vmatprep.subr.bf16.mxu0 0
      %1688 = vmatpush1.bf16.msra.mxu0 0
      %1689 = vmatprep.subr.bf16.mxu0 0
      %1690 = vmatpush1.bf16.msra.mxu0 0
      %1691 = vmatprep.mubr.bf16.mxu0 0
      %1692 = vmatmul.mubr.bf16.gmra.mrb[0].mxu0 %v1607
      %v1693 = vpop.f32.mrb[0].mxu0
      %v1694 = vadd.f32 0.0, %v1693
      %v1695 = vpop.f32.mrb[0].mxu0
      %v1696 = vpop.f32.mrb[0].mxu0
      %v1697 = vpop.f32.mrb[0].mxu0
      %1698 = vdwg.mxu0
      %v1699 = vadd.f32 %v1593, %v1653
      %v1700 = vadd.f32 %v1594, %v1655
      %v1701 = vadd.f32 %v1595, %v1694
      %s1702 = scalar_lea.vmem %s3, 16
      %v1703 = vld [vmem:[%s1702] sm:$0xf]
      %1704 = vrot.lane.b32.xlu0 %v1293, 109
      %v1705 = vpop.permute.xlu0 %1704
      %1706 = vrot.lane.b32.xlu0 %v1294, 109
      %v1707 = vpop.permute.xlu0 %1706
      %1708 = vrot.lane.b32.xlu0 %v1295, 109
      %v1709 = vpop.permute.xlu0 %1708
      %v1710 = vsel %vm689, %v1705, %v1707
      %v1711 = vsel %vm689, %v1707, %v1709
      %v1713 = vsel %vm279, %v1703, 0
      %v1716 = vsel %vm283, %v1710, 0
      %v1719 = vsel %vm283, %v1711, 0
      %v1722 = vsel %vm283, %v1709, 0
      %1724 = vmatprep.subr.bf16.mxu0 %v1719
      %1725 = vmatpush1.bf16.msra.mxu0 %v1716
      %1726 = vmatprep.subr.bf16.mxu0 0
      %1727 = vmatpush1.bf16.msra.mxu0 0
      %1728 = vmatprep.subr.bf16.mxu0 0
      %1729 = vmatpush1.bf16.msra.mxu0 0
      %1730 = vmatprep.subr.bf16.mxu0 0
      %1731 = vmatpush1.bf16.msra.mxu0 0
      %1732 = vmatprep.subr.bf16.mxu0 0
      %1733 = vmatpush1.bf16.msra.mxu0 0
      %1734 = vmatprep.subr.bf16.mxu0 0
      %1735 = vmatpush1.bf16.msra.mxu0 0
      %1736 = vmatprep.subr.bf16.mxu0 0
      %1737 = vmatpush1.bf16.msra.mxu0 0
      %1738 = vmatprep.subr.bf16.mxu0 0
      %1739 = vmatpush1.bf16.msra.mxu0 0
      %1740 = vmatprep.subr.bf16.mxu0 0
      %1741 = vmatpush1.bf16.msra.mxu0 0
      %1742 = vmatprep.subr.bf16.mxu0 0
      %1743 = vmatpush1.bf16.msra.mxu0 0
      %1744 = vmatprep.subr.bf16.mxu0 0
      %1745 = vmatpush1.bf16.msra.mxu0 0
      %1746 = vmatprep.subr.bf16.mxu0 0
      %1747 = vmatpush1.bf16.msra.mxu0 0
      %1748 = vmatprep.subr.bf16.mxu0 0
      %1749 = vmatpush1.bf16.msra.mxu0 0
      %1750 = vmatprep.subr.bf16.mxu0 0
      %1751 = vmatpush1.bf16.msra.mxu0 0
      %1752 = vmatprep.subr.bf16.mxu0 0
      %1753 = vmatpush1.bf16.msra.mxu0 0
      %1754 = vmatprep.subr.bf16.mxu0 0
      %1755 = vmatpush1.bf16.msra.mxu0 0
      %1756 = vmatprep.mubr.bf16.mxu0 0
      %1757 = vmatmul.mubr.bf16.gmra.mrb[0].mxu0 %v1713
      %v1758 = vpop.f32.mrb[0].mxu0
      %v1759 = vadd.f32 0.0, %v1758
      %v1760 = vpop.f32.mrb[0].mxu0
      %v1761 = vadd.f32 0.0, %v1760
      %v1762 = vpop.f32.mrb[0].mxu0
      %v1763 = vpop.f32.mrb[0].mxu0
      %1764 = vdwg.mxu0
      %1765 = vmatprep.subr.bf16.mxu0 0
      %1766 = vmatpush1.bf16.msra.mxu0 %v1722
      %1767 = vmatprep.subr.bf16.mxu0 0
      %1768 = vmatpush1.bf16.msra.mxu0 0
      %1769 = vmatprep.subr.bf16.mxu0 0
      %1770 = vmatpush1.bf16.msra.mxu0 0
      %1771 = vmatprep.subr.bf16.mxu0 0
      %1772 = vmatpush1.bf16.msra.mxu0 0
      %1773 = vmatprep.subr.bf16.mxu0 0
      %1774 = vmatpush1.bf16.msra.mxu0 0
      %1775 = vmatprep.subr.bf16.mxu0 0
      %1776 = vmatpush1.bf16.msra.mxu0 0
      %1777 = vmatprep.subr.bf16.mxu0 0
      %1778 = vmatpush1.bf16.msra.mxu0 0
      %1779 = vmatprep.subr.bf16.mxu0 0
      %1780 = vmatpush1.bf16.msra.mxu0 0
      %1781 = vmatprep.subr.bf16.mxu0 0
      %1782 = vmatpush1.bf16.msra.mxu0 0
      %1783 = vmatprep.subr.bf16.mxu0 0
      %1784 = vmatpush1.bf16.msra.mxu0 0
      %1785 = vmatprep.subr.bf16.mxu0 0
      %1786 = vmatpush1.bf16.msra.mxu0 0
      %1787 = vmatprep.subr.bf16.mxu0 0
      %1788 = vmatpush1.bf16.msra.mxu0 0
      %1789 = vmatprep.subr.bf16.mxu0 0
      %1790 = vmatpush1.bf16.msra.mxu0 0
      %1791 = vmatprep.subr.bf16.mxu0 0
      %1792 = vmatpush1.bf16.msra.mxu0 0
      %1793 = vmatprep.subr.bf16.mxu0 0
      %1794 = vmatpush1.bf16.msra.mxu0 0
      %1795 = vmatprep.subr.bf16.mxu0 0
      %1796 = vmatpush1.bf16.msra.mxu0 0
      %1797 = vmatprep.mubr.bf16.mxu0 0
      %1798 = vmatmul.mubr.bf16.gmra.mrb[0].mxu0 %v1713
      %v1799 = vpop.f32.mrb[0].mxu0
      %v1800 = vadd.f32 0.0, %v1799
      %v1801 = vpop.f32.mrb[0].mxu0
      %v1802 = vpop.f32.mrb[0].mxu0
      %v1803 = vpop.f32.mrb[0].mxu0
      %1804 = vdwg.mxu0
      %v1805 = vadd.f32 %v1699, %v1759
      %v1806 = vadd.f32 %v1700, %v1761
      %v1807 = vadd.f32 %v1701, %v1800
      %s1808 = scalar_lea.vmem %s3, 20
      %v1809 = vld [vmem:[%s1808] sm:$0xf]
      %1810 = vrot.lane.b32.xlu0 %v1293, 108
      %v1811 = vpop.permute.xlu0 %1810
      %1812 = vrot.lane.b32.xlu0 %v1294, 108
      %v1813 = vpop.permute.xlu0 %1812
      %1814 = vrot.lane.b32.xlu0 %v1295, 108
      %v1815 = vpop.permute.xlu0 %1814
      %v1816 = vsel %vm796, %v1811, %v1813
      %v1817 = vsel %vm796, %v1813, %v1815
      %v1819 = vsel %vm279, %v1809, 0
      %v1822 = vsel %vm283, %v1816, 0
      %v1825 = vsel %vm283, %v1817, 0
      %v1828 = vsel %vm283, %v1815, 0
      %1830 = vmatprep.subr.bf16.mxu0 %v1825
      %1831 = vmatpush1.bf16.msra.mxu0 %v1822
      %1832 = vmatprep.subr.bf16.mxu0 0
      %1833 = vmatpush1.bf16.msra.mxu0 0
      %1834 = vmatprep.subr.bf16.mxu0 0
      %1835 = vmatpush1.bf16.msra.mxu0 0
      %1836 = vmatprep.subr.bf16.mxu0 0
      %1837 = vmatpush1.bf16.msra.mxu0 0
      %1838 = vmatprep.subr.bf16.mxu0 0
      %1839 = vmatpush1.bf16.msra.mxu0 0
      %1840 = vmatprep.subr.bf16.mxu0 0
      %1841 = vmatpush1.bf16.msra.mxu0 0
      %1842 = vmatprep.subr.bf16.mxu0 0
      %1843 = vmatpush1.bf16.msra.mxu0 0
      %1844 = vmatprep.subr.bf16.mxu0 0
      %1845 = vmatpush1.bf16.msra.mxu0 0
      %1846 = vmatprep.subr.bf16.mxu0 0
      %1847 = vmatpush1.bf16.msra.mxu0 0
      %1848 = vmatprep.subr.bf16.mxu0 0
      %1849 = vmatpush1.bf16.msra.mxu0 0
      %1850 = vmatprep.subr.bf16.mxu0 0
      %1851 = vmatpush1.bf16.msra.mxu0 0
      %1852 = vmatprep.subr.bf16.mxu0 0
      %1853 = vmatpush1.bf16.msra.mxu0 0
      %1854 = vmatprep.subr.bf16.mxu0 0
      %1855 = vmatpush1.bf16.msra.mxu0 0
      %1856 = vmatprep.subr.bf16.mxu0 0
      %1857 = vmatpush1.bf16.msra.mxu0 0
      %1858 = vmatprep.subr.bf16.mxu0 0
      %1859 = vmatpush1.bf16.msra.mxu0 0
      %1860 = vmatprep.subr.bf16.mxu0 0
      %1861 = vmatpush1.bf16.msra.mxu0 0
      %1862 = vmatprep.mubr.bf16.mxu0 0
      %1863 = vmatmul.mubr.bf16.gmra.mrb[0].mxu0 %v1819
      %v1864 = vpop.f32.mrb[0].mxu0
      %v1865 = vadd.f32 0.0, %v1864
      %v1866 = vpop.f32.mrb[0].mxu0
      %v1867 = vadd.f32 0.0, %v1866
      %v1868 = vpop.f32.mrb[0].mxu0
      %v1869 = vpop.f32.mrb[0].mxu0
      %1870 = vdwg.mxu0
      %1871 = vmatprep.subr.bf16.mxu0 0
      %1872 = vmatpush1.bf16.msra.mxu0 %v1828
      %1873 = vmatprep.subr.bf16.mxu0 0
      %1874 = vmatpush1.bf16.msra.mxu0 0
      %1875 = vmatprep.subr.bf16.mxu0 0
      %1876 = vmatpush1.bf16.msra.mxu0 0
      %1877 = vmatprep.subr.bf16.mxu0 0
      %1878 = vmatpush1.bf16.msra.mxu0 0
      %1879 = vmatprep.subr.bf16.mxu0 0
      %1880 = vmatpush1.bf16.msra.mxu0 0
      %1881 = vmatprep.subr.bf16.mxu0 0
      %1882 = vmatpush1.bf16.msra.mxu0 0
      %1883 = vmatprep.subr.bf16.mxu0 0
      %1884 = vmatpush1.bf16.msra.mxu0 0
      %1885 = vmatprep.subr.bf16.mxu0 0
      %1886 = vmatpush1.bf16.msra.mxu0 0
      %1887 = vmatprep.subr.bf16.mxu0 0
      %1888 = vmatpush1.bf16.msra.mxu0 0
      %1889 = vmatprep.subr.bf16.mxu0 0
      %1890 = vmatpush1.bf16.msra.mxu0 0
      %1891 = vmatprep.subr.bf16.mxu0 0
      %1892 = vmatpush1.bf16.msra.mxu0 0
      %1893 = vmatprep.subr.bf16.mxu0 0
      %1894 = vmatpush1.bf16.msra.mxu0 0
      %1895 = vmatprep.subr.bf16.mxu0 0
      %1896 = vmatpush1.bf16.msra.mxu0 0
      %1897 = vmatprep.subr.bf16.mxu0 0
      %1898 = vmatpush1.bf16.msra.mxu0 0
      %1899 = vmatprep.subr.bf16.mxu0 0
      %1900 = vmatpush1.bf16.msra.mxu0 0
      %1901 = vmatprep.subr.bf16.mxu0 0
      %1902 = vmatpush1.bf16.msra.mxu0 0
      %1903 = vmatprep.mubr.bf16.mxu0 0
      %1904 = vmatmul.mubr.bf16.gmra.mrb[0].mxu0 %v1819
      %v1905 = vpop.f32.mrb[0].mxu0
      %v1906 = vadd.f32 0.0, %v1905
      %v1907 = vpop.f32.mrb[0].mxu0
      %v1908 = vpop.f32.mrb[0].mxu0
      %v1909 = vpop.f32.mrb[0].mxu0
      %1910 = vdwg.mxu0
      %v1911 = vadd.f32 %v1805, %v1865
      %v1912 = vadd.f32 %v1806, %v1867
      %v1913 = vadd.f32 %v1807, %v1906
      %s1914 = scalar_lea.vmem %s3, 24
      %v1915 = vld [vmem:[%s1914] sm:$0xf]
      %1916 = vrot.lane.b32.xlu0 %v1293, 92
      %v1917 = vpop.permute.xlu0 %1916
      %1918 = vrot.lane.b32.xlu0 %v1294, 92
      %v1919 = vpop.permute.xlu0 %1918
      %1920 = vrot.lane.b32.xlu0 %v1295, 92
      %v1921 = vpop.permute.xlu0 %1920
      %v1922 = vsel %vm903, %v1917, %v1919
      %v1923 = vsel %vm903, %v1919, %v1921
      %v1925 = vsel %vm279, %v1915, 0
      %v1928 = vsel %vm283, %v1922, 0
      %v1931 = vsel %vm283, %v1923, 0
      %v1934 = vsel %vm283, %v1921, 0
      %1936 = vmatprep.subr.bf16.mxu0 %v1931
      %1937 = vmatpush1.bf16.msra.mxu0 %v1928
      %1938 = vmatprep.subr.bf16.mxu0 0
      %1939 = vmatpush1.bf16.msra.mxu0 0
      %1940 = vmatprep.subr.bf16.mxu0 0
      %1941 = vmatpush1.bf16.msra.mxu0 0
      %1942 = vmatprep.subr.bf16.mxu0 0
      %1943 = vmatpush1.bf16.msra.mxu0 0
      %1944 = vmatprep.subr.bf16.mxu0 0
      %1945 = vmatpush1.bf16.msra.mxu0 0
      %1946 = vmatprep.subr.bf16.mxu0 0
      %1947 = vmatpush1.bf16.msra.mxu0 0
      %1948 = vmatprep.subr.bf16.mxu0 0
      %1949 = vmatpush1.bf16.msra.mxu0 0
      %1950 = vmatprep.subr.bf16.mxu0 0
      %1951 = vmatpush1.bf16.msra.mxu0 0
      %1952 = vmatprep.subr.bf16.mxu0 0
      %1953 = vmatpush1.bf16.msra.mxu0 0
      %1954 = vmatprep.subr.bf16.mxu0 0
      %1955 = vmatpush1.bf16.msra.mxu0 0
      %1956 = vmatprep.subr.bf16.mxu0 0
      %1957 = vmatpush1.bf16.msra.mxu0 0
      %1958 = vmatprep.subr.bf16.mxu0 0
      %1959 = vmatpush1.bf16.msra.mxu0 0
      %1960 = vmatprep.subr.bf16.mxu0 0
      %1961 = vmatpush1.bf16.msra.mxu0 0
      %1962 = vmatprep.subr.bf16.mxu0 0
      %1963 = vmatpush1.bf16.msra.mxu0 0
      %1964 = vmatprep.subr.bf16.mxu0 0
      %1965 = vmatpush1.bf16.msra.mxu0 0
      %1966 = vmatprep.subr.bf16.mxu0 0
      %1967 = vmatpush1.bf16.msra.mxu0 0
      %1968 = vmatprep.mubr.bf16.mxu0 0
      %1969 = vmatmul.mubr.bf16.gmra.mrb[0].mxu0 %v1925
      %v1970 = vpop.f32.mrb[0].mxu0
      %v1971 = vadd.f32 0.0, %v1970
      %v1972 = vpop.f32.mrb[0].mxu0
      %v1973 = vadd.f32 0.0, %v1972
      %v1974 = vpop.f32.mrb[0].mxu0
      %v1975 = vpop.f32.mrb[0].mxu0
      %1976 = vdwg.mxu0
      %1977 = vmatprep.subr.bf16.mxu0 0
      %1978 = vmatpush1.bf16.msra.mxu0 %v1934
      %1979 = vmatprep.subr.bf16.mxu0 0
      %1980 = vmatpush1.bf16.msra.mxu0 0
      %1981 = vmatprep.subr.bf16.mxu0 0
      %1982 = vmatpush1.bf16.msra.mxu0 0
      %1983 = vmatprep.subr.bf16.mxu0 0
      %1984 = vmatpush1.bf16.msra.mxu0 0
      %1985 = vmatprep.subr.bf16.mxu0 0
      %1986 = vmatpush1.bf16.msra.mxu0 0
      %1987 = vmatprep.subr.bf16.mxu0 0
      %1988 = vmatpush1.bf16.msra.mxu0 0
      %1989 = vmatprep.subr.bf16.mxu0 0
      %1990 = vmatpush1.bf16.msra.mxu0 0
      %1991 = vmatprep.subr.bf16.mxu0 0
      %1992 = vmatpush1.bf16.msra.mxu0 0
      %1993 = vmatprep.subr.bf16.mxu0 0
      %1994 = vmatpush1.bf16.msra.mxu0 0
      %1995 = vmatprep.subr.bf16.mxu0 0
      %1996 = vmatpush1.bf16.msra.mxu0 0
      %1997 = vmatprep.subr.bf16.mxu0 0
      %1998 = vmatpush1.bf16.msra.mxu0 0
      %1999 = vmatprep.subr.bf16.mxu0 0
      %2000 = vmatpush1.bf16.msra.mxu0 0
      %2001 = vmatprep.subr.bf16.mxu0 0
      %2002 = vmatpush1.bf16.msra.mxu0 0
      %2003 = vmatprep.subr.bf16.mxu0 0
      %2004 = vmatpush1.bf16.msra.mxu0 0
      %2005 = vmatprep.subr.bf16.mxu0 0
      %2006 = vmatpush1.bf16.msra.mxu0 0
      %2007 = vmatprep.subr.bf16.mxu0 0
      %2008 = vmatpush1.bf16.msra.mxu0 0
      %2009 = vmatprep.mubr.bf16.mxu0 0
      %2010 = vmatmul.mubr.bf16.gmra.mrb[0].mxu0 %v1925
      %v2011 = vpop.f32.mrb[0].mxu0
      %v2012 = vadd.f32 0.0, %v2011
      %v2013 = vpop.f32.mrb[0].mxu0
      %v2014 = vpop.f32.mrb[0].mxu0
      %v2015 = vpop.f32.mrb[0].mxu0
      %2016 = vdwg.mxu0
      %v2017 = vadd.f32 %v1911, %v1971
      %v2018 = vadd.f32 %v1912, %v1973
      %v2019 = vadd.f32 %v1913, %v2012
      %s2020 = scalar_lea.vmem %s3, 28
      %v2021 = vld [vmem:[%s2020] sm:$0xf]
      %2022 = vrot.lane.b32.xlu0 %v1293, 91
      %v2023 = vpop.permute.xlu0 %2022
      %2024 = vrot.lane.b32.xlu0 %v1294, 91
      %v2025 = vpop.permute.xlu0 %2024
      %2026 = vrot.lane.b32.xlu0 %v1295, 91
      %v2027 = vpop.permute.xlu0 %2026
      %v2028 = vsel %vm1010, %v2023, %v2025
      %v2029 = vsel %vm1010, %v2025, %v2027
      %v2031 = vsel %vm279, %v2021, 0
      %v2034 = vsel %vm283, %v2028, 0
      %v2037 = vsel %vm283, %v2029, 0
      %v2040 = vsel %vm283, %v2027, 0
      %2042 = vmatprep.subr.bf16.mxu0 %v2037
      %2043 = vmatpush1.bf16.msra.mxu0 %v2034
      %2044 = vmatprep.subr.bf16.mxu0 0
      %2045 = vmatpush1.bf16.msra.mxu0 0
      %2046 = vmatprep.subr.bf16.mxu0 0
      %2047 = vmatpush1.bf16.msra.mxu0 0
      %2048 = vmatprep.subr.bf16.mxu0 0
      %2049 = vmatpush1.bf16.msra.mxu0 0
      %2050 = vmatprep.subr.bf16.mxu0 0
      %2051 = vmatpush1.bf16.msra.mxu0 0
      %2052 = vmatprep.subr.bf16.mxu0 0
      %2053 = vmatpush1.bf16.msra.mxu0 0
      %2054 = vmatprep.subr.bf16.mxu0 0
      %2055 = vmatpush1.bf16.msra.mxu0 0
      %2056 = vmatprep.subr.bf16.mxu0 0
      %2057 = vmatpush1.bf16.msra.mxu0 0
      %2058 = vmatprep.subr.bf16.mxu0 0
      %2059 = vmatpush1.bf16.msra.mxu0 0
      %2060 = vmatprep.subr.bf16.mxu0 0
      %2061 = vmatpush1.bf16.msra.mxu0 0
      %2062 = vmatprep.subr.bf16.mxu0 0
      %2063 = vmatpush1.bf16.msra.mxu0 0
      %2064 = vmatprep.subr.bf16.mxu0 0
      %2065 = vmatpush1.bf16.msra.mxu0 0
      %2066 = vmatprep.subr.bf16.mxu0 0
      %2067 = vmatpush1.bf16.msra.mxu0 0
      %2068 = vmatprep.subr.bf16.mxu0 0
      %2069 = vmatpush1.bf16.msra.mxu0 0
      %2070 = vmatprep.subr.bf16.mxu0 0
      %2071 = vmatpush1.bf16.msra.mxu0 0
      %2072 = vmatprep.subr.bf16.mxu0 0
      %2073 = vmatpush1.bf16.msra.mxu0 0
      %2074 = vmatprep.mubr.bf16.mxu0 0
      %2075 = vmatmul.mubr.bf16.gmra.mrb[0].mxu0 %v2031
      %v2076 = vpop.f32.mrb[0].mxu0
      %v2077 = vadd.f32 0.0, %v2076
      %v2078 = vpop.f32.mrb[0].mxu0
      %v2079 = vadd.f32 0.0, %v2078
      %v2080 = vpop.f32.mrb[0].mxu0
      %v2081 = vpop.f32.mrb[0].mxu0
      %2082 = vdwg.mxu0
      %2083 = vmatprep.subr.bf16.mxu0 0
      %2084 = vmatpush1.bf16.msra.mxu0 %v2040
      %2085 = vmatprep.subr.bf16.mxu0 0
      %2086 = vmatpush1.bf16.msra.mxu0 0
      %2087 = vmatprep.subr.bf16.mxu0 0
      %2088 = vmatpush1.bf16.msra.mxu0 0
      %2089 = vmatprep.subr.bf16.mxu0 0
      %2090 = vmatpush1.bf16.msra.mxu0 0
      %2091 = vmatprep.subr.bf16.mxu0 0
      %2092 = vmatpush1.bf16.msra.mxu0 0
      %2093 = vmatprep.subr.bf16.mxu0 0
      %2094 = vmatpush1.bf16.msra.mxu0 0
      %2095 = vmatprep.subr.bf16.mxu0 0
      %2096 = vmatpush1.bf16.msra.mxu0 0
      %2097 = vmatprep.subr.bf16.mxu0 0
      %2098 = vmatpush1.bf16.msra.mxu0 0
      %2099 = vmatprep.subr.bf16.mxu0 0
      %2100 = vmatpush1.bf16.msra.mxu0 0
      %2101 = vmatprep.subr.bf16.mxu0 0
      %2102 = vmatpush1.bf16.msra.mxu0 0
      %2103 = vmatprep.subr.bf16.mxu0 0
      %2104 = vmatpush1.bf16.msra.mxu0 0
      %2105 = vmatprep.subr.bf16.mxu0 0
      %2106 = vmatpush1.bf16.msra.mxu0 0
      %2107 = vmatprep.subr.bf16.mxu0 0
      %2108 = vmatpush1.bf16.msra.mxu0 0
      %2109 = vmatprep.subr.bf16.mxu0 0
      %2110 = vmatpush1.bf16.msra.mxu0 0
      %2111 = vmatprep.subr.bf16.mxu0 0
      %2112 = vmatpush1.bf16.msra.mxu0 0
      %2113 = vmatprep.subr.bf16.mxu0 0
      %2114 = vmatpush1.bf16.msra.mxu0 0
      %2115 = vmatprep.mubr.bf16.mxu0 0
      %2116 = vmatmul.mubr.bf16.gmra.mrb[0].mxu0 %v2031
      %v2117 = vpop.f32.mrb[0].mxu0
      %v2118 = vadd.f32 0.0, %v2117
      %v2119 = vpop.f32.mrb[0].mxu0
      %v2120 = vpop.f32.mrb[0].mxu0
      %v2121 = vpop.f32.mrb[0].mxu0
      %2122 = vdwg.mxu0
      %v2123 = vadd.f32 %v2017, %v2077
      %v2124 = vadd.f32 %v2018, %v2079
      %v2125 = vadd.f32 %v2019, %v2118
      %s2126 = scalar_lea.vmem %s3, 32
      %v2127 = vld [vmem:[%s2126] sm:$0xf]
      %2128 = vrot.lane.b32.xlu0 %v1293, 90
      %v2129 = vpop.permute.xlu0 %2128
      %2130 = vrot.lane.b32.xlu0 %v1294, 90
      %v2131 = vpop.permute.xlu0 %2130
      %2132 = vrot.lane.b32.xlu0 %v1295, 90
      %v2133 = vpop.permute.xlu0 %2132
      %v2134 = vsel %vm1117, %v2129, %v2131
      %v2135 = vsel %vm1117, %v2131, %v2133
      %v2137 = vsel %vm279, %v2127, 0
      %v2140 = vsel %vm283, %v2134, 0
      %v2143 = vsel %vm283, %v2135, 0
      %v2146 = vsel %vm283, %v2133, 0
      %2148 = vmatprep.subr.bf16.mxu0 %v2143
      %2149 = vmatpush1.bf16.msra.mxu0 %v2140
      %2150 = vmatprep.subr.bf16.mxu0 0
      %2151 = vmatpush1.bf16.msra.mxu0 0
      %2152 = vmatprep.subr.bf16.mxu0 0
      %2153 = vmatpush1.bf16.msra.mxu0 0
      %2154 = vmatprep.subr.bf16.mxu0 0
      %2155 = vmatpush1.bf16.msra.mxu0 0
      %2156 = vmatprep.subr.bf16.mxu0 0
      %2157 = vmatpush1.bf16.msra.mxu0 0
      %2158 = vmatprep.subr.bf16.mxu0 0
      %2159 = vmatpush1.bf16.msra.mxu0 0
      %2160 = vmatprep.subr.bf16.mxu0 0
      %2161 = vmatpush1.bf16.msra.mxu0 0
      %2162 = vmatprep.subr.bf16.mxu0 0
      %2163 = vmatpush1.bf16.msra.mxu0 0
      %2164 = vmatprep.subr.bf16.mxu0 0
      %2165 = vmatpush1.bf16.msra.mxu0 0
      %2166 = vmatprep.subr.bf16.mxu0 0
      %2167 = vmatpush1.bf16.msra.mxu0 0
      %2168 = vmatprep.subr.bf16.mxu0 0
      %2169 = vmatpush1.bf16.msra.mxu0 0
      %2170 = vmatprep.subr.bf16.mxu0 0
      %2171 = vmatpush1.bf16.msra.mxu0 0
      %2172 = vmatprep.subr.bf16.mxu0 0
      %2173 = vmatpush1.bf16.msra.mxu0 0
      %2174 = vmatprep.subr.bf16.mxu0 0
      %2175 = vmatpush1.bf16.msra.mxu0 0
      %2176 = vmatprep.subr.bf16.mxu0 0
      %2177 = vmatpush1.bf16.msra.mxu0 0
      %2178 = vmatprep.subr.bf16.mxu0 0
      %2179 = vmatpush1.bf16.msra.mxu0 0
      %2180 = vmatprep.mubr.bf16.mxu0 0
      %2181 = vmatmul.mubr.bf16.gmra.mrb[0].mxu0 %v2137
      %v2182 = vpop.f32.mrb[0].mxu0
      %v2183 = vadd.f32 0.0, %v2182
      %v2184 = vpop.f32.mrb[0].mxu0
      %v2185 = vadd.f32 0.0, %v2184
      %v2186 = vpop.f32.mrb[0].mxu0
      %v2187 = vpop.f32.mrb[0].mxu0
      %2188 = vdwg.mxu0
      %2189 = vmatprep.subr.bf16.mxu0 0
      %2190 = vmatpush1.bf16.msra.mxu0 %v2146
      %2191 = vmatprep.subr.bf16.mxu0 0
      %2192 = vmatpush1.bf16.msra.mxu0 0
      %2193 = vmatprep.subr.bf16.mxu0 0
      %2194 = vmatpush1.bf16.msra.mxu0 0
      %2195 = vmatprep.subr.bf16.mxu0 0
      %2196 = vmatpush1.bf16.msra.mxu0 0
      %2197 = vmatprep.subr.bf16.mxu0 0
      %2198 = vmatpush1.bf16.msra.mxu0 0
      %2199 = vmatprep.subr.bf16.mxu0 0
      %2200 = vmatpush1.bf16.msra.mxu0 0
      %2201 = vmatprep.subr.bf16.mxu0 0
      %2202 = vmatpush1.bf16.msra.mxu0 0
      %2203 = vmatprep.subr.bf16.mxu0 0
      %2204 = vmatpush1.bf16.msra.mxu0 0
      %2205 = vmatprep.subr.bf16.mxu0 0
      %2206 = vmatpush1.bf16.msra.mxu0 0
      %2207 = vmatprep.subr.bf16.mxu0 0
      %2208 = vmatpush1.bf16.msra.mxu0 0
      %2209 = vmatprep.subr.bf16.mxu0 0
      %2210 = vmatpush1.bf16.msra.mxu0 0
      %2211 = vmatprep.subr.bf16.mxu0 0
      %2212 = vmatpush1.bf16.msra.mxu0 0
      %2213 = vmatprep.subr.bf16.mxu0 0
      %2214 = vmatpush1.bf16.msra.mxu0 0
      %2215 = vmatprep.subr.bf16.mxu0 0
      %2216 = vmatpush1.bf16.msra.mxu0 0
      %2217 = vmatprep.subr.bf16.mxu0 0
      %2218 = vmatpush1.bf16.msra.mxu0 0
      %2219 = vmatprep.subr.bf16.mxu0 0
      %2220 = vmatpush1.bf16.msra.mxu0 0
      %2221 = vmatprep.mubr.bf16.mxu0 0
      %2222 = vmatmul.mubr.bf16.gmra.mrb[0].mxu0 %v2137
      %v2223 = vpop.f32.mrb[0].mxu0
      %v2224 = vadd.f32 0.0, %v2223
      %v2225 = vpop.f32.mrb[0].mxu0
      %v2226 = vpop.f32.mrb[0].mxu0
      %v2227 = vpop.f32.mrb[0].mxu0
      %2228 = vdwg.mxu0
      %v2229 = vadd.f32 %v2123, %v2183
      %v2230 = vadd.f32 %v2124, %v2185
      %v2231 = vadd.f32 %v2125, %v2224
      %v2232 = vld [vmem:[%s4] sm:$0xff]
      %2234 = vset.pattern.permute.xlu0 0
      %2235 = vperm.xlu0 %2234, %v2232
      %v2236 = vpop.permute.xlu0 %2235
      %v2238 = vadd.f32 %v2229, %v2236
      %v2239 = vadd.f32 %v2230, %v2236
      %v2240 = vadd.f32 %v2231, %v2236
      %v2241 = vmul.f32 %v2238, %v1238
      %v2242 = vmul.f32 %v2239, %v1242
      %v2243 = vmul.f32 %v2240, %v1246
      %2247 = vrot.lane.b32.xlu0 %v2241, 19
      %v2248 = vpop.permute.xlu0 %2247
      %2249 = vrot.lane.b32.xlu0 %v2242, 19
      %v2250 = vpop.permute.xlu0 %2249
      %2251 = vrot.lane.b32.xlu0 %v2243, 19
      %v2252 = vpop.permute.xlu0 %2251
      %vm2253 = vcmask 154624
      %v2254 = vsel %vm2253, %v2248, %v2250
      %v2255 = vsel %vm2253, %v2250, %v2252
      %v2259 = vadd.f32 %v256, %v2248
      %v2260 = vadd.f32 %v257, %v2254
      %v2261 = vadd.f32 %v258, %v2255
      %2262 = vst [vmem:[%s251] sm:$0xff] 0
      %2263 = vst.msk [vmem:[%s251 + $0x8] sm:$0xf] %vm1254, 0
      %v2264 = vpack.c.bf16 %v2259, %v2259
      %v2265 = vpack.c.bf16 %v2260, %v2260
      %v2266 = vpack.c.bf16 %v2261, %v2261
      %v2270 = vunpack.c.l.b16 %v2264
      %v2271 = vunpack.c.l.b16 %v2265
      %v2272 = vunpack.c.l.b16 %v2266
      %v2273 = vpack.c.b16 %v2271, %v2270
      %v2274 = vpack.c.b16 %v2272, %v2272
      %2277 = vst.msk [vmem:[%s251] sm:$0xff] %vm1279, %v2273
      %2278 = vst.msk [vmem:[%s251 + $0x8] sm:$0xf] %vm1281, %v2274
      %p2279 = scmp.lt.s32.totalorder %s17, 1
      %s2280 = scalar_select %p2279, %s17, 1
      %s2281 = smul.addr %s2280, 3
      %s2282 = smul.addr %s2281, 4
      %s2283 = scalar_lea.vmem %s6, %s2282
      // Predicated region
      $region45: #{_lambda_.8} parent=43 // pred_check
        %p2284 = pneg %p166
      $region46: #{_lambda_.8} parent=43 // pred_check_branch
        %2286 = sbr.rel (%p2284) target = $region48
      $region47: #{_lambda_.8} parent=43 // pred_region
        _
      $region48: #{_lambda_.8} parent=43 // pred_fallthru
        _
    $region44: #{_lambda_.8} parent=5 // pred_fallthru
      _
    %p2287 = scmp.le.s32.totalorder 2, %s12
    // Predicated region
    $region49: #{_lambda_.8} parent=5 // pred_check
      %p2288 = pneg %p2287
    $region50: #{_lambda_.8} parent=5 // pred_check_branch
      %2290 = sbr.rel (%p2288) target = $region52
    $region51: #{_lambda_.8} parent=5 // pred_region
      %s2291 = ssub.s32 %s12, 2
      // Predicated region
      $region53: #{_lambda_.8} parent=51 // pred_check
        %p2292 = pneg %p172
      $region54: #{_lambda_.8} parent=51 // pred_check_branch
        %2294 = sbr.rel (%p2292) target = $region56
      $region55: #{_lambda_.8} parent=51 // pred_region
        %p2295 = scmp.lt.s32.totalorder %s18, 1
        %s2296 = scalar_select %p2295, %s18, 1
        %s2297 = smul.addr %s2296, 3
        %s2298 = smul.addr %s2297, 4
        %s2299 = scalar_lea.vmem %s6, %s2298
      $region56: #{_lambda_.8} parent=51 // pred_fallthru
        _
    $region52: #{_lambda_.8} parent=5 // pred_fallthru
      _
  $region6: #{_lambda_.8} parent=0 // loop_footer
    %s16 = sadd.s32 1, %s12
  $region7: #{_lambda_.8} parent=0 // loop_footer_branch
    %11 = sbr.rel target = $region3
  $region8: #{_lambda_.8} parent=0 // loop_exit
    _

// kernel: _lambda_.15
$region0: #{_lambda_.15}
  #allocation0 [shape = 'u32[]', space=smem, size = 0x4, offset = 0x4, fixed_abs, tag = 'smem constant byte address 0x4 - core index']
  #allocation1 [shape = 'u32[144,128]{1,0:T(1,128)}', space=vmem, size = 0x12000, scoped, tag = 'internal scratch']
  %s0 = inlined_call_operand.vmem [shape: bf16[2,8,324], index: 0, kind: input, shape index: {}]
  %s1 = inlined_call_operand.vmem [shape: bf16[2,8,324], index: 1, kind: input, shape index: {}]
  %s2 = inlined_call_operand.vmem [shape: bf16[2,8,324], index: 2, kind: input, shape index: {}]
  %s3 = inlined_call_operand.vmem [shape: bf16[2,8,324], index: 3, kind: input, shape index: {}]
  %s4 = inlined_call_operand.vmem [shape: bf16[2,8,324], index: 4, kind: input, shape index: {}]
  %s5 = inlined_call_operand.vmem [shape: bf16[5,8,8], index: 5, kind: input, shape index: {}]
  %s6 = inlined_call_operand.vmem [shape: f32[8,1], index: 6, kind: input, shape index: {}]
  %s7 = inlined_call_operand.vmem [shape: f32[1,324], index: 7, kind: input, shape index: {}]
  %s8 = inlined_call_operand.vmem [shape: bf16[2,8,324], index: 8, kind: output, shape index: {}]
  %s9 = sld [smem:[#allocation0]]
  $region65: #{_lambda_.15} parent=0
    _
  %s11 = ssub.s32 1, %s9
  %s12 = scalar_select 0, %s11, %s9
  loop: start=0, step=1, limit=4
  $region2: #{_lambda_.15} parent=0 // loop_pre_header
    _
  $region3: #{_lambda_.15} parent=0 // loop_header
    %s14 = sphi 0, %s18
    %p15 = scmp.ge.s32.totalorder %s14, 4
    %s24 = sphi 0, %s26
    %s27 = sphi 0, %s24
    %s28 = sphi 0, %s27
    %s44 = sphi 0, %s28
    %s50 = sphi 0, %s52
    %s53 = sphi 0, %s50
    %s54 = sphi 0, %s53
    %s70 = sphi 0, %s54
    %s76 = sphi 0, %s78
    %s79 = sphi 0, %s76
    %s80 = sphi 0, %s79
    %s96 = sphi 0, %s80
    %s102 = sphi 0, %s104
    %s105 = sphi 0, %s102
    %s106 = sphi 0, %s105
    %s122 = sphi 0, %s106
    %s128 = sphi 0, %s130
    %s131 = sphi 0, %s128
    %s132 = sphi 0, %s131
    %s148 = sphi 0, %s132
    %s152 = sphi 0, %s152
    %s154 = sphi 0, %s152
    %s155 = sphi 0, %s154
    %s169 = sphi 0, %s155
    %s173 = sphi 0, %s173
    %s175 = sphi 0, %s173
    %s176 = sphi 0, %s175
    %s190 = sphi 0, %s176
    %s194 = sphi 0, %s194
    %s196 = sphi 0, %s194
    %s197 = sphi 0, %s196
    %s211 = sphi 0, %s197
    %s217 = sphi 0, %s219
    %s220 = sphi 0, %s217
    %s221 = sphi 0, %s220
    %s237 = sphi 0, %s221
  $region4: #{_lambda_.15} parent=0 // loop_header_branch
    %17 = sbr.rel (%p15) target = $region8
  $region5: #{_lambda_.15} parent=0 // loop_body
    %s19 = ssub.s32 %s14, 1
    %s20 = ssub.s32 %s14, 2
    %s21 = sadd.s32 %s14, 1
    %s22 = ssub.s32 %s14, %s21
    %p23 = scmp.eq.s32.totalorder %s22, 0
    %s25 = sadd.s32 %s24, 1
    %s26 = scalar_select %p23, %s24, %s25
    %p29 = pneg %p23
    %p30 = scmp.eq.s32.totalorder %s14, 1
    %p31 = por %p29, %p30
    %p32 = scmp.ne.s32.totalorder %s24, %s27
    %p33 = scmp.eq.s32.totalorder %s14, 0
    %p34 = por %p32, %p33
    %p35 = scmp.ne.s32.totalorder %s24, %s27
    %p36 = scmp.eq.s32.totalorder %s19, 1
    %p37 = por %p35, %p36
    %p38 = scmp.ne.s32.totalorder %s27, %s28
    %p39 = scmp.eq.s32.totalorder %s19, 0
    %p40 = por %p38, %p39
    %p41 = scmp.ne.s32.totalorder %s27, %s28
    %p42 = scmp.eq.s32.totalorder %s20, 1
    %p43 = por %p41, %p42
    %p45 = scmp.ne.s32.totalorder %s28, %s44
    %p46 = scmp.eq.s32.totalorder %s20, 0
    %p47 = por %p45, %p46
    %s48 = ssub.s32 %s14, %s21
    %p49 = scmp.eq.s32.totalorder %s48, 0
    %s51 = sadd.s32 %s50, 1
    %s52 = scalar_select %p49, %s50, %s51
    %p55 = pneg %p49
    %p56 = scmp.eq.s32.totalorder %s14, 1
    %p57 = por %p55, %p56
    %p58 = scmp.ne.s32.totalorder %s50, %s53
    %p59 = scmp.eq.s32.totalorder %s14, 0
    %p60 = por %p58, %p59
    %p61 = scmp.ne.s32.totalorder %s50, %s53
    %p62 = scmp.eq.s32.totalorder %s19, 1
    %p63 = por %p61, %p62
    %p64 = scmp.ne.s32.totalorder %s53, %s54
    %p65 = scmp.eq.s32.totalorder %s19, 0
    %p66 = por %p64, %p65
    %p67 = scmp.ne.s32.totalorder %s53, %s54
    %p68 = scmp.eq.s32.totalorder %s20, 1
    %p69 = por %p67, %p68
    %p71 = scmp.ne.s32.totalorder %s54, %s70
    %p72 = scmp.eq.s32.totalorder %s20, 0
    %p73 = por %p71, %p72
    %s74 = ssub.s32 %s14, %s21
    %p75 = scmp.eq.s32.totalorder %s74, 0
    %s77 = sadd.s32 %s76, 1
    %s78 = scalar_select %p75, %s76, %s77
    %p81 = pneg %p75
    %p82 = scmp.eq.s32.totalorder %s14, 1
    %p83 = por %p81, %p82
    %p84 = scmp.ne.s32.totalorder %s76, %s79
    %p85 = scmp.eq.s32.totalorder %s14, 0
    %p86 = por %p84, %p85
    %p87 = scmp.ne.s32.totalorder %s76, %s79
    %p88 = scmp.eq.s32.totalorder %s19, 1
    %p89 = por %p87, %p88
    %p90 = scmp.ne.s32.totalorder %s79, %s80
    %p91 = scmp.eq.s32.totalorder %s19, 0
    %p92 = por %p90, %p91
    %p93 = scmp.ne.s32.totalorder %s79, %s80
    %p94 = scmp.eq.s32.totalorder %s20, 1
    %p95 = por %p93, %p94
    %p97 = scmp.ne.s32.totalorder %s80, %s96
    %p98 = scmp.eq.s32.totalorder %s20, 0
    %p99 = por %p97, %p98
    %s100 = ssub.s32 %s14, %s21
    %p101 = scmp.eq.s32.totalorder %s100, 0
    %s103 = sadd.s32 %s102, 1
    %s104 = scalar_select %p101, %s102, %s103
    %p107 = pneg %p101
    %p108 = scmp.eq.s32.totalorder %s14, 1
    %p109 = por %p107, %p108
    %p110 = scmp.ne.s32.totalorder %s102, %s105
    %p111 = scmp.eq.s32.totalorder %s14, 0
    %p112 = por %p110, %p111
    %p113 = scmp.ne.s32.totalorder %s102, %s105
    %p114 = scmp.eq.s32.totalorder %s19, 1
    %p115 = por %p113, %p114
    %p116 = scmp.ne.s32.totalorder %s105, %s106
    %p117 = scmp.eq.s32.totalorder %s19, 0
    %p118 = por %p116, %p117
    %p119 = scmp.ne.s32.totalorder %s105, %s106
    %p120 = scmp.eq.s32.totalorder %s20, 1
    %p121 = por %p119, %p120
    %p123 = scmp.ne.s32.totalorder %s106, %s122
    %p124 = scmp.eq.s32.totalorder %s20, 0
    %p125 = por %p123, %p124
    %s126 = ssub.s32 %s14, %s21
    %p127 = scmp.eq.s32.totalorder %s126, 0
    %s129 = sadd.s32 %s128, 1
    %s130 = scalar_select %p127, %s128, %s129
    %p133 = pneg %p127
    %p134 = scmp.eq.s32.totalorder %s14, 1
    %p135 = por %p133, %p134
    %p136 = scmp.ne.s32.totalorder %s128, %s131
    %p137 = scmp.eq.s32.totalorder %s14, 0
    %p138 = por %p136, %p137
    %p139 = scmp.ne.s32.totalorder %s128, %s131
    %p140 = scmp.eq.s32.totalorder %s19, 1
    %p141 = por %p139, %p140
    %p142 = scmp.ne.s32.totalorder %s131, %s132
    %p143 = scmp.eq.s32.totalorder %s19, 0
    %p144 = por %p142, %p143
    %p145 = scmp.ne.s32.totalorder %s131, %s132
    %p146 = scmp.eq.s32.totalorder %s20, 1
    %p147 = por %p145, %p146
    %p149 = scmp.ne.s32.totalorder %s132, %s148
    %p150 = scmp.eq.s32.totalorder %s20, 0
    %p151 = por %p149, %p150
    %s153 = sadd.s32 %s152, 1
    %p156 = scmp.eq.s32.totalorder %s14, 1
    %p157 = scmp.ne.s32.totalorder %s152, %s154
    %p158 = scmp.eq.s32.totalorder %s14, 0
    %p159 = por %p157, %p158
    %p160 = scmp.ne.s32.totalorder %s152, %s154
    %p161 = scmp.eq.s32.totalorder %s19, 1
    %p162 = por %p160, %p161
    %p163 = scmp.ne.s32.totalorder %s154, %s155
    %p164 = scmp.eq.s32.totalorder %s19, 0
    %p165 = por %p163, %p164
    %p166 = scmp.ne.s32.totalorder %s154, %s155
    %p167 = scmp.eq.s32.totalorder %s20, 1
    %p168 = por %p166, %p167
    %p170 = scmp.ne.s32.totalorder %s155, %s169
    %p171 = scmp.eq.s32.totalorder %s20, 0
    %p172 = por %p170, %p171
    %s174 = sadd.s32 %s173, 1
    %p177 = scmp.eq.s32.totalorder %s14, 1
    %p178 = scmp.ne.s32.totalorder %s173, %s175
    %p179 = scmp.eq.s32.totalorder %s14, 0
    %p180 = por %p178, %p179
    %p181 = scmp.ne.s32.totalorder %s173, %s175
    %p182 = scmp.eq.s32.totalorder %s19, 1
    %p183 = por %p181, %p182
    %p184 = scmp.ne.s32.totalorder %s175, %s176
    %p185 = scmp.eq.s32.totalorder %s19, 0
    %p186 = por %p184, %p185
    %p187 = scmp.ne.s32.totalorder %s175, %s176
    %p188 = scmp.eq.s32.totalorder %s20, 1
    %p189 = por %p187, %p188
    %p191 = scmp.ne.s32.totalorder %s176, %s190
    %p192 = scmp.eq.s32.totalorder %s20, 0
    %p193 = por %p191, %p192
    %s195 = sadd.s32 %s194, 1
    %p198 = scmp.eq.s32.totalorder %s14, 1
    %p199 = scmp.ne.s32.totalorder %s194, %s196
    %p200 = scmp.eq.s32.totalorder %s14, 0
    %p201 = por %p199, %p200
    %p202 = scmp.ne.s32.totalorder %s194, %s196
    %p203 = scmp.eq.s32.totalorder %s19, 1
    %p204 = por %p202, %p203
    %p205 = scmp.ne.s32.totalorder %s196, %s197
    %p206 = scmp.eq.s32.totalorder %s19, 0
    %p207 = por %p205, %p206
    %p208 = scmp.ne.s32.totalorder %s196, %s197
    %p209 = scmp.eq.s32.totalorder %s20, 1
    %p210 = por %p208, %p209
    %p212 = scmp.ne.s32.totalorder %s197, %s211
    %p213 = scmp.eq.s32.totalorder %s20, 0
    %p214 = por %p212, %p213
    %s215 = ssub.s32 %s14, %s21
    %p216 = scmp.eq.s32.totalorder %s215, 0
    %s218 = sadd.s32 %s217, 1
    %s219 = scalar_select %p216, %s217, %s218
    %p222 = pneg %p216
    %p223 = scmp.eq.s32.totalorder %s14, 1
    %p224 = por %p222, %p223
    %p225 = scmp.ne.s32.totalorder %s217, %s220
    %p226 = scmp.eq.s32.totalorder %s14, 0
    %p227 = por %p225, %p226
    %p228 = scmp.ne.s32.totalorder %s217, %s220
    %p229 = scmp.eq.s32.totalorder %s19, 1
    %p230 = por %p228, %p229
    %p231 = scmp.ne.s32.totalorder %s220, %s221
    %p232 = scmp.eq.s32.totalorder %s19, 0
    %p233 = por %p231, %p232
    %p234 = scmp.ne.s32.totalorder %s220, %s221
    %p235 = scmp.eq.s32.totalorder %s20, 1
    %p236 = por %p234, %p235
    %p238 = scmp.ne.s32.totalorder %s221, %s237
    %p239 = scmp.eq.s32.totalorder %s20, 0
    %p240 = por %p238, %p239
    %p241 = scmp.le.s32.totalorder 1, %s14
    %p242 = scmp.lt.s32.totalorder %s14, 3
    %p243 = pnand %p241, %p242
    %p244 = pneg %p243
    // Predicated region
    $region9: #{_lambda_.15} parent=5 // pred_check
      _
    $region10: #{_lambda_.15} parent=5 // pred_check_branch
      %246 = sbr.rel (%p243) target = $region12
    $region11: #{_lambda_.15} parent=5 // pred_region
      %s247 = ssub.s32 %s14, 1
      // Predicated region
      $region13: #{_lambda_.15} parent=11 // pred_check
        %p248 = pneg %p165
      $region14: #{_lambda_.15} parent=11 // pred_check_branch
        %250 = sbr.rel (%p248) target = $region16
      $region15: #{_lambda_.15} parent=11 // pred_region
        _
      $region16: #{_lambda_.15} parent=11 // pred_fallthru
        _
      // Predicated region
      $region17: #{_lambda_.15} parent=11 // pred_check
        %p251 = pneg %p186
      $region18: #{_lambda_.15} parent=11 // pred_check_branch
        %253 = sbr.rel (%p251) target = $region20
      $region19: #{_lambda_.15} parent=11 // pred_region
        _
      $region20: #{_lambda_.15} parent=11 // pred_fallthru
        _
      // Predicated region
      $region21: #{_lambda_.15} parent=11 // pred_check
        %p254 = pneg %p207
      $region22: #{_lambda_.15} parent=11 // pred_check_branch
        %256 = sbr.rel (%p254) target = $region24
      $region23: #{_lambda_.15} parent=11 // pred_region
        _
      $region24: #{_lambda_.15} parent=11 // pred_fallthru
        _
    $region12: #{_lambda_.15} parent=5 // pred_fallthru
      _
    %p257 = scmp.lt.s32.totalorder %s14, 2
    // Predicated region
    $region25: #{_lambda_.15} parent=5 // pred_check
      %p258 = pneg %p257
    $region26: #{_lambda_.15} parent=5 // pred_check_branch
      %260 = sbr.rel (%p258) target = $region28
    $region27: #{_lambda_.15} parent=5 // pred_region
      // Predicated region
      $region29: #{_lambda_.15} parent=27 // pred_check
        %p261 = pneg %p34
      $region30: #{_lambda_.15} parent=27 // pred_check_branch
        %263 = sbr.rel (%p261) target = $region32
      $region31: #{_lambda_.15} parent=27 // pred_region
        %p264 = scmp.lt.s32.totalorder %s14, 1
        %s265 = scalar_select %p264, %s14, 1
        %s266 = smul.addr %s265, 3
        %s267 = smul.addr %s266, 4
        %s268 = scalar_lea.vmem %s0, %s267
      $region32: #{_lambda_.15} parent=27 // pred_fallthru
        _
      // Predicated region
      $region33: #{_lambda_.15} parent=27 // pred_check
        %p269 = pneg %p60
      $region34: #{_lambda_.15} parent=27 // pred_check_branch
        %271 = sbr.rel (%p269) target = $region36
      $region35: #{_lambda_.15} parent=27 // pred_region
        %p272 = scmp.lt.s32.totalorder %s14, 1
        %s273 = scalar_select %p272, %s14, 1
        %s274 = smul.addr %s273, 3
        %s275 = smul.addr %s274, 4
        %s276 = scalar_lea.vmem %s1, %s275
      $region36: #{_lambda_.15} parent=27 // pred_fallthru
        _
      // Predicated region
      $region37: #{_lambda_.15} parent=27 // pred_check
        %p277 = pneg %p86
      $region38: #{_lambda_.15} parent=27 // pred_check_branch
        %279 = sbr.rel (%p277) target = $region40
      $region39: #{_lambda_.15} parent=27 // pred_region
        %p280 = scmp.lt.s32.totalorder %s14, 1
        %s281 = scalar_select %p280, %s14, 1
        %s282 = smul.addr %s281, 3
        %s283 = smul.addr %s282, 4
        %s284 = scalar_lea.vmem %s2, %s283
      $region40: #{_lambda_.15} parent=27 // pred_fallthru
        _
      // Predicated region
      $region41: #{_lambda_.15} parent=27 // pred_check
        %p285 = pneg %p112
      $region42: #{_lambda_.15} parent=27 // pred_check_branch
        %287 = sbr.rel (%p285) target = $region44
      $region43: #{_lambda_.15} parent=27 // pred_region
        %p288 = scmp.lt.s32.totalorder %s14, 1
        %s289 = scalar_select %p288, %s14, 1
        %s290 = smul.addr %s289, 3
        %s291 = smul.addr %s290, 4
        %s292 = scalar_lea.vmem %s3, %s291
      $region44: #{_lambda_.15} parent=27 // pred_fallthru
        _
      // Predicated region
      $region45: #{_lambda_.15} parent=27 // pred_check
        %p293 = pneg %p138
      $region46: #{_lambda_.15} parent=27 // pred_check_branch
        %295 = sbr.rel (%p293) target = $region48
      $region47: #{_lambda_.15} parent=27 // pred_region
        %p296 = scmp.lt.s32.totalorder %s14, 1
        %s297 = scalar_select %p296, %s14, 1
        %s298 = smul.addr %s297, 3
        %s299 = smul.addr %s298, 4
        %s300 = scalar_lea.vmem %s4, %s299
      $region48: #{_lambda_.15} parent=27 // pred_fallthru
        _
    $region28: #{_lambda_.15} parent=5 // pred_fallthru
      _
    %p301 = scmp.le.s32.totalorder 1, %s14
    %p302 = scmp.lt.s32.totalorder %s14, 3
    %p303 = pnand %p301, %p302
    %p304 = pneg %p303
    // Predicated region
    $region49: #{_lambda_.15} parent=5 // pred_check
      _
    $region50: #{_lambda_.15} parent=5 // pred_check_branch
      %306 = sbr.rel (%p303) target = $region52
    $region51: #{_lambda_.15} parent=5 // pred_region
      %s307 = ssub.s32 %s14, 1
      %p308 = scmp.lt.s32.totalorder %s19, 1
      %s309 = scalar_select %p308, %s19, 1
      %s310 = smul.addr %s309, 3
      %s311 = smul.addr %s310, 4
      %s312 = scalar_lea.vmem %s0, %s311
      %p313 = pneg %p40
      %p314 = pneg %p37
      %p315 = scmp.lt.s32.totalorder %s19, 1
      %s316 = scalar_select %p315, %s19, 1
      %s317 = smul.addr %s316, 3
      %s318 = smul.addr %s317, 4
      %s319 = scalar_lea.vmem %s1, %s318
      %p320 = pneg %p66
      %p321 = pneg %p63
      %p322 = scmp.lt.s32.totalorder %s19, 1
      %s323 = scalar_select %p322, %s19, 1
      %s324 = smul.addr %s323, 3
      %s325 = smul.addr %s324, 4
      %s326 = scalar_lea.vmem %s2, %s325
      %p327 = pneg %p92
      %p328 = pneg %p89
      %p329 = scmp.lt.s32.totalorder %s19, 1
      %s330 = scalar_select %p329, %s19, 1
      %s331 = smul.addr %s330, 3
      %s332 = smul.addr %s331, 4
      %s333 = scalar_lea.vmem %s3, %s332
      %p334 = pneg %p118
      %p335 = pneg %p115
      %p336 = scmp.lt.s32.totalorder %s19, 1
      %s337 = scalar_select %p336, %s19, 1
      %s338 = smul.addr %s337, 3
      %s339 = smul.addr %s338, 4
      %s340 = scalar_lea.vmem %s4, %s339
      %p341 = pneg %p144
      %p342 = pneg %p141
      %p343 = pneg %p165
      %p344 = pneg %p162
      %p345 = pneg %p186
      %p346 = pneg %p183
      %p347 = pneg %p207
      %p348 = pneg %p204
      %p349 = pneg %p233
      %p350 = pneg %p230
      %p351 = scmp.lt.s32.totalorder %s19, 1
      %s352 = scalar_select %p351, %s19, 1
      %s353 = smul.addr %s352, 3
      %s354 = smul.addr %s353, 4
      %s355 = scalar_lea.vmem %s8, %s354
      %p356 = scmp.lt.s32.totalorder %s19, 1
      %s357 = scalar_select %p356, %s19, 1
      %s358 = smul.addr %s357, 3
      %s359 = smul.addr %s358, 4
      %s360 = scalar_lea.vmem %s0, %s359
      %p361 = scmp.lt.s32.totalorder %s19, 1
      %s362 = scalar_select %p361, %s19, 1
      %s363 = smul.addr %s362, 3
      %s364 = smul.addr %s363, 4
      %s365 = scalar_lea.vmem %s1, %s364
      %p366 = scmp.lt.s32.totalorder %s19, 1
      %s367 = scalar_select %p366, %s19, 1
      %s368 = smul.addr %s367, 3
      %s369 = smul.addr %s368, 4
      %s370 = scalar_lea.vmem %s2, %s369
      %p371 = scmp.lt.s32.totalorder %s19, 1
      %s372 = scalar_select %p371, %s19, 1
      %s373 = smul.addr %s372, 3
      %s374 = smul.addr %s373, 4
      %s375 = scalar_lea.vmem %s3, %s374
      %p376 = scmp.lt.s32.totalorder %s19, 1
      %s377 = scalar_select %p376, %s19, 1
      %s378 = smul.addr %s377, 3
      %s379 = smul.addr %s378, 4
      %s380 = scalar_lea.vmem %s4, %s379
      %p381 = scmp.lt.s32.totalorder %s19, 1
      %s382 = scalar_select %p381, %s19, 1
      %s383 = smul.addr %s382, 3
      %s384 = smul.addr %s383, 4
      %s385 = scalar_lea.vmem %s8, %s384
      %v387 = vld [vmem:[%s5] sm:$0xf]
      %v388 = vld [vmem:[%s360] sm:$0xff]
      %v389 = vld [vmem:[%s360 + $0x8] sm:$0xf]
      %s390 = scalar_lea.vmem %s5, 4
      %v391 = vld [vmem:[%s390] sm:$0xf]
      %v392 = vld [vmem:[%s365] sm:$0xff]
      %v393 = vld [vmem:[%s365 + $0x8] sm:$0xf]
      %v396 = vunpack.c.l.b16 %v392
      %v397 = vunpack.c.h.b16 %v392
      %v398 = vunpack.c.l.b16 %v393
      %v399 = vpack.c.b16 %v396, %v396
      %v400 = vpack.c.b16 %v397, %v397
      %v401 = vpack.c.b16 %v398, %v398
      %vm402 = vcmask 64512
      %v404 = vsel %vm402, %v391, 0
      %vm406 = vcmask 1043456
      %v408 = vsel %vm406, %v399, 0
      %v411 = vsel %vm406, %v400, 0
      %v414 = vsel %vm406, %v401, 0
      %416 = vmatprep.subr.bf16.mxu0 %v411
      %417 = vmatpush1.bf16.msra.mxu0 %v408
      %418 = vmatprep.subr.bf16.mxu0 0
      %419 = vmatpush1.bf16.msra.mxu0 0
      %420 = vmatprep.subr.bf16.mxu0 0
      %421 = vmatpush1.bf16.msra.mxu0 0
      %422 = vmatprep.subr.bf16.mxu0 0
      %423 = vmatpush1.bf16.msra.mxu0 0
      %424 = vmatprep.subr.bf16.mxu0 0
      %425 = vmatpush1.bf16.msra.mxu0 0
      %426 = vmatprep.subr.bf16.mxu0 0
      %427 = vmatpush1.bf16.msra.mxu0 0
      %428 = vmatprep.subr.bf16.mxu0 0
      %429 = vmatpush1.bf16.msra.mxu0 0
      %430 = vmatprep.subr.bf16.mxu0 0
      %431 = vmatpush1.bf16.msra.mxu0 0
      %432 = vmatprep.subr.bf16.mxu0 0
      %433 = vmatpush1.bf16.msra.mxu0 0
      %434 = vmatprep.subr.bf16.mxu0 0
      %435 = vmatpush1.bf16.msra.mxu0 0
      %436 = vmatprep.subr.bf16.mxu0 0
      %437 = vmatpush1.bf16.msra.mxu0 0
      %438 = vmatprep.subr.bf16.mxu0 0
      %439 = vmatpush1.bf16.msra.mxu0 0
      %440 = vmatprep.subr.bf16.mxu0 0
      %441 = vmatpush1.bf16.msra.mxu0 0
      %442 = vmatprep.subr.bf16.mxu0 0
      %443 = vmatpush1.bf16.msra.mxu0 0
      %444 = vmatprep.subr.bf16.mxu0 0
      %445 = vmatpush1.bf16.msra.mxu0 0
      %446 = vmatprep.subr.bf16.mxu0 0
      %447 = vmatpush1.bf16.msra.mxu0 0
      %448 = vmatprep.mubr.bf16.mxu0 0
      %449 = vmatmul.mubr.bf16.gmra.mrb[0].mxu0 %v404
      %v450 = vpop.f32.mrb[0].mxu0
      %v451 = vadd.f32 0.0, %v450
      %v452 = vpop.f32.mrb[0].mxu0
      %v453 = vadd.f32 0.0, %v452
      %v454 = vpop.f32.mrb[0].mxu0
      %v455 = vpop.f32.mrb[0].mxu0
      %456 = vdwg.mxu0
      %457 = vmatprep.subr.bf16.mxu0 0
      %458 = vmatpush1.bf16.msra.mxu0 %v414
      %459 = vmatprep.subr.bf16.mxu0 0
      %460 = vmatpush1.bf16.msra.mxu0 0
      %461 = vmatprep.subr.bf16.mxu0 0
      %462 = vmatpush1.bf16.msra.mxu0 0
      %463 = vmatprep.subr.bf16.mxu0 0
      %464 = vmatpush1.bf16.msra.mxu0 0
      %465 = vmatprep.subr.bf16.mxu0 0
      %466 = vmatpush1.bf16.msra.mxu0 0
      %467 = vmatprep.subr.bf16.mxu0 0
      %468 = vmatpush1.bf16.msra.mxu0 0
      %469 = vmatprep.subr.bf16.mxu0 0
      %470 = vmatpush1.bf16.msra.mxu0 0
      %471 = vmatprep.subr.bf16.mxu0 0
      %472 = vmatpush1.bf16.msra.mxu0 0
      %473 = vmatprep.subr.bf16.mxu0 0
      %474 = vmatpush1.bf16.msra.mxu0 0
      %475 = vmatprep.subr.bf16.mxu0 0
      %476 = vmatpush1.bf16.msra.mxu0 0
      %477 = vmatprep.subr.bf16.mxu0 0
      %478 = vmatpush1.bf16.msra.mxu0 0
      %479 = vmatprep.subr.bf16.mxu0 0
      %480 = vmatpush1.bf16.msra.mxu0 0
      %481 = vmatprep.subr.bf16.mxu0 0
      %482 = vmatpush1.bf16.msra.mxu0 0
      %483 = vmatprep.subr.bf16.mxu0 0
      %484 = vmatpush1.bf16.msra.mxu0 0
      %485 = vmatprep.subr.bf16.mxu0 0
      %486 = vmatpush1.bf16.msra.mxu0 0
      %487 = vmatprep.subr.bf16.mxu0 0
      %488 = vmatpush1.bf16.msra.mxu0 0
      %489 = vmatprep.mubr.bf16.mxu0 0
      %490 = vmatmul.mubr.bf16.gmra.mrb[0].mxu0 %v404
      %v491 = vpop.f32.mrb[0].mxu0
      %v492 = vadd.f32 0.0, %v491
      %v493 = vpop.f32.mrb[0].mxu0
      %v494 = vpop.f32.mrb[0].mxu0
      %v495 = vpop.f32.mrb[0].mxu0
      %496 = vdwg.mxu0
      %v499 = vunpack.c.l.b16 %v388
      %v500 = vunpack.c.h.b16 %v388
      %v501 = vunpack.c.l.b16 %v389
      %v502 = vpack.c.b16 %v499, %v499
      %v503 = vpack.c.b16 %v500, %v500
      %v504 = vpack.c.b16 %v501, %v501
      %v506 = vsel %vm402, %v387, 0
      %v509 = vsel %vm406, %v502, 0
      %v512 = vsel %vm406, %v503, 0
      %v515 = vsel %vm406, %v504, 0
      %517 = vmatprep.subr.bf16.mxu0 %v512
      %518 = vmatpush1.bf16.msra.mxu0 %v509
      %519 = vmatprep.subr.bf16.mxu0 0
      %520 = vmatpush1.bf16.msra.mxu0 0
      %521 = vmatprep.subr.bf16.mxu0 0
      %522 = vmatpush1.bf16.msra.mxu0 0
      %523 = vmatprep.subr.bf16.mxu0 0
      %524 = vmatpush1.bf16.msra.mxu0 0
      %525 = vmatprep.subr.bf16.mxu0 0
      %526 = vmatpush1.bf16.msra.mxu0 0
      %527 = vmatprep.subr.bf16.mxu0 0
      %528 = vmatpush1.bf16.msra.mxu0 0
      %529 = vmatprep.subr.bf16.mxu0 0
      %530 = vmatpush1.bf16.msra.mxu0 0
      %531 = vmatprep.subr.bf16.mxu0 0
      %532 = vmatpush1.bf16.msra.mxu0 0
      %533 = vmatprep.subr.bf16.mxu0 0
      %534 = vmatpush1.bf16.msra.mxu0 0
      %535 = vmatprep.subr.bf16.mxu0 0
      %536 = vmatpush1.bf16.msra.mxu0 0
      %537 = vmatprep.subr.bf16.mxu0 0
      %538 = vmatpush1.bf16.msra.mxu0 0
      %539 = vmatprep.subr.bf16.mxu0 0
      %540 = vmatpush1.bf16.msra.mxu0 0
      %541 = vmatprep.subr.bf16.mxu0 0
      %542 = vmatpush1.bf16.msra.mxu0 0
      %543 = vmatprep.subr.bf16.mxu0 0
      %544 = vmatpush1.bf16.msra.mxu0 0
      %545 = vmatprep.subr.bf16.mxu0 0
      %546 = vmatpush1.bf16.msra.mxu0 0
      %547 = vmatprep.subr.bf16.mxu0 0
      %548 = vmatpush1.bf16.msra.mxu0 0
      %549 = vmatprep.mubr.bf16.mxu0 0
      %550 = vmatmul.mubr.bf16.gmra.mrb[0].mxu0 %v506
      %v551 = vpop.f32.mrb[0].mxu0
      %v552 = vadd.f32 %v451, %v551
      %v553 = vpop.f32.mrb[0].mxu0
      %v554 = vadd.f32 %v453, %v553
      %v555 = vpop.f32.mrb[0].mxu0
      %v556 = vpop.f32.mrb[0].mxu0
      %557 = vdwg.mxu0
      %558 = vmatprep.subr.bf16.mxu0 0
      %559 = vmatpush1.bf16.msra.mxu0 %v515
      %560 = vmatprep.subr.bf16.mxu0 0
      %561 = vmatpush1.bf16.msra.mxu0 0
      %562 = vmatprep.subr.bf16.mxu0 0
      %563 = vmatpush1.bf16.msra.mxu0 0
      %564 = vmatprep.subr.bf16.mxu0 0
      %565 = vmatpush1.bf16.msra.mxu0 0
      %566 = vmatprep.subr.bf16.mxu0 0
      %567 = vmatpush1.bf16.msra.mxu0 0
      %568 = vmatprep.subr.bf16.mxu0 0
      %569 = vmatpush1.bf16.msra.mxu0 0
      %570 = vmatprep.subr.bf16.mxu0 0
      %571 = vmatpush1.bf16.msra.mxu0 0
      %572 = vmatprep.subr.bf16.mxu0 0
      %573 = vmatpush1.bf16.msra.mxu0 0
      %574 = vmatprep.subr.bf16.mxu0 0
      %575 = vmatpush1.bf16.msra.mxu0 0
      %576 = vmatprep.subr.bf16.mxu0 0
      %577 = vmatpush1.bf16.msra.mxu0 0
      %578 = vmatprep.subr.bf16.mxu0 0
      %579 = vmatpush1.bf16.msra.mxu0 0
      %580 = vmatprep.subr.bf16.mxu0 0
      %581 = vmatpush1.bf16.msra.mxu0 0
      %582 = vmatprep.subr.bf16.mxu0 0
      %583 = vmatpush1.bf16.msra.mxu0 0
      %584 = vmatprep.subr.bf16.mxu0 0
      %585 = vmatpush1.bf16.msra.mxu0 0
      %586 = vmatprep.subr.bf16.mxu0 0
      %587 = vmatpush1.bf16.msra.mxu0 0
      %588 = vmatprep.subr.bf16.mxu0 0
      %589 = vmatpush1.bf16.msra.mxu0 0
      %590 = vmatprep.mubr.bf16.mxu0 0
      %591 = vmatmul.mubr.bf16.gmra.mrb[0].mxu0 %v506
      %v592 = vpop.f32.mrb[0].mxu0
      %v593 = vadd.f32 %v492, %v592
      %v594 = vpop.f32.mrb[0].mxu0
      %v595 = vpop.f32.mrb[0].mxu0
      %v596 = vpop.f32.mrb[0].mxu0
      %597 = vdwg.mxu0
      %s598 = scalar_lea.vmem %s5, 8
      %v599 = vld [vmem:[%s598] sm:$0xf]
      %v600 = vld [vmem:[%s370] sm:$0xff]
      %v601 = vld [vmem:[%s370 + $0x8] sm:$0xf]
      %v604 = vunpack.c.l.b16 %v600
      %v605 = vunpack.c.h.b16 %v600
      %v606 = vunpack.c.l.b16 %v601
      %v607 = vpack.c.b16 %v604, %v604
      %v608 = vpack.c.b16 %v605, %v605
      %v609 = vpack.c.b16 %v606, %v606
      %v611 = vsel %vm402, %v599, 0
      %v614 = vsel %vm406, %v607, 0
      %v617 = vsel %vm406, %v608, 0
      %v620 = vsel %vm406, %v609, 0
      %622 = vmatprep.subr.bf16.mxu0 %v617
      %623 = vmatpush1.bf16.msra.mxu0 %v614
      %624 = vmatprep.subr.bf16.mxu0 0
      %625 = vmatpush1.bf16.msra.mxu0 0
      %626 = vmatprep.subr.bf16.mxu0 0
      %627 = vmatpush1.bf16.msra.mxu0 0
      %628 = vmatprep.subr.bf16.mxu0 0
      %629 = vmatpush1.bf16.msra.mxu0 0
      %630 = vmatprep.subr.bf16.mxu0 0
      %631 = vmatpush1.bf16.msra.mxu0 0
      %632 = vmatprep.subr.bf16.mxu0 0
      %633 = vmatpush1.bf16.msra.mxu0 0
      %634 = vmatprep.subr.bf16.mxu0 0
      %635 = vmatpush1.bf16.msra.mxu0 0
      %636 = vmatprep.subr.bf16.mxu0 0
      %637 = vmatpush1.bf16.msra.mxu0 0
      %638 = vmatprep.subr.bf16.mxu0 0
      %639 = vmatpush1.bf16.msra.mxu0 0
      %640 = vmatprep.subr.bf16.mxu0 0
      %641 = vmatpush1.bf16.msra.mxu0 0
      %642 = vmatprep.subr.bf16.mxu0 0
      %643 = vmatpush1.bf16.msra.mxu0 0
      %644 = vmatprep.subr.bf16.mxu0 0
      %645 = vmatpush1.bf16.msra.mxu0 0
      %646 = vmatprep.subr.bf16.mxu0 0
      %647 = vmatpush1.bf16.msra.mxu0 0
      %648 = vmatprep.subr.bf16.mxu0 0
      %649 = vmatpush1.bf16.msra.mxu0 0
      %650 = vmatprep.subr.bf16.mxu0 0
      %651 = vmatpush1.bf16.msra.mxu0 0
      %652 = vmatprep.subr.bf16.mxu0 0
      %653 = vmatpush1.bf16.msra.mxu0 0
      %654 = vmatprep.mubr.bf16.mxu0 0
      %655 = vmatmul.mubr.bf16.gmra.mrb[0].mxu0 %v611
      %v656 = vpop.f32.mrb[0].mxu0
      %v657 = vadd.f32 0.0, %v656
      %v658 = vpop.f32.mrb[0].mxu0
      %v659 = vadd.f32 0.0, %v658
      %v660 = vpop.f32.mrb[0].mxu0
      %v661 = vpop.f32.mrb[0].mxu0
      %662 = vdwg.mxu0
      %663 = vmatprep.subr.bf16.mxu0 0
      %664 = vmatpush1.bf16.msra.mxu0 %v620
      %665 = vmatprep.subr.bf16.mxu0 0
      %666 = vmatpush1.bf16.msra.mxu0 0
      %667 = vmatprep.subr.bf16.mxu0 0
      %668 = vmatpush1.bf16.msra.mxu0 0
      %669 = vmatprep.subr.bf16.mxu0 0
      %670 = vmatpush1.bf16.msra.mxu0 0
      %671 = vmatprep.subr.bf16.mxu0 0
      %672 = vmatpush1.bf16.msra.mxu0 0
      %673 = vmatprep.subr.bf16.mxu0 0
      %674 = vmatpush1.bf16.msra.mxu0 0
      %675 = vmatprep.subr.bf16.mxu0 0
      %676 = vmatpush1.bf16.msra.mxu0 0
      %677 = vmatprep.subr.bf16.mxu0 0
      %678 = vmatpush1.bf16.msra.mxu0 0
      %679 = vmatprep.subr.bf16.mxu0 0
      %680 = vmatpush1.bf16.msra.mxu0 0
      %681 = vmatprep.subr.bf16.mxu0 0
      %682 = vmatpush1.bf16.msra.mxu0 0
      %683 = vmatprep.subr.bf16.mxu0 0
      %684 = vmatpush1.bf16.msra.mxu0 0
      %685 = vmatprep.subr.bf16.mxu0 0
      %686 = vmatpush1.bf16.msra.mxu0 0
      %687 = vmatprep.subr.bf16.mxu0 0
      %688 = vmatpush1.bf16.msra.mxu0 0
      %689 = vmatprep.subr.bf16.mxu0 0
      %690 = vmatpush1.bf16.msra.mxu0 0
      %691 = vmatprep.subr.bf16.mxu0 0
      %692 = vmatpush1.bf16.msra.mxu0 0
      %693 = vmatprep.subr.bf16.mxu0 0
      %694 = vmatpush1.bf16.msra.mxu0 0
      %695 = vmatprep.mubr.bf16.mxu0 0
      %696 = vmatmul.mubr.bf16.gmra.mrb[0].mxu0 %v611
      %v697 = vpop.f32.mrb[0].mxu0
      %v698 = vadd.f32 0.0, %v697
      %v699 = vpop.f32.mrb[0].mxu0
      %v700 = vpop.f32.mrb[0].mxu0
      %v701 = vpop.f32.mrb[0].mxu0
      %702 = vdwg.mxu0
      %v703 = vadd.f32 %v552, %v657
      %v704 = vadd.f32 %v554, %v659
      %v705 = vadd.f32 %v593, %v698
      %s706 = scalar_lea.vmem %s5, 12
      %v707 = vld [vmem:[%s706] sm:$0xf]
      %v708 = vld [vmem:[%s375] sm:$0xff]
      %v709 = vld [vmem:[%s375 + $0x8] sm:$0xf]
      %v712 = vunpack.c.l.b16 %v708
      %v713 = vunpack.c.h.b16 %v708
      %v714 = vunpack.c.l.b16 %v709
      %v715 = vpack.c.b16 %v712, %v712
      %v716 = vpack.c.b16 %v713, %v713
      %v717 = vpack.c.b16 %v714, %v714
      %v719 = vsel %vm402, %v707, 0
      %v722 = vsel %vm406, %v715, 0
      %v725 = vsel %vm406, %v716, 0
      %v728 = vsel %vm406, %v717, 0
      %730 = vmatprep.subr.bf16.mxu0 %v725
      %731 = vmatpush1.bf16.msra.mxu0 %v722
      %732 = vmatprep.subr.bf16.mxu0 0
      %733 = vmatpush1.bf16.msra.mxu0 0
      %734 = vmatprep.subr.bf16.mxu0 0
      %735 = vmatpush1.bf16.msra.mxu0 0
      %736 = vmatprep.subr.bf16.mxu0 0
      %737 = vmatpush1.bf16.msra.mxu0 0
      %738 = vmatprep.subr.bf16.mxu0 0
      %739 = vmatpush1.bf16.msra.mxu0 0
      %740 = vmatprep.subr.bf16.mxu0 0
      %741 = vmatpush1.bf16.msra.mxu0 0
      %742 = vmatprep.subr.bf16.mxu0 0
      %743 = vmatpush1.bf16.msra.mxu0 0
      %744 = vmatprep.subr.bf16.mxu0 0
      %745 = vmatpush1.bf16.msra.mxu0 0
      %746 = vmatprep.subr.bf16.mxu0 0
      %747 = vmatpush1.bf16.msra.mxu0 0
      %748 = vmatprep.subr.bf16.mxu0 0
      %749 = vmatpush1.bf16.msra.mxu0 0
      %750 = vmatprep.subr.bf16.mxu0 0
      %751 = vmatpush1.bf16.msra.mxu0 0
      %752 = vmatprep.subr.bf16.mxu0 0
      %753 = vmatpush1.bf16.msra.mxu0 0
      %754 = vmatprep.subr.bf16.mxu0 0
      %755 = vmatpush1.bf16.msra.mxu0 0
      %756 = vmatprep.subr.bf16.mxu0 0
      %757 = vmatpush1.bf16.msra.mxu0 0
      %758 = vmatprep.subr.bf16.mxu0 0
      %759 = vmatpush1.bf16.msra.mxu0 0
      %760 = vmatprep.subr.bf16.mxu0 0
      %761 = vmatpush1.bf16.msra.mxu0 0
      %762 = vmatprep.mubr.bf16.mxu0 0
      %763 = vmatmul.mubr.bf16.gmra.mrb[0].mxu0 %v719
      %v764 = vpop.f32.mrb[0].mxu0
      %v765 = vadd.f32 0.0, %v764
      %v766 = vpop.f32.mrb[0].mxu0
      %v767 = vadd.f32 0.0, %v766
      %v768 = vpop.f32.mrb[0].mxu0
      %v769 = vpop.f32.mrb[0].mxu0
      %770 = vdwg.mxu0
      %771 = vmatprep.subr.bf16.mxu0 0
      %772 = vmatpush1.bf16.msra.mxu0 %v728
      %773 = vmatprep.subr.bf16.mxu0 0
      %774 = vmatpush1.bf16.msra.mxu0 0
      %775 = vmatprep.subr.bf16.mxu0 0
      %776 = vmatpush1.bf16.msra.mxu0 0
      %777 = vmatprep.subr.bf16.mxu0 0
      %778 = vmatpush1.bf16.msra.mxu0 0
      %779 = vmatprep.subr.bf16.mxu0 0
      %780 = vmatpush1.bf16.msra.mxu0 0
      %781 = vmatprep.subr.bf16.mxu0 0
      %782 = vmatpush1.bf16.msra.mxu0 0
      %783 = vmatprep.subr.bf16.mxu0 0
      %784 = vmatpush1.bf16.msra.mxu0 0
      %785 = vmatprep.subr.bf16.mxu0 0
      %786 = vmatpush1.bf16.msra.mxu0 0
      %787 = vmatprep.subr.bf16.mxu0 0
      %788 = vmatpush1.bf16.msra.mxu0 0
      %789 = vmatprep.subr.bf16.mxu0 0
      %790 = vmatpush1.bf16.msra.mxu0 0
      %791 = vmatprep.subr.bf16.mxu0 0
      %792 = vmatpush1.bf16.msra.mxu0 0
      %793 = vmatprep.subr.bf16.mxu0 0
      %794 = vmatpush1.bf16.msra.mxu0 0
      %795 = vmatprep.subr.bf16.mxu0 0
      %796 = vmatpush1.bf16.msra.mxu0 0
      %797 = vmatprep.subr.bf16.mxu0 0
      %798 = vmatpush1.bf16.msra.mxu0 0
      %799 = vmatprep.subr.bf16.mxu0 0
      %800 = vmatpush1.bf16.msra.mxu0 0
      %801 = vmatprep.subr.bf16.mxu0 0
      %802 = vmatpush1.bf16.msra.mxu0 0
      %803 = vmatprep.mubr.bf16.mxu0 0
      %804 = vmatmul.mubr.bf16.gmra.mrb[0].mxu0 %v719
      %v805 = vpop.f32.mrb[0].mxu0
      %v806 = vadd.f32 0.0, %v805
      %v807 = vpop.f32.mrb[0].mxu0
      %v808 = vpop.f32.mrb[0].mxu0
      %v809 = vpop.f32.mrb[0].mxu0
      %810 = vdwg.mxu0
      %v811 = vadd.f32 %v703, %v765
      %v812 = vadd.f32 %v704, %v767
      %v813 = vadd.f32 %v705, %v806
      %s814 = scalar_lea.vmem %s5, 16
      %v815 = vld [vmem:[%s814] sm:$0xf]
      %v816 = vld [vmem:[%s380] sm:$0xff]
      %v817 = vld [vmem:[%s380 + $0x8] sm:$0xf]
      %v820 = vunpack.c.l.b16 %v816
      %v821 = vunpack.c.h.b16 %v816
      %v822 = vunpack.c.l.b16 %v817
      %v823 = vpack.c.b16 %v820, %v820
      %v824 = vpack.c.b16 %v821, %v821
      %v825 = vpack.c.b16 %v822, %v822
      %v827 = vsel %vm402, %v815, 0
      %v830 = vsel %vm406, %v823, 0
      %v833 = vsel %vm406, %v824, 0
      %v836 = vsel %vm406, %v825, 0
      %838 = vmatprep.subr.bf16.mxu0 %v833
      %839 = vmatpush1.bf16.msra.mxu0 %v830
      %840 = vmatprep.subr.bf16.mxu0 0
      %841 = vmatpush1.bf16.msra.mxu0 0
      %842 = vmatprep.subr.bf16.mxu0 0
      %843 = vmatpush1.bf16.msra.mxu0 0
      %844 = vmatprep.subr.bf16.mxu0 0
      %845 = vmatpush1.bf16.msra.mxu0 0
      %846 = vmatprep.subr.bf16.mxu0 0
      %847 = vmatpush1.bf16.msra.mxu0 0
      %848 = vmatprep.subr.bf16.mxu0 0
      %849 = vmatpush1.bf16.msra.mxu0 0
      %850 = vmatprep.subr.bf16.mxu0 0
      %851 = vmatpush1.bf16.msra.mxu0 0
      %852 = vmatprep.subr.bf16.mxu0 0
      %853 = vmatpush1.bf16.msra.mxu0 0
      %854 = vmatprep.subr.bf16.mxu0 0
      %855 = vmatpush1.bf16.msra.mxu0 0
      %856 = vmatprep.subr.bf16.mxu0 0
      %857 = vmatpush1.bf16.msra.mxu0 0
      %858 = vmatprep.subr.bf16.mxu0 0
      %859 = vmatpush1.bf16.msra.mxu0 0
      %860 = vmatprep.subr.bf16.mxu0 0
      %861 = vmatpush1.bf16.msra.mxu0 0
      %862 = vmatprep.subr.bf16.mxu0 0
      %863 = vmatpush1.bf16.msra.mxu0 0
      %864 = vmatprep.subr.bf16.mxu0 0
      %865 = vmatpush1.bf16.msra.mxu0 0
      %866 = vmatprep.subr.bf16.mxu0 0
      %867 = vmatpush1.bf16.msra.mxu0 0
      %868 = vmatprep.subr.bf16.mxu0 0
      %869 = vmatpush1.bf16.msra.mxu0 0
      %870 = vmatprep.mubr.bf16.mxu0 0
      %871 = vmatmul.mubr.bf16.gmra.mrb[0].mxu0 %v827
      %v872 = vpop.f32.mrb[0].mxu0
      %v873 = vadd.f32 0.0, %v872
      %v874 = vpop.f32.mrb[0].mxu0
      %v875 = vadd.f32 0.0, %v874
      %v876 = vpop.f32.mrb[0].mxu0
      %v877 = vpop.f32.mrb[0].mxu0
      %878 = vdwg.mxu0
      %879 = vmatprep.subr.bf16.mxu0 0
      %880 = vmatpush1.bf16.msra.mxu0 %v836
      %881 = vmatprep.subr.bf16.mxu0 0
      %882 = vmatpush1.bf16.msra.mxu0 0
      %883 = vmatprep.subr.bf16.mxu0 0
      %884 = vmatpush1.bf16.msra.mxu0 0
      %885 = vmatprep.subr.bf16.mxu0 0
      %886 = vmatpush1.bf16.msra.mxu0 0
      %887 = vmatprep.subr.bf16.mxu0 0
      %888 = vmatpush1.bf16.msra.mxu0 0
      %889 = vmatprep.subr.bf16.mxu0 0
      %890 = vmatpush1.bf16.msra.mxu0 0
      %891 = vmatprep.subr.bf16.mxu0 0
      %892 = vmatpush1.bf16.msra.mxu0 0
      %893 = vmatprep.subr.bf16.mxu0 0
      %894 = vmatpush1.bf16.msra.mxu0 0
      %895 = vmatprep.subr.bf16.mxu0 0
      %896 = vmatpush1.bf16.msra.mxu0 0
      %897 = vmatprep.subr.bf16.mxu0 0
      %898 = vmatpush1.bf16.msra.mxu0 0
      %899 = vmatprep.subr.bf16.mxu0 0
      %900 = vmatpush1.bf16.msra.mxu0 0
      %901 = vmatprep.subr.bf16.mxu0 0
      %902 = vmatpush1.bf16.msra.mxu0 0
      %903 = vmatprep.subr.bf16.mxu0 0
      %904 = vmatpush1.bf16.msra.mxu0 0
      %905 = vmatprep.subr.bf16.mxu0 0
      %906 = vmatpush1.bf16.msra.mxu0 0
      %907 = vmatprep.subr.bf16.mxu0 0
      %908 = vmatpush1.bf16.msra.mxu0 0
      %909 = vmatprep.subr.bf16.mxu0 0
      %910 = vmatpush1.bf16.msra.mxu0 0
      %911 = vmatprep.mubr.bf16.mxu0 0
      %912 = vmatmul.mubr.bf16.gmra.mrb[0].mxu0 %v827
      %v913 = vpop.f32.mrb[0].mxu0
      %v914 = vadd.f32 0.0, %v913
      %v915 = vpop.f32.mrb[0].mxu0
      %v916 = vpop.f32.mrb[0].mxu0
      %v917 = vpop.f32.mrb[0].mxu0
      %918 = vdwg.mxu0
      %v919 = vadd.f32 %v811, %v873
      %v920 = vadd.f32 %v812, %v875
      %v921 = vadd.f32 %v813, %v914
      %v922 = vld [vmem:[%s6] sm:$0xff]
      %924 = vset.pattern.permute.xlu0 0
      %925 = vperm.xlu0 %924, %v922
      %v926 = vpop.permute.xlu0 %925
      %v928 = vadd.f32 %v919, %v926
      %v929 = vadd.f32 %v920, %v926
      %v930 = vadd.f32 %v921, %v926
      %vm931 = vcmp.gt.f32.partialorder %v928, 0.0
      %vm932 = vcmp.gt.f32.partialorder %v929, 0.0
      %vm933 = vcmp.gt.f32.partialorder %v930, 0.0
      %v934 = vmul.f32 %v928, 0.2
      %v935 = vmul.f32 %v929, 0.2
      %v936 = vmul.f32 %v930, 0.2
      %v937 = vsel %vm931, %v928, %v934
      %v938 = vsel %vm932, %v929, %v935
      %v939 = vsel %vm933, %v930, %v936
      %v940 = vld [vmem:[%s7] sm:$0x7]
      %v942 = vlaneseq
      %v943 = vshrl.u32 %v942, 7
      %v944 = vsub.s32 0, %v943
      %v945 = vrot.slane %v940, %v944
      %v946 = vlaneseq
      %v947 = vshrl.u32 %v946, 7
      %v948 = vsub.s32 1, %v947
      %v949 = vrot.slane %v940, %v948
      %v950 = vlaneseq
      %v951 = vshrl.u32 %v950, 7
      %v952 = vsub.s32 2, %v951
      %v953 = vrot.slane %v940, %v952
      %v957 = vmul.f32 %v937, %v945
      %v958 = vmul.f32 %v938, %v949
      %v959 = vmul.f32 %v939, %v953
      %v960 = vpack.c.bf16 %v957, %v957
      %v961 = vpack.c.bf16 %v958, %v958
      %v962 = vpack.c.bf16 %v959, %v959
      %v966 = vunpack.c.l.b16 %v960
      %v967 = vunpack.c.l.b16 %v961
      %v968 = vunpack.c.l.b16 %v962
      %v969 = vpack.c.b16 %v967, %v966
      %v970 = vpack.c.b16 %v968, %v968
      %973 = vst [vmem:[%s385] sm:$0xff] %v969
      %vm974 = vcmask 551936
      %975 = vst.msk [vmem:[%s385 + $0x8] sm:$0xf] %vm974, %v970
      %p976 = scmp.lt.s32.totalorder %s19, 1
      %s977 = scalar_select %p976, %s19, 1
      %s978 = smul.addr %s977, 3
      %s979 = smul.addr %s978, 4
      %s980 = scalar_lea.vmem %s8, %s979
      // Predicated region
      $region53: #{_lambda_.15} parent=51 // pred_check
        %p981 = pneg %p230
      $region54: #{_lambda_.15} parent=51 // pred_check_branch
        %983 = sbr.rel (%p981) target = $region56
      $region55: #{_lambda_.15} parent=51 // pred_region
        _
      $region56: #{_lambda_.15} parent=51 // pred_fallthru
        _
    $region52: #{_lambda_.15} parent=5 // pred_fallthru
      _
    %p984 = scmp.le.s32.totalorder 2, %s14
    // Predicated region
    $region57: #{_lambda_.15} parent=5 // pred_check
      %p985 = pneg %p984
    $region58: #{_lambda_.15} parent=5 // pred_check_branch
      %987 = sbr.rel (%p985) target = $region60
    $region59: #{_lambda_.15} parent=5 // pred_region
      %s988 = ssub.s32 %s14, 2
      // Predicated region
      $region61: #{_lambda_.15} parent=59 // pred_check
        %p989 = pneg %p236
      $region62: #{_lambda_.15} parent=59 // pred_check_branch
        %991 = sbr.rel (%p989) target = $region64
      $region63: #{_lambda_.15} parent=59 // pred_region
        %p992 = scmp.lt.s32.totalorder %s20, 1
        %s993 = scalar_select %p992, %s20, 1
        %s994 = smul.addr %s993, 3
        %s995 = smul.addr %s994, 4
        %s996 = scalar_lea.vmem %s8, %s995
      $region64: #{_lambda_.15} parent=59 // pred_fallthru
        _
    $region60: #{_lambda_.15} parent=5 // pred_fallthru
      _
  $region6: #{_lambda_.15} parent=0 // loop_footer
    %s18 = sadd.s32 1, %s14
  $region7: #{_lambda_.15} parent=0 // loop_footer_branch
    %13 = sbr.rel target = $region3
  $region8: #{_lambda_.15} parent=0 // loop_exit
    _

</llo_original>
